<compile_context>
chip_gen: v7x
topology: tpu7x:2x2x1
jax: 0.10.0
libtpu: 0.0.40
codegen_flags: <defaults>
</compile_context>

<pallas_src>
import functools

import numpy as np
import jax
import jax.numpy as jnp
from jax.experimental import pallas as pl
from jax.experimental.pallas import tpu as pltpu


SUB_B = 128  # subgraphs processed per grid step (MXU-sized M)


def _round_up(x, m):
    return (x + m - 1) // m * m


# ----------------------------------------------------------------------------
# Fused kernel, one grid step = SUB_B subgraphs:
#   pool  = (segment mask scaled by 1/size) @ union_window        (MXU)
#   h     = root @ W_root + pool @ W_pool + b ; ReLU              (MXU + VPU)
#   out   = f_norm(h)                                             (VPU/EUP)
# ----------------------------------------------------------------------------
def respool_kernel(start_ref,                                   # scalar prefetch (SMEM)
                   off_ref, end_ref, invsz_ref, root_ref,       # VMEM inputs
                   feat_ref, wr_ref, wp_ref, bias_ref,
                   gamma_ref, beta_ref,
                   o_ref,                                       # VMEM output
                   *, win_rows, sub_b):
    # Aligned union window covering every subgraph of this block.
    start = pl.multiple_of(start_ref[pl.program_id(0)], 8)
    window = feat_ref[pl.ds(start, win_rows), :]                 # [WIN, F]

    # Segment-membership matrix, pre-scaled by 1/size: one MXU matmul emits
    # all SUB_B subgraph means at once.  Rows outside [off, end) (including
    # the <=7 leading alignment rows and zero-size padded subgraphs) are 0.
    row_ids = start + jax.lax.broadcasted_iota(jnp.int32, (sub_b, win_rows), 1)
    inside = (row_ids >= off_ref[...]) & (row_ids < end_ref[...])
    seg = jnp.where(inside, invsz_ref[...], 0.0)                 # [SUB_B, WIN]
    pool = jnp.dot(seg, window, preferred_element_type=jnp.float32,
                   precision=jax.lax.Precision.HIGHEST)          # [SUB_B, F]

    # Epilogue: Linear(2F -> dim_out) split into two matmuls (avoids the
    # lane-axis concat), bias, ReLU, row-wise f_norm.
    h = (jnp.dot(root_ref[...], wr_ref[...], preferred_element_type=jnp.float32,
                 precision=jax.lax.Precision.HIGHEST)
         + jnp.dot(pool, wp_ref[...], preferred_element_type=jnp.float32,
                   precision=jax.lax.Precision.HIGHEST)
         + bias_ref[...])
    h = jnp.maximum(h, 0.0)                                      # ReLU (Dropout = id)

    mean = jnp.mean(h, axis=1, keepdims=True)
    var = jnp.mean((h - mean) ** 2, axis=1, keepdims=True) + 1e-9  # unbiased=False
    o_ref[...] = ((h - mean) * gamma_ref[...] * jax.lax.rsqrt(var)
                  + beta_ref[...]).astype(o_ref.dtype)


def respool_forward(feats, idx_targets, sizes_subg, w_t, bias, scale, offset,
                    *, max_block_rows=None):
    """feats: [L, N, F] stacked feats_in_l; returns [B, dim_out].

    max_block_rows: static upper bound on the number of feature rows spanned by
    any block of SUB_B consecutive subgraphs (including <=7 alignment rows).
    Pass it explicitly under jit; the host fallback syncs sizes_subg.
    """
    L, N, F = feats.shape
    B = int(sizes_subg.shape[0])
    dim_out = int(w_t.shape[1])

    b_pad = _round_up(B, SUB_B)
    num_blocks = b_pad // SUB_B

    if max_block_rows is None:
        # TODO(synk): host sync; pass a static/bucketed bound under jit.
        s = np.zeros((b_pad,), dtype=np.int64)
        s[:B] = np.asarray(sizes_subg)
        offs = np.concatenate([[0], np.cumsum(s)[:-1]])
        blk_start = (offs[0::SUB_B] // 8) * 8
        blk_end = np.concatenate([offs[SUB_B::SUB_B], [int(s.sum())]])
        max_block_rows = int(np.max(blk_end - blk_start))
    win_rows = _round_up(max(int(max_block_rows), 8), 8)          # static window size

    # residue 'sum' over layers, written once into a zero-padded buffer so the
    # in-kernel slice [start, start + win_rows) never reads out of bounds.
    n_pad = _round_up(N + win_rows, 8)
    feat_sum = jnp.sum(feats.astype(jnp.float32), axis=0)         # [N, F]
    feat_pad = jax.lax.dynamic_update_slice(
        jnp.zeros((n_pad, F), jnp.float32), feat_sum, (0, 0))

    # per-subgraph metadata, padded to b_pad (padded entries: size 0)
    sz_p = jnp.zeros((b_pad,), jnp.int32).at[:B].set(sizes_subg.astype(jnp.int32))
    csum = jnp.cumsum(sz_p)
    off_p = jnp.concatenate([jnp.zeros((1,), jnp.int32), csum[:-1]])  # roll(cumsum,1); [0]=0
    end_p = off_p + sz_p
    invsz_p = 1.0 / jnp.maximum(sz_p, 1).astype(jnp.float32)      # exact; folded into mask

    # per-block union-window starts, aligned down to a sublane multiple (8)
    start_blk = (off_p[::SUB_B] // 8) * 8                         # [num_blocks] int32

    # root (center) gather hoisted out of the kernel
    idx_p = jnp.zeros((b_pad,), jnp.int32).at[:B].set(idx_targets.astype(jnp.int32))
    root_p = jnp.take(feat_sum, idx_p, axis=0)                    # [b_pad, F]

    # split Linear weight so the kernel never concatenates along lanes
    w_root = w_t[:F].astype(jnp.float32)                          # [F, dim_out]
    w_pool = w_t[F:].astype(jnp.float32)                          # [F, dim_out]

    kernel = functools.partial(respool_kernel, win_rows=win_rows, sub_b=SUB_B)

    out = pl.pallas_call(
        kernel,
        out_shape=jax.ShapeDtypeStruct((b_pad, dim_out), jnp.float32),
        grid_spec=pltpu.PrefetchScalarGridSpec(
            num_scalar_prefetch=1,
            grid=(num_blocks,),
            in_specs=[
                pl.BlockSpec((SUB_B, 1), lambda b, s: (b, 0)),        # off
                pl.BlockSpec((SUB_B, 1), lambda b, s: (b, 0)),        # end
                pl.BlockSpec((SUB_B, 1), lambda b, s: (b, 0)),        # 1/size
                pl.BlockSpec((SUB_B, F), lambda b, s: (b, 0)),        # root rows
                pl.BlockSpec((n_pad, F), lambda b, s: (0, 0)),        # feat (resident)
                pl.BlockSpec((F, dim_out), lambda b, s: (0, 0)),      # W_root
                pl.BlockSpec((F, dim_out), lambda b, s: (0, 0)),      # W_pool
                pl.BlockSpec((1, dim_out), lambda b, s: (0, 0)),      # bias
                pl.BlockSpec((1, dim_out), lambda b, s: (0, 0)),      # scale
                pl.BlockSpec((1, dim_out), lambda b, s: (0, 0)),      # offset
            ],
            out_specs=pl.BlockSpec((SUB_B, dim_out), lambda b, s: (b, 0)),
        ),
        compiler_params=pltpu.CompilerParams(
            dimension_semantics=("parallel",),
            vmem_limit_bytes=64 * 1024 * 1024),                   # <= physical on v5e/v6e/v7x
    )(start_blk,
      off_p[:, None], end_p[:, None], invsz_p[:, None], root_p, feat_pad,
      w_root, w_pool,
      bias.astype(jnp.float32), scale.astype(jnp.float32), offset.astype(jnp.float32))

    return out[:B]


def reference_forward(feats, idx_targets, sizes_subg, w_t, bias, scale, offset):
    """Pure-JAX reference of the same ResPool config."""
    L, N, F = feats.shape
    B = sizes_subg.shape[0]
    feat_sum = feats.sum(0)                              # residue 'sum'
    root = feat_sum[idx_targets]                         # [B, F]
    seg_ids = np.repeat(np.arange(B), np.asarray(sizes_subg))
    pool_sum = jax.ops.segment_sum(feat_sum, jnp.asarray(seg_ids), num_segments=B)
    pool_mean = pool_sum / sizes_subg[:, None].astype(jnp.float32)
    feat_in = jnp.concatenate([root, pool_mean], axis=1)
    h = jnp.maximum(jnp.dot(feat_in, w_t, precision=jax.lax.Precision.HIGHEST)
                    + bias[0], 0.0)
    mean = h.mean(1, keepdims=True)
    var = ((h - mean) ** 2).mean(1, keepdims=True) + 1e-9
    return (h - mean) * scale[0] * jax.lax.rsqrt(var) + offset[0]


if __name__ == "__main__":
    # Small shapes: num_layers=3, dim_in=32, dim_out=32, 4 subgraphs, 16 nodes.
    L, N, F, DOUT = 3, 16, 32, 32
    key = jax.random.PRNGKey(0)
    k_feat, k_w, k_b = jax.random.split(key, 3)

    feats = jax.random.normal(k_feat, (L, N, F), dtype=jnp.float32)
    sizes_list = [3, 5, 4, 4]                                      # sums to N
    sizes_subg = jnp.array(sizes_list, dtype=jnp.int32)
    idx_targets = jnp.array([0, 3, 8, 12], dtype=jnp.int32)        # one center per subgraph

    # nn.Linear(2*dim_in, dim_out) params (deterministic synthetic init);
    # stored transposed: w_t[2F, DOUT] so the math is x @ w_t + b.
    bound = 1.0 / np.sqrt(2 * F)
    w_t = jax.random.uniform(k_w, (2 * F, DOUT), minval=-bound, maxval=bound,
                             dtype=jnp.float32)
    bias = jax.random.uniform(k_b, (1, DOUT), minval=-bound, maxval=bound,
                              dtype=jnp.float32)
    scale = jnp.ones((1, DOUT), dtype=jnp.float32)    # self.scale init
    offset = jnp.zeros((1, DOUT), dtype=jnp.float32)  # self.offset init

    # Static window bound: with B <= SUB_B there is a single block that starts
    # at row 0, so the total node count is an exact bound (no device sync).
    out = respool_forward(feats, idx_targets, sizes_subg, w_t, bias, scale, offset,
                          max_block_rows=sum(sizes_list))
    out = jax.block_until_ready(out)

    ref = reference_forward(feats, idx_targets, sizes_subg, w_t, bias, scale, offset)
    np.testing.assert_allclose(np.asarray(out), np.asarray(ref), rtol=1e-4, atol=1e-4)

    print("KERNEL_OK")
</pallas_src>

<mosaic_0001>
module attributes {stable_mosaic.version = 11 : i64} {
  func.func @respool_kernel(%arg0: i32, %arg1: memref<1xi32, #tpu.memory_space<smem>>, %arg2: memref<128x1xi32, #tpu.memory_space<vmem>>, %arg3: memref<128x1xi32, #tpu.memory_space<vmem>>, %arg4: memref<128x1xf32, #tpu.memory_space<vmem>>, %arg5: memref<128x32xf32, #tpu.memory_space<vmem>>, %arg6: memref<32x32xf32, #tpu.memory_space<vmem>>, %arg7: memref<32x32xf32, #tpu.memory_space<vmem>>, %arg8: memref<32x32xf32, #tpu.memory_space<vmem>>, %arg9: memref<1x32xf32, #tpu.memory_space<vmem>>, %arg10: memref<1x32xf32, #tpu.memory_space<vmem>>, %arg11: memref<1x32xf32, #tpu.memory_space<vmem>>, %arg12: memref<128x32xf32, #tpu.memory_space<vmem>>) attributes {dimension_semantics = [#tpu.dimension_semantics<parallel>], iteration_bounds = array<i64: 1>, scalar_prefetch = 1 : i64, scratch_operands = 0 : i64, tpu.core_type = #tpu.core_type<tc>, window_params = [{transform_indices = @transform_0, window_bounds = array<i64: 128, 1>}, {transform_indices = @transform_1, window_bounds = array<i64: 128, 1>}, {transform_indices = @transform_2, window_bounds = array<i64: 128, 1>}, {transform_indices = @transform_3, window_bounds = array<i64: 128, 32>}, {pipeline_mode = #tpu.pipeline_mode<synchronous>, transform_indices = @transform_4, window_bounds = array<i64: 32, 32>}, {pipeline_mode = #tpu.pipeline_mode<synchronous>, transform_indices = @transform_5, window_bounds = array<i64: 32, 32>}, {pipeline_mode = #tpu.pipeline_mode<synchronous>, transform_indices = @transform_6, window_bounds = array<i64: 32, 32>}, {pipeline_mode = #tpu.pipeline_mode<synchronous>, transform_indices = @transform_7, window_bounds = array<i64: 1, 32>}, {pipeline_mode = #tpu.pipeline_mode<synchronous>, transform_indices = @transform_8, window_bounds = array<i64: 1, 32>}, {pipeline_mode = #tpu.pipeline_mode<synchronous>, transform_indices = @transform_9, window_bounds = array<i64: 1, 32>}, {transform_indices = @transform_10, window_bounds = array<i64: 128, 32>}]} {
    %0 = arith.index_cast %arg0 : i32 to index
    %1 = memref.load %arg1[%0] : memref<1xi32, #tpu.memory_space<smem>>
    %2 = tpu.assume_multiple %1, 8 : i32
    %3 = arith.index_cast %2 : i32 to index
    %c0 = arith.constant 0 : index
    %4 = vector.load %arg6[%3, %c0] : memref<32x32xf32, #tpu.memory_space<vmem>>, vector<16x32xf32>
    %5 = tpu.iota {dimensions = array<i32: 1>} : vector<128x16xi32>
    %6 = vector.broadcast %2 : i32 to vector<128x16xi32>
    %7 = arith.addi %6, %5 : vector<128x16xi32>
    %c0_0 = arith.constant 0 : index
    %c0_1 = arith.constant 0 : index
    %8 = vector.load %arg2[%c0_0, %c0_1] : memref<128x1xi32, #tpu.memory_space<vmem>>, vector<128x1xi32>
    %9 = vector.broadcast %8 : vector<128x1xi32> to vector<128x16xi32>
    %10 = arith.cmpi sge, %7, %9 : vector<128x16xi32>
    %c0_2 = arith.constant 0 : index
    %c0_3 = arith.constant 0 : index
    %11 = vector.load %arg3[%c0_2, %c0_3] : memref<128x1xi32, #tpu.memory_space<vmem>>, vector<128x1xi32>
    %12 = vector.broadcast %11 : vector<128x1xi32> to vector<128x16xi32>
    %13 = arith.cmpi slt, %7, %12 : vector<128x16xi32>
    %14 = arith.andi %10, %13 : vector<128x16xi1>
    %c0_4 = arith.constant 0 : index
    %c0_5 = arith.constant 0 : index
    %15 = vector.load %arg4[%c0_4, %c0_5] : memref<128x1xf32, #tpu.memory_space<vmem>>, vector<128x1xf32>
    %cst = arith.constant 0.000000e+00 : f32
    %16 = vector.shape_cast %15 : vector<128x1xf32> to vector<128x1xf32>
    %17 = vector.broadcast %16 : vector<128x1xf32> to vector<128x16xf32>
    %18 = vector.broadcast %cst : f32 to vector<128x16xf32>
    %19 = arith.select %14, %17, %18 : vector<128x16xi1>, vector<128x16xf32>
    %cst_6 = arith.constant dense<0.000000e+00> : vector<128x32xf32>
    %20 = tpu.matmul %19, %4, %cst_6 {dimension_numbers = #tpu.dot_dimension_numbers<[1], [0], [0], [1], [0, 0, 1, 1], [], []>, precision = #tpu.contract_precision<fp32>} : vector<128x16xf32>, vector<16x32xf32>, vector<128x32xf32> -> vector<128x32xf32>
    %c0_7 = arith.constant 0 : index
    %c0_8 = arith.constant 0 : index
    %21 = vector.load %arg5[%c0_7, %c0_8] : memref<128x32xf32, #tpu.memory_space<vmem>>, vector<128x32xf32>
    %c0_9 = arith.constant 0 : index
    %c0_10 = arith.constant 0 : index
    %22 = vector.load %arg7[%c0_9, %c0_10] : memref<32x32xf32, #tpu.memory_space<vmem>>, vector<32x32xf32>
    %cst_11 = arith.constant dense<0.000000e+00> : vector<128x32xf32>
    %23 = tpu.matmul %21, %22, %cst_11 {dimension_numbers = #tpu.dot_dimension_numbers<[1], [0], [0], [1], [0, 0, 1, 1], [], []>, precision = #tpu.contract_precision<fp32>} : vector<128x32xf32>, vector<32x32xf32>, vector<128x32xf32> -> vector<128x32xf32>
    %c0_12 = arith.constant 0 : index
    %c0_13 = arith.constant 0 : index
    %24 = vector.load %arg8[%c0_12, %c0_13] : memref<32x32xf32, #tpu.memory_space<vmem>>, vector<32x32xf32>
    %cst_14 = arith.constant dense<0.000000e+00> : vector<128x32xf32>
    %25 = tpu.matmul %20, %24, %cst_14 {dimension_numbers = #tpu.dot_dimension_numbers<[1], [0], [0], [1], [0, 0, 1, 1], [], []>, precision = #tpu.contract_precision<fp32>} : vector<128x32xf32>, vector<32x32xf32>, vector<128x32xf32> -> vector<128x32xf32>
    %26 = arith.addf %23, %25 : vector<128x32xf32>
    %c0_15 = arith.constant 0 : index
    %c0_16 = arith.constant 0 : index
    %27 = vector.load %arg9[%c0_15, %c0_16] : memref<1x32xf32, #tpu.memory_space<vmem>>, vector<1x32xf32>
    %28 = vector.broadcast %27 : vector<1x32xf32> to vector<128x32xf32>
    %29 = arith.addf %26, %28 : vector<128x32xf32>
    %cst_17 = arith.constant 0.000000e+00 : f32
    %30 = vector.broadcast %cst_17 : f32 to vector<128x32xf32>
    %31 = arith.maximumf %29, %30 : vector<128x32xf32>
    %cst_18 = arith.constant dense<0.000000e+00> : vector<128xf32>
    %32 = vector.multi_reduction <add>, %31, %cst_18 [1] : vector<128x32xf32> to vector<128xf32>
    %33 = vector.shape_cast %32 : vector<128xf32> to vector<128x1xf32>
    %cst_19 = arith.constant 3.200000e+01 : f32
    %34 = vector.broadcast %cst_19 : f32 to vector<128x1xf32>
    %35 = arith.divf %33, %34 : vector<128x1xf32>
    %36 = vector.broadcast %35 : vector<128x1xf32> to vector<128x32xf32>
    %37 = arith.subf %31, %36 : vector<128x32xf32>
    %38 = arith.mulf %37, %37 : vector<128x32xf32>
    %cst_20 = arith.constant dense<0.000000e+00> : vector<128xf32>
    %39 = vector.multi_reduction <add>, %38, %cst_20 [1] : vector<128x32xf32> to vector<128xf32>
    %40 = vector.shape_cast %39 : vector<128xf32> to vector<128x1xf32>
    %cst_21 = arith.constant 3.200000e+01 : f32
    %41 = vector.broadcast %cst_21 : f32 to vector<128x1xf32>
    %42 = arith.divf %40, %41 : vector<128x1xf32>
    %cst_22 = arith.constant 9.99999971E-10 : f32
    %43 = vector.broadcast %cst_22 : f32 to vector<128x1xf32>
    %44 = arith.addf %42, %43 : vector<128x1xf32>
    %45 = vector.broadcast %35 : vector<128x1xf32> to vector<128x32xf32>
    %46 = arith.subf %31, %45 : vector<128x32xf32>
    %c0_23 = arith.constant 0 : index
    %c0_24 = arith.constant 0 : index
    %47 = vector.load %arg10[%c0_23, %c0_24] : memref<1x32xf32, #tpu.memory_space<vmem>>, vector<1x32xf32>
    %48 = vector.broadcast %47 : vector<1x32xf32> to vector<128x32xf32>
    %49 = arith.mulf %46, %48 : vector<128x32xf32>
    %50 = math.rsqrt %44 : vector<128x1xf32>
    %51 = vector.broadcast %50 : vector<128x1xf32> to vector<128x32xf32>
    %52 = arith.mulf %49, %51 : vector<128x32xf32>
    %c0_25 = arith.constant 0 : index
    %c0_26 = arith.constant 0 : index
    %53 = vector.load %arg11[%c0_25, %c0_26] : memref<1x32xf32, #tpu.memory_space<vmem>>, vector<1x32xf32>
    %54 = vector.broadcast %53 : vector<1x32xf32> to vector<128x32xf32>
    %55 = arith.addf %52, %54 : vector<128x32xf32>
    %c0_27 = arith.constant 0 : index
    %c0_28 = arith.constant 0 : index
    %56 = vector.load %arg12[%c0_27, %c0_28] : memref<128x32xf32, #tpu.memory_space<vmem>>, vector<128x32xf32>
    tpu.vector_store %arg12[%c0_27, %c0_28], %55 {strides = array<i32>} : memref<128x32xf32, #tpu.memory_space<vmem>>, vector<128x32xf32>,
    return
  }
  func.func @transform_0(%arg0: i32, %arg1: memref<1xi32, #tpu.memory_space<smem>>) -> (i32, i32) {
    %c0_i32 = arith.constant 0 : i32
    %c0_i32_0 = arith.constant 0 : i32
    return %arg0, %c0_i32 : i32, i32
  }
  func.func @transform_1(%arg0: i32, %arg1: memref<1xi32, #tpu.memory_space<smem>>) -> (i32, i32) {
    %c0_i32 = arith.constant 0 : i32
    %c0_i32_0 = arith.constant 0 : i32
    return %arg0, %c0_i32 : i32, i32
  }
  func.func @transform_2(%arg0: i32, %arg1: memref<1xi32, #tpu.memory_space<smem>>) -> (i32, i32) {
    %c0_i32 = arith.constant 0 : i32
    %c0_i32_0 = arith.constant 0 : i32
    return %arg0, %c0_i32 : i32, i32
  }
  func.func @transform_3(%arg0: i32, %arg1: memref<1xi32, #tpu.memory_space<smem>>) -> (i32, i32) {
    %c0_i32 = arith.constant 0 : i32
    %c0_i32_0 = arith.constant 0 : i32
    return %arg0, %c0_i32 : i32, i32
  }
  func.func @transform_4(%arg0: i32, %arg1: memref<1xi32, #tpu.memory_space<smem>>) -> (i32, i32) {
    %c0_i32 = arith.constant 0 : i32
    %c0_i32_0 = arith.constant 0 : i32
    %c0_i32_1 = arith.constant 0 : i32
    return %c0_i32, %c0_i32_0 : i32, i32
  }
  func.func @transform_5(%arg0: i32, %arg1: memref<1xi32, #tpu.memory_space<smem>>) -> (i32, i32) {
    %c0_i32 = arith.constant 0 : i32
    %c0_i32_0 = arith.constant 0 : i32
    %c0_i32_1 = arith.constant 0 : i32
    return %c0_i32, %c0_i32_0 : i32, i32
  }
  func.func @transform_6(%arg0: i32, %arg1: memref<1xi32, #tpu.memory_space<smem>>) -> (i32, i32) {
    %c0_i32 = arith.constant 0 : i32
    %c0_i32_0 = arith.constant 0 : i32
    %c0_i32_1 = arith.constant 0 : i32
    return %c0_i32, %c0_i32_0 : i32, i32
  }
  func.func @transform_7(%arg0: i32, %arg1: memref<1xi32, #tpu.memory_space<smem>>) -> (i32, i32) {
    %c0_i32 = arith.constant 0 : i32
    %c0_i32_0 = arith.constant 0 : i32
    %c0_i32_1 = arith.constant 0 : i32
    return %c0_i32, %c0_i32_0 : i32, i32
  }
  func.func @transform_8(%arg0: i32, %arg1: memref<1xi32, #tpu.memory_space<smem>>) -> (i32, i32) {
    %c0_i32 = arith.constant 0 : i32
    %c0_i32_0 = arith.constant 0 : i32
    %c0_i32_1 = arith.constant 0 : i32
    return %c0_i32, %c0_i32_0 : i32, i32
  }
  func.func @transform_9(%arg0: i32, %arg1: memref<1xi32, #tpu.memory_space<smem>>) -> (i32, i32) {
    %c0_i32 = arith.constant 0 : i32
    %c0_i32_0 = arith.constant 0 : i32
    %c0_i32_1 = arith.constant 0 : i32
    return %c0_i32, %c0_i32_0 : i32, i32
  }
  func.func @transform_10(%arg0: i32, %arg1: memref<1xi32, #tpu.memory_space<smem>>) -> (i32, i32) {
    %c0_i32 = arith.constant 0 : i32
    %c0_i32_0 = arith.constant 0 : i32
    return %arg0, %c0_i32 : i32, i32
  }
}

</mosaic_0001>

<llo_original>
// kernel: tpu_custom_call.1
$region0: #{tpu_custom_call.1}
  #allocation0 [shape = 'u32[]', space=smem, size = 0x4, offset = 0x4, fixed_abs, tag = 'smem constant byte address 0x4 - core index']
  #allocation1 [shape = 'u32[144,128]{1,0:T(1,128)}', space=vmem, size = 0x12000, scoped, tag = 'internal scratch']
  #allocation2 [shape = 's32[1]{0}', space=sflag, size = 0x4, scoped, tag = 'scoped memory for tpu_custom_call.1']
  #allocation3 [shape = 's32[1]{0:T(128)S(6)}', space=smem, size = 0x200, scoped, tag = 'prefetched SMEM operand 0']
  %s0 = inlined_call_operand.<no memory space> [shape: s32[1], index: 0, kind: input, shape index: {}]
  %s1 = inlined_call_operand.hbm [shape: s32[128,1], index: 1, kind: input, shape index: {}]
  %s2 = inlined_call_operand.hbm [shape: s32[128,1], index: 2, kind: input, shape index: {}]
  %s3 = inlined_call_operand.hbm [shape: f32[128,1], index: 3, kind: input, shape index: {}]
  %s4 = inlined_call_operand.hbm [shape: f32[128,32], index: 4, kind: input, shape index: {}]
  %s5 = inlined_call_operand.hbm [shape: f32[32,32], index: 5, kind: input, shape index: {}]
  %s6 = inlined_call_operand.hbm [shape: f32[32,32], index: 6, kind: input, shape index: {}]
  %s7 = inlined_call_operand.hbm [shape: f32[32,32], index: 7, kind: input, shape index: {}]
  %s8 = inlined_call_operand.hbm [shape: f32[1,32], index: 8, kind: input, shape index: {}]
  %s9 = inlined_call_operand.hbm [shape: f32[1,32], index: 9, kind: input, shape index: {}]
  %s10 = inlined_call_operand.hbm [shape: f32[1,32], index: 10, kind: input, shape index: {}]
  %s11 = inlined_call_operand.hbm [shape: f32[128,32], index: 11, kind: output, shape index: {}]
  %s12 = sld [smem:[#allocation0]]
  $region90: #{tpu_custom_call.1} parent=0
    _
  %s14 = ssub.s32 1, %s12
  %s15 = scalar_select 0, %s14, %s12
  %16 = sst [smem:[#allocation3]] %s0
  $region1: #{tpu_custom_call.1} parent=0
    #allocation4 [shape = 'u8[65536]{0}', space=vmem, size = 0x10000, scoped, tag = 'input window, operand 1, single buffered']
    #allocation5 [shape = 's32[1]{0}', space=sflag, size = 0x4, scoped, tag = 'scoped memory for tpu_custom_call.1']
    #allocation6 [shape = 's32[1]{0}', space=sflag, size = 0x4, scoped, tag = 'scoped memory for tpu_custom_call.1']
    #allocation7 [shape = 'u8[65536]{0}', space=vmem, size = 0x10000, scoped, tag = 'input window, operand 2, single buffered']
    #allocation8 [shape = 's32[1]{0}', space=sflag, size = 0x4, scoped, tag = 'scoped memory for tpu_custom_call.1']
    #allocation9 [shape = 'u8[65536]{0}', space=vmem, size = 0x10000, scoped, tag = 'input window, operand 3, single buffered']
    #allocation10 [shape = 'u8[65536]{0}', space=vmem, size = 0x10000, scoped, tag = 'input window, operand 4, single buffered']
    #allocation11 [shape = 's32[1]{0}', space=sflag, size = 0x4, scoped, tag = 'scoped memory for tpu_custom_call.1']
    #allocation12 [shape = 'u8[16384]{0}', space=vmem, size = 0x4000, scoped, tag = 'input window, operand 5, single buffered']
    #allocation13 [shape = 'u8[16384]{0}', space=vmem, size = 0x4000, scoped, tag = 'input window, operand 6, single buffered']
    #allocation14 [shape = 's32[1]{0}', space=sflag, size = 0x4, scoped, tag = 'scoped memory for tpu_custom_call.1']
    #allocation15 [shape = 'u8[16384]{0}', space=vmem, size = 0x4000, scoped, tag = 'input window, operand 7, single buffered']
    #allocation16 [shape = 'u8[512]{0}', space=vmem, size = 0x400, scoped, tag = 'input window, operand 8, single buffered']
    #allocation17 [shape = 's32[1]{0}', space=sflag, size = 0x4, scoped, tag = 'scoped memory for tpu_custom_call.1']
    #allocation18 [shape = 'u8[512]{0}', space=vmem, size = 0x400, scoped, tag = 'input window, operand 9, single buffered']
    #allocation19 [shape = 'u8[512]{0}', space=vmem, size = 0x400, scoped, tag = 'input window, operand 10, single buffered']
    #allocation20 [shape = 's32[1]{0}', space=sflag, size = 0x4, scoped, tag = 'scoped memory for tpu_custom_call.1']
    #allocation21 [shape = 'u8[65536]{0}', space=vmem, size = 0x10000, scoped, tag = 'output window, operand 0, single buffered']
    %17 = vsyncpa [#allocation5], 0
    %18 = vsyncpa [#allocation8], 0
    %19 = vsyncpa [#allocation11], 0
    %20 = vsyncpa [#allocation14], 0
    %21 = vsyncpa [#allocation17], 0
    %22 = vsyncpa [#allocation20], 0
    %23 = vsyncpa [#allocation6], 0
    // Predicated region
    $region2: #{tpu_custom_call.1} parent=1 // pred_check
      _
    $region3: #{tpu_custom_call.1} parent=1 // pred_check_branch
      %25 = sbr.rel (0) target = $region5
    $region4: #{tpu_custom_call.1} parent=1 // pred_region
      %s27 = ssub.s32 2048, 2048
      %28 = vsyncadd [#allocation5], %s27
      %s29 = sshll.u32 [#allocation4], 4
      %s30 = int_to_ptr.vmem [resolvable:$true] %s29
      %35 = dma.hbm_to_vmem [thread:$0]  %s1, 2048, %s30, [#allocation5], 128, 128, 8
    $region5: #{tpu_custom_call.1} parent=1 // pred_fallthru
      _
    // Predicated region
    $region6: #{tpu_custom_call.1} parent=1 // pred_check
      _
    $region7: #{tpu_custom_call.1} parent=1 // pred_check_branch
      %37 = sbr.rel (0) target = $region9
    $region8: #{tpu_custom_call.1} parent=1 // pred_region
      %s39 = ssub.s32 2048, 2048
      %40 = vsyncadd [#allocation8], %s39
      %s41 = sshll.u32 [#allocation7], 4
      %s42 = int_to_ptr.vmem [resolvable:$true] %s41
      %47 = dma.hbm_to_vmem [thread:$0]  %s2, 2048, %s42, [#allocation8], 128, 128, 8
    $region9: #{tpu_custom_call.1} parent=1 // pred_fallthru
      _
    // Predicated region
    $region10: #{tpu_custom_call.1} parent=1 // pred_check
      _
    $region11: #{tpu_custom_call.1} parent=1 // pred_check_branch
      %49 = sbr.rel (0) target = $region13
    $region12: #{tpu_custom_call.1} parent=1 // pred_region
      %s51 = ssub.s32 2048, 2048
      %52 = vsyncadd [#allocation8], %s51
      %s53 = sshll.u32 [#allocation9], 4
      %s54 = int_to_ptr.vmem [resolvable:$true] %s53
      %59 = dma.hbm_to_vmem [thread:$0]  %s3, 2048, %s54, [#allocation8], 128, 128, 8
    $region13: #{tpu_custom_call.1} parent=1 // pred_fallthru
      _
    // Predicated region
    $region14: #{tpu_custom_call.1} parent=1 // pred_check
      _
    $region15: #{tpu_custom_call.1} parent=1 // pred_check_branch
      %61 = sbr.rel (0) target = $region17
    $region16: #{tpu_custom_call.1} parent=1 // pred_region
      %s63 = ssub.s32 2048, 2048
      %64 = vsyncadd [#allocation11], %s63
      %s65 = sshll.u32 [#allocation10], 4
      %s66 = int_to_ptr.vmem [resolvable:$true] %s65
      %71 = dma.hbm_to_vmem [thread:$0]  %s4, 2048, %s66, [#allocation11], 128, 128, 8
    $region17: #{tpu_custom_call.1} parent=1 // pred_fallthru
      _
    // Predicated region
    $region18: #{tpu_custom_call.1} parent=1 // pred_check
      _
    $region19: #{tpu_custom_call.1} parent=1 // pred_check_branch
      %73 = sbr.rel (0) target = $region21
    $region20: #{tpu_custom_call.1} parent=1 // pred_region
      %s75 = ssub.s32 512, 512
      %76 = vsyncadd [#allocation11], %s75
      %s77 = sshll.u32 [#allocation12], 4
      %s78 = int_to_ptr.vmem [resolvable:$true] %s77
      %83 = dma.hbm_to_vmem [thread:$0]  %s5, 512, %s78, [#allocation11], 128, 128, 8
    $region21: #{tpu_custom_call.1} parent=1 // pred_fallthru
      _
    // Predicated region
    $region22: #{tpu_custom_call.1} parent=1 // pred_check
      _
    $region23: #{tpu_custom_call.1} parent=1 // pred_check_branch
      %85 = sbr.rel (0) target = $region25
    $region24: #{tpu_custom_call.1} parent=1 // pred_region
      %s87 = ssub.s32 512, 512
      %88 = vsyncadd [#allocation14], %s87
      %s89 = sshll.u32 [#allocation13], 4
      %s90 = int_to_ptr.vmem [resolvable:$true] %s89
      %95 = dma.hbm_to_vmem [thread:$0]  %s6, 512, %s90, [#allocation14], 128, 128, 8
    $region25: #{tpu_custom_call.1} parent=1 // pred_fallthru
      _
    // Predicated region
    $region26: #{tpu_custom_call.1} parent=1 // pred_check
      _
    $region27: #{tpu_custom_call.1} parent=1 // pred_check_branch
      %97 = sbr.rel (0) target = $region29
    $region28: #{tpu_custom_call.1} parent=1 // pred_region
      %s99 = ssub.s32 512, 512
      %100 = vsyncadd [#allocation14], %s99
      %s101 = sshll.u32 [#allocation15], 4
      %s102 = int_to_ptr.vmem [resolvable:$true] %s101
      %107 = dma.hbm_to_vmem [thread:$0]  %s7, 512, %s102, [#allocation14], 128, 128, 8
    $region29: #{tpu_custom_call.1} parent=1 // pred_fallthru
      _
    // Predicated region
    $region30: #{tpu_custom_call.1} parent=1 // pred_check
      _
    $region31: #{tpu_custom_call.1} parent=1 // pred_check_branch
      %109 = sbr.rel (0) target = $region33
    $region32: #{tpu_custom_call.1} parent=1 // pred_region
      %s111 = ssub.s32 16, 16
      %112 = vsyncadd [#allocation17], %s111
      %s114 = sshll.u32 [#allocation16], 4
      %s115 = int_to_ptr.vmem [resolvable:$true] %s114
      %117 = dma.hbm_to_vmem [thread:$0]  %s8, 16, %s115, [#allocation17]
    $region33: #{tpu_custom_call.1} parent=1 // pred_fallthru
      _
    // Predicated region
    $region34: #{tpu_custom_call.1} parent=1 // pred_check
      _
    $region35: #{tpu_custom_call.1} parent=1 // pred_check_branch
      %119 = sbr.rel (0) target = $region37
    $region36: #{tpu_custom_call.1} parent=1 // pred_region
      %s121 = ssub.s32 16, 16
      %122 = vsyncadd [#allocation17], %s121
      %s124 = sshll.u32 [#allocation18], 4
      %s125 = int_to_ptr.vmem [resolvable:$true] %s124
      %127 = dma.hbm_to_vmem [thread:$0]  %s9, 16, %s125, [#allocation17]
    $region37: #{tpu_custom_call.1} parent=1 // pred_fallthru
      _
    // Predicated region
    $region38: #{tpu_custom_call.1} parent=1 // pred_check
      _
    $region39: #{tpu_custom_call.1} parent=1 // pred_check_branch
      %129 = sbr.rel (0) target = $region41
    $region40: #{tpu_custom_call.1} parent=1 // pred_region
      %s131 = ssub.s32 16, 16
      %132 = vsyncadd [#allocation20], %s131
      %s134 = sshll.u32 [#allocation19], 4
      %s135 = int_to_ptr.vmem [resolvable:$true] %s134
      %137 = dma.hbm_to_vmem [thread:$0]  %s10, 16, %s135, [#allocation20]
    $region41: #{tpu_custom_call.1} parent=1 // pred_fallthru
      _
    // Predicated region
    $region42: #{tpu_custom_call.1} parent=1 // pred_check
      _
    $region43: #{tpu_custom_call.1} parent=1 // pred_check_branch
      %139 = sbr.rel (0) target = $region45
    $region44: #{tpu_custom_call.1} parent=1 // pred_region
      %140 = dma.done [#allocation5], 2048
    $region45: #{tpu_custom_call.1} parent=1 // pred_fallthru
      _
    // Predicated region
    $region46: #{tpu_custom_call.1} parent=1 // pred_check
      _
    $region47: #{tpu_custom_call.1} parent=1 // pred_check_branch
      %142 = sbr.rel (0) target = $region49
    $region48: #{tpu_custom_call.1} parent=1 // pred_region
      %143 = dma.done [#allocation8], 2048
    $region49: #{tpu_custom_call.1} parent=1 // pred_fallthru
      _
    // Predicated region
    $region50: #{tpu_custom_call.1} parent=1 // pred_check
      _
    $region51: #{tpu_custom_call.1} parent=1 // pred_check_branch
      %145 = sbr.rel (0) target = $region53
    $region52: #{tpu_custom_call.1} parent=1 // pred_region
      %146 = dma.done [#allocation8], 2048
    $region53: #{tpu_custom_call.1} parent=1 // pred_fallthru
      _
    // Predicated region
    $region54: #{tpu_custom_call.1} parent=1 // pred_check
      _
    $region55: #{tpu_custom_call.1} parent=1 // pred_check_branch
      %148 = sbr.rel (0) target = $region57
    $region56: #{tpu_custom_call.1} parent=1 // pred_region
      %149 = dma.done [#allocation11], 2048
    $region57: #{tpu_custom_call.1} parent=1 // pred_fallthru
      _
    // Predicated region
    $region58: #{tpu_custom_call.1} parent=1 // pred_check
      _
    $region59: #{tpu_custom_call.1} parent=1 // pred_check_branch
      %151 = sbr.rel (0) target = $region61
    $region60: #{tpu_custom_call.1} parent=1 // pred_region
      %152 = dma.done [#allocation11], 512
    $region61: #{tpu_custom_call.1} parent=1 // pred_fallthru
      _
    // Predicated region
    $region62: #{tpu_custom_call.1} parent=1 // pred_check
      _
    $region63: #{tpu_custom_call.1} parent=1 // pred_check_branch
      %154 = sbr.rel (0) target = $region65
    $region64: #{tpu_custom_call.1} parent=1 // pred_region
      %155 = dma.done [#allocation14], 512
    $region65: #{tpu_custom_call.1} parent=1 // pred_fallthru
      _
    // Predicated region
    $region66: #{tpu_custom_call.1} parent=1 // pred_check
      _
    $region67: #{tpu_custom_call.1} parent=1 // pred_check_branch
      %157 = sbr.rel (0) target = $region69
    $region68: #{tpu_custom_call.1} parent=1 // pred_region
      %158 = dma.done [#allocation14], 512
    $region69: #{tpu_custom_call.1} parent=1 // pred_fallthru
      _
    // Predicated region
    $region70: #{tpu_custom_call.1} parent=1 // pred_check
      _
    $region71: #{tpu_custom_call.1} parent=1 // pred_check_branch
      %160 = sbr.rel (0) target = $region73
    $region72: #{tpu_custom_call.1} parent=1 // pred_region
      %161 = dma.done [#allocation17], 16
    $region73: #{tpu_custom_call.1} parent=1 // pred_fallthru
      _
    // Predicated region
    $region74: #{tpu_custom_call.1} parent=1 // pred_check
      _
    $region75: #{tpu_custom_call.1} parent=1 // pred_check_branch
      %163 = sbr.rel (0) target = $region77
    $region76: #{tpu_custom_call.1} parent=1 // pred_region
      %164 = dma.done [#allocation17], 16
    $region77: #{tpu_custom_call.1} parent=1 // pred_fallthru
      _
    // Predicated region
    $region78: #{tpu_custom_call.1} parent=1 // pred_check
      _
    $region79: #{tpu_custom_call.1} parent=1 // pred_check_branch
      %166 = sbr.rel (0) target = $region81
    $region80: #{tpu_custom_call.1} parent=1 // pred_region
      %167 = dma.done [#allocation20], 16
    $region81: #{tpu_custom_call.1} parent=1 // pred_fallthru
      _
    %s168 = sld [smem:[#allocation3]]
    %s169 = scalar_lea.vmem [#allocation12], %s168
    %v170 = vld [vmem:[%s169] sm:$0xff]
    %v171 = vld [vmem:[%s169 + $0x8] sm:$0xff]
    %v172 = vlaneseq
    %v173 = vand.u32 %v172, 127
    %v174 = vstv %s168
    %v175 = vadd.s32 %v174, %v173
    %v176 = vld [vmem:[#allocation4] sm:$0xff]
    %v177 = vld [vmem:[#allocation4 + $0x8] sm:$0xff]
    %v178 = vld [vmem:[#allocation4 + $0x10] sm:$0xff]
    %v179 = vld [vmem:[#allocation4 + $0x18] sm:$0xff]
    %v180 = vld [vmem:[#allocation4 + $0x20] sm:$0xff]
    %v181 = vld [vmem:[#allocation4 + $0x28] sm:$0xff]
    %v182 = vld [vmem:[#allocation4 + $0x30] sm:$0xff]
    %v183 = vld [vmem:[#allocation4 + $0x38] sm:$0xff]
    %v184 = vld [vmem:[#allocation4 + $0x40] sm:$0xff]
    %v185 = vld [vmem:[#allocation4 + $0x48] sm:$0xff]
    %v186 = vld [vmem:[#allocation4 + $0x50] sm:$0xff]
    %v187 = vld [vmem:[#allocation4 + $0x58] sm:$0xff]
    %v188 = vld [vmem:[#allocation4 + $0x60] sm:$0xff]
    %v189 = vld [vmem:[#allocation4 + $0x68] sm:$0xff]
    %v190 = vld [vmem:[#allocation4 + $0x70] sm:$0xff]
    %v191 = vld [vmem:[#allocation4 + $0x78] sm:$0xff]
    %192 = vset.pattern.permute.xlu0 0
    %193 = vperm.xlu0 %192, %v176
    %v194 = vpop.permute.xlu0 %193
    %195 = vset.pattern.permute.xlu0 0
    %196 = vperm.xlu0 %195, %v177
    %v197 = vpop.permute.xlu0 %196
    %198 = vset.pattern.permute.xlu0 0
    %199 = vperm.xlu0 %198, %v178
    %v200 = vpop.permute.xlu0 %199
    %201 = vset.pattern.permute.xlu0 0
    %202 = vperm.xlu0 %201, %v179
    %v203 = vpop.permute.xlu0 %202
    %204 = vset.pattern.permute.xlu0 0
    %205 = vperm.xlu0 %204, %v180
    %v206 = vpop.permute.xlu0 %205
    %207 = vset.pattern.permute.xlu0 0
    %208 = vperm.xlu0 %207, %v181
    %v209 = vpop.permute.xlu0 %208
    %210 = vset.pattern.permute.xlu0 0
    %211 = vperm.xlu0 %210, %v182
    %v212 = vpop.permute.xlu0 %211
    %213 = vset.pattern.permute.xlu0 0
    %214 = vperm.xlu0 %213, %v183
    %v215 = vpop.permute.xlu0 %214
    %216 = vset.pattern.permute.xlu0 0
    %217 = vperm.xlu0 %216, %v184
    %v218 = vpop.permute.xlu0 %217
    %219 = vset.pattern.permute.xlu0 0
    %220 = vperm.xlu0 %219, %v185
    %v221 = vpop.permute.xlu0 %220
    %222 = vset.pattern.permute.xlu0 0
    %223 = vperm.xlu0 %222, %v186
    %v224 = vpop.permute.xlu0 %223
    %225 = vset.pattern.permute.xlu0 0
    %226 = vperm.xlu0 %225, %v187
    %v227 = vpop.permute.xlu0 %226
    %228 = vset.pattern.permute.xlu0 0
    %229 = vperm.xlu0 %228, %v188
    %v230 = vpop.permute.xlu0 %229
    %231 = vset.pattern.permute.xlu0 0
    %232 = vperm.xlu0 %231, %v189
    %v233 = vpop.permute.xlu0 %232
    %234 = vset.pattern.permute.xlu0 0
    %235 = vperm.xlu0 %234, %v190
    %v236 = vpop.permute.xlu0 %235
    %237 = vset.pattern.permute.xlu0 0
    %238 = vperm.xlu0 %237, %v191
    %v239 = vpop.permute.xlu0 %238
    %vm240 = vcmp.ge.s32.totalorder %v175, %v194
    %vm241 = vcmp.ge.s32.totalorder %v175, %v197
    %vm242 = vcmp.ge.s32.totalorder %v175, %v200
    %vm243 = vcmp.ge.s32.totalorder %v175, %v203
    %vm244 = vcmp.ge.s32.totalorder %v175, %v206
    %vm245 = vcmp.ge.s32.totalorder %v175, %v209
    %vm246 = vcmp.ge.s32.totalorder %v175, %v212
    %vm247 = vcmp.ge.s32.totalorder %v175, %v215
    %vm248 = vcmp.ge.s32.totalorder %v175, %v218
    %vm249 = vcmp.ge.s32.totalorder %v175, %v221
    %vm250 = vcmp.ge.s32.totalorder %v175, %v224
    %vm251 = vcmp.ge.s32.totalorder %v175, %v227
    %vm252 = vcmp.ge.s32.totalorder %v175, %v230
    %vm253 = vcmp.ge.s32.totalorder %v175, %v233
    %vm254 = vcmp.ge.s32.totalorder %v175, %v236
    %vm255 = vcmp.ge.s32.totalorder %v175, %v239
    %v256 = vld [vmem:[#allocation7] sm:$0xff]
    %v257 = vld [vmem:[#allocation7 + $0x8] sm:$0xff]
    %v258 = vld [vmem:[#allocation7 + $0x10] sm:$0xff]
    %v259 = vld [vmem:[#allocation7 + $0x18] sm:$0xff]
    %v260 = vld [vmem:[#allocation7 + $0x20] sm:$0xff]
    %v261 = vld [vmem:[#allocation7 + $0x28] sm:$0xff]
    %v262 = vld [vmem:[#allocation7 + $0x30] sm:$0xff]
    %v263 = vld [vmem:[#allocation7 + $0x38] sm:$0xff]
    %v264 = vld [vmem:[#allocation7 + $0x40] sm:$0xff]
    %v265 = vld [vmem:[#allocation7 + $0x48] sm:$0xff]
    %v266 = vld [vmem:[#allocation7 + $0x50] sm:$0xff]
    %v267 = vld [vmem:[#allocation7 + $0x58] sm:$0xff]
    %v268 = vld [vmem:[#allocation7 + $0x60] sm:$0xff]
    %v269 = vld [vmem:[#allocation7 + $0x68] sm:$0xff]
    %v270 = vld [vmem:[#allocation7 + $0x70] sm:$0xff]
    %v271 = vld [vmem:[#allocation7 + $0x78] sm:$0xff]
    %272 = vset.pattern.permute.xlu0 0
    %273 = vperm.xlu0 %272, %v256
    %v274 = vpop.permute.xlu0 %273
    %275 = vset.pattern.permute.xlu0 0
    %276 = vperm.xlu0 %275, %v257
    %v277 = vpop.permute.xlu0 %276
    %278 = vset.pattern.permute.xlu0 0
    %279 = vperm.xlu0 %278, %v258
    %v280 = vpop.permute.xlu0 %279
    %281 = vset.pattern.permute.xlu0 0
    %282 = vperm.xlu0 %281, %v259
    %v283 = vpop.permute.xlu0 %282
    %284 = vset.pattern.permute.xlu0 0
    %285 = vperm.xlu0 %284, %v260
    %v286 = vpop.permute.xlu0 %285
    %287 = vset.pattern.permute.xlu0 0
    %288 = vperm.xlu0 %287, %v261
    %v289 = vpop.permute.xlu0 %288
    %290 = vset.pattern.permute.xlu0 0
    %291 = vperm.xlu0 %290, %v262
    %v292 = vpop.permute.xlu0 %291
    %293 = vset.pattern.permute.xlu0 0
    %294 = vperm.xlu0 %293, %v263
    %v295 = vpop.permute.xlu0 %294
    %296 = vset.pattern.permute.xlu0 0
    %297 = vperm.xlu0 %296, %v264
    %v298 = vpop.permute.xlu0 %297
    %299 = vset.pattern.permute.xlu0 0
    %300 = vperm.xlu0 %299, %v265
    %v301 = vpop.permute.xlu0 %300
    %302 = vset.pattern.permute.xlu0 0
    %303 = vperm.xlu0 %302, %v266
    %v304 = vpop.permute.xlu0 %303
    %305 = vset.pattern.permute.xlu0 0
    %306 = vperm.xlu0 %305, %v267
    %v307 = vpop.permute.xlu0 %306
    %308 = vset.pattern.permute.xlu0 0
    %309 = vperm.xlu0 %308, %v268
    %v310 = vpop.permute.xlu0 %309
    %311 = vset.pattern.permute.xlu0 0
    %312 = vperm.xlu0 %311, %v269
    %v313 = vpop.permute.xlu0 %312
    %314 = vset.pattern.permute.xlu0 0
    %315 = vperm.xlu0 %314, %v270
    %v316 = vpop.permute.xlu0 %315
    %317 = vset.pattern.permute.xlu0 0
    %318 = vperm.xlu0 %317, %v271
    %v319 = vpop.permute.xlu0 %318
    %vm320 = vcmp.lt.s32.totalorder %v175, %v274
    %vm321 = vcmp.lt.s32.totalorder %v175, %v277
    %vm322 = vcmp.lt.s32.totalorder %v175, %v280
    %vm323 = vcmp.lt.s32.totalorder %v175, %v283
    %vm324 = vcmp.lt.s32.totalorder %v175, %v286
    %vm325 = vcmp.lt.s32.totalorder %v175, %v289
    %vm326 = vcmp.lt.s32.totalorder %v175, %v292
    %vm327 = vcmp.lt.s32.totalorder %v175, %v295
    %vm328 = vcmp.lt.s32.totalorder %v175, %v298
    %vm329 = vcmp.lt.s32.totalorder %v175, %v301
    %vm330 = vcmp.lt.s32.totalorder %v175, %v304
    %vm331 = vcmp.lt.s32.totalorder %v175, %v307
    %vm332 = vcmp.lt.s32.totalorder %v175, %v310
    %vm333 = vcmp.lt.s32.totalorder %v175, %v313
    %vm334 = vcmp.lt.s32.totalorder %v175, %v316
    %vm335 = vcmp.lt.s32.totalorder %v175, %v319
    %vm336 = vmand %vm240, %vm320
    %vm337 = vmand %vm241, %vm321
    %vm338 = vmand %vm242, %vm322
    %vm339 = vmand %vm243, %vm323
    %vm340 = vmand %vm244, %vm324
    %vm341 = vmand %vm245, %vm325
    %vm342 = vmand %vm246, %vm326
    %vm343 = vmand %vm247, %vm327
    %vm344 = vmand %vm248, %vm328
    %vm345 = vmand %vm249, %vm329
    %vm346 = vmand %vm250, %vm330
    %vm347 = vmand %vm251, %vm331
    %vm348 = vmand %vm252, %vm332
    %vm349 = vmand %vm253, %vm333
    %vm350 = vmand %vm254, %vm334
    %vm351 = vmand %vm255, %vm335
    %v352 = vld [vmem:[#allocation9] sm:$0xff]
    %v353 = vld [vmem:[#allocation9 + $0x8] sm:$0xff]
    %v354 = vld [vmem:[#allocation9 + $0x10] sm:$0xff]
    %v355 = vld [vmem:[#allocation9 + $0x18] sm:$0xff]
    %v356 = vld [vmem:[#allocation9 + $0x20] sm:$0xff]
    %v357 = vld [vmem:[#allocation9 + $0x28] sm:$0xff]
    %v358 = vld [vmem:[#allocation9 + $0x30] sm:$0xff]
    %v359 = vld [vmem:[#allocation9 + $0x38] sm:$0xff]
    %v360 = vld [vmem:[#allocation9 + $0x40] sm:$0xff]
    %v361 = vld [vmem:[#allocation9 + $0x48] sm:$0xff]
    %v362 = vld [vmem:[#allocation9 + $0x50] sm:$0xff]
    %v363 = vld [vmem:[#allocation9 + $0x58] sm:$0xff]
    %v364 = vld [vmem:[#allocation9 + $0x60] sm:$0xff]
    %v365 = vld [vmem:[#allocation9 + $0x68] sm:$0xff]
    %v366 = vld [vmem:[#allocation9 + $0x70] sm:$0xff]
    %v367 = vld [vmem:[#allocation9 + $0x78] sm:$0xff]
    %369 = vset.pattern.permute.xlu0 0
    %370 = vperm.xlu0 %369, %v352
    %v371 = vpop.permute.xlu0 %370
    %374 = vset.pattern.permute.xlu0 0
    %375 = vperm.xlu0 %374, %v353
    %v376 = vpop.permute.xlu0 %375
    %379 = vset.pattern.permute.xlu0 0
    %380 = vperm.xlu0 %379, %v354
    %v381 = vpop.permute.xlu0 %380
    %384 = vset.pattern.permute.xlu0 0
    %385 = vperm.xlu0 %384, %v355
    %v386 = vpop.permute.xlu0 %385
    %389 = vset.pattern.permute.xlu0 0
    %390 = vperm.xlu0 %389, %v356
    %v391 = vpop.permute.xlu0 %390
    %394 = vset.pattern.permute.xlu0 0
    %395 = vperm.xlu0 %394, %v357
    %v396 = vpop.permute.xlu0 %395
    %399 = vset.pattern.permute.xlu0 0
    %400 = vperm.xlu0 %399, %v358
    %v401 = vpop.permute.xlu0 %400
    %404 = vset.pattern.permute.xlu0 0
    %405 = vperm.xlu0 %404, %v359
    %v406 = vpop.permute.xlu0 %405
    %409 = vset.pattern.permute.xlu0 0
    %410 = vperm.xlu0 %409, %v360
    %v411 = vpop.permute.xlu0 %410
    %414 = vset.pattern.permute.xlu0 0
    %415 = vperm.xlu0 %414, %v361
    %v416 = vpop.permute.xlu0 %415
    %419 = vset.pattern.permute.xlu0 0
    %420 = vperm.xlu0 %419, %v362
    %v421 = vpop.permute.xlu0 %420
    %424 = vset.pattern.permute.xlu0 0
    %425 = vperm.xlu0 %424, %v363
    %v426 = vpop.permute.xlu0 %425
    %429 = vset.pattern.permute.xlu0 0
    %430 = vperm.xlu0 %429, %v364
    %v431 = vpop.permute.xlu0 %430
    %434 = vset.pattern.permute.xlu0 0
    %435 = vperm.xlu0 %434, %v365
    %v436 = vpop.permute.xlu0 %435
    %439 = vset.pattern.permute.xlu0 0
    %440 = vperm.xlu0 %439, %v366
    %v441 = vpop.permute.xlu0 %440
    %444 = vset.pattern.permute.xlu0 0
    %445 = vperm.xlu0 %444, %v367
    %v446 = vpop.permute.xlu0 %445
    %v448 = vsel %vm336, %v371, 0.0
    %v449 = vsel %vm337, %v376, 0.0
    %v450 = vsel %vm338, %v381, 0.0
    %v451 = vsel %vm339, %v386, 0.0
    %v452 = vsel %vm340, %v391, 0.0
    %v453 = vsel %vm341, %v396, 0.0
    %v454 = vsel %vm342, %v401, 0.0
    %v455 = vsel %vm343, %v406, 0.0
    %v456 = vsel %vm344, %v411, 0.0
    %v457 = vsel %vm345, %v416, 0.0
    %v458 = vsel %vm346, %v421, 0.0
    %v459 = vsel %vm347, %v426, 0.0
    %v460 = vsel %vm348, %v431, 0.0
    %v461 = vsel %vm349, %v436, 0.0
    %v462 = vsel %vm350, %v441, 0.0
    %v463 = vsel %vm351, %v446, 0.0
    %vm464 = vcmask 130048
    %v466 = vsel %vm464, %v448, 0
    %v469 = vsel %vm464, %v449, 0
    %v472 = vsel %vm464, %v450, 0
    %v475 = vsel %vm464, %v451, 0
    %v478 = vsel %vm464, %v452, 0
    %v481 = vsel %vm464, %v453, 0
    %v484 = vsel %vm464, %v454, 0
    %v487 = vsel %vm464, %v455, 0
    %v490 = vsel %vm464, %v456, 0
    %v493 = vsel %vm464, %v457, 0
    %v496 = vsel %vm464, %v458, 0
    %v499 = vsel %vm464, %v459, 0
    %v502 = vsel %vm464, %v460, 0
    %v505 = vsel %vm464, %v461, 0
    %v508 = vsel %vm464, %v462, 0
    %v511 = vsel %vm464, %v463, 0
    %513 = vmatprep.subr.mxu0 0.0
    %v514 = vand.u32 %v170, 4294901760
    %515 = vmatpush1.msra.mxu0 %v514
    %516 = vmatprep.subr.mxu0 0.0
    %v517 = vand.u32 %v171, 4294901760
    %518 = vmatpush1.msra.mxu0 %v517
    %519 = vmatprep.subr.mxu0 0.0
    %520 = vmatpush1.msra.mxu0 0.0
    %521 = vmatprep.subr.mxu0 0.0
    %522 = vmatpush1.msra.mxu0 0.0
    %523 = vmatprep.subr.mxu0 0.0
    %524 = vmatpush1.msra.mxu0 0.0
    %525 = vmatprep.subr.mxu0 0.0
    %526 = vmatpush1.msra.mxu0 0.0
    %527 = vmatprep.subr.mxu0 0.0
    %528 = vmatpush1.msra.mxu0 0.0
    %529 = vmatprep.subr.mxu0 0.0
    %530 = vmatpush1.msra.mxu0 0.0
    %531 = vmatprep.subr.mxu0 0.0
    %532 = vmatpush1.msra.mxu0 0.0
    %533 = vmatprep.subr.mxu0 0.0
    %534 = vmatpush1.msra.mxu0 0.0
    %535 = vmatprep.subr.mxu0 0.0
    %536 = vmatpush1.msra.mxu0 0.0
    %537 = vmatprep.subr.mxu0 0.0
    %538 = vmatpush1.msra.mxu0 0.0
    %539 = vmatprep.subr.mxu0 0.0
    %540 = vmatpush1.msra.mxu0 0.0
    %541 = vmatprep.subr.mxu0 0.0
    %542 = vmatpush1.msra.mxu0 0.0
    %543 = vmatprep.subr.mxu0 0.0
    %544 = vmatpush1.msra.mxu0 0.0
    %545 = vmatprep.subr.mxu0 0.0
    %546 = vmatpush1.msra.mxu0 0.0
    %547 = vmatprep.subr.mxu0 0.0
    %548 = vmatpush1.msra.mxu0 0.0
    %549 = vmatprep.subr.mxu0 0.0
    %550 = vmatpush1.msra.mxu0 0.0
    %551 = vmatprep.subr.mxu0 0.0
    %552 = vmatpush1.msra.mxu0 0.0
    %553 = vmatprep.subr.mxu0 0.0
    %554 = vmatpush1.msra.mxu0 0.0
    %555 = vmatprep.subr.mxu0 0.0
    %556 = vmatpush1.msra.mxu0 0.0
    %557 = vmatprep.subr.mxu0 0.0
    %558 = vmatpush1.msra.mxu0 0.0
    %559 = vmatprep.subr.mxu0 0.0
    %560 = vmatpush1.msra.mxu0 0.0
    %561 = vmatprep.subr.mxu0 0.0
    %562 = vmatpush1.msra.mxu0 0.0
    %563 = vmatprep.subr.mxu0 0.0
    %564 = vmatpush1.msra.mxu0 0.0
    %565 = vmatprep.subr.mxu0 0.0
    %566 = vmatpush1.msra.mxu0 0.0
    %567 = vmatprep.subr.mxu0 0.0
    %568 = vmatpush1.msra.mxu0 0.0
    %569 = vmatprep.subr.mxu0 0.0
    %570 = vmatpush1.msra.mxu0 0.0
    %571 = vmatprep.subr.mxu0 0.0
    %572 = vmatpush1.msra.mxu0 0.0
    %573 = vmatprep.subr.mxu0 0.0
    %574 = vmatpush1.msra.mxu0 0.0
    %575 = vmatprep.subr.mxu0 0.0
    %576 = vmatpush1.msra.mxu0 0.0
    %577 = vmatprep.subr.mxu0 0.0
    %578 = vmatpush1.msra.mxu0 0.0
    %579 = vmatprep.mubr.f32.mxu0 0.0
    %v580 = vand.u32 %v466, 4294901760
    %v581 = vsub.f32 %v466, %v580
    %v582 = vand.u32 %v581, 4294901760
    %v583 = vsub.f32 %v581, %v582
    %v584 = vand.u32 %v583, 4294901760
    %585 = vmatmul.mubr.f32.gmra.mrb[0].mxu0 %v584
    %v586 = vpop.f32.mrb[0].mxu0
    %v587 = vadd.f32 0.0, %v586
    %v588 = vpop.f32.mrb[0].mxu0
    %589 = vmatprep.mubr.f32.mxu0 0.0
    %v590 = vand.u32 %v469, 4294901760
    %v591 = vsub.f32 %v469, %v590
    %v592 = vand.u32 %v591, 4294901760
    %v593 = vsub.f32 %v591, %v592
    %v594 = vand.u32 %v593, 4294901760
    %595 = vmatmul.mubr.f32.gmra.mrb[0].mxu0 %v594
    %v596 = vpop.f32.mrb[0].mxu0
    %v597 = vadd.f32 0.0, %v596
    %v598 = vpop.f32.mrb[0].mxu0
    %599 = vmatprep.mubr.f32.mxu0 0.0
    %v600 = vand.u32 %v472, 4294901760
    %v601 = vsub.f32 %v472, %v600
    %v602 = vand.u32 %v601, 4294901760
    %v603 = vsub.f32 %v601, %v602
    %v604 = vand.u32 %v603, 4294901760
    %605 = vmatmul.mubr.f32.gmra.mrb[0].mxu0 %v604
    %v606 = vpop.f32.mrb[0].mxu0
    %v607 = vadd.f32 0.0, %v606
    %v608 = vpop.f32.mrb[0].mxu0
    %609 = vmatprep.mubr.f32.mxu0 0.0
    %v610 = vand.u32 %v475, 4294901760
    %v611 = vsub.f32 %v475, %v610
    %v612 = vand.u32 %v611, 4294901760
    %v613 = vsub.f32 %v611, %v612
    %v614 = vand.u32 %v613, 4294901760
    %615 = vmatmul.mubr.f32.gmra.mrb[0].mxu0 %v614
    %v616 = vpop.f32.mrb[0].mxu0
    %v617 = vadd.f32 0.0, %v616
    %v618 = vpop.f32.mrb[0].mxu0
    %619 = vmatprep.mubr.f32.mxu0 0.0
    %v620 = vand.u32 %v478, 4294901760
    %v621 = vsub.f32 %v478, %v620
    %v622 = vand.u32 %v621, 4294901760
    %v623 = vsub.f32 %v621, %v622
    %v624 = vand.u32 %v623, 4294901760
    %625 = vmatmul.mubr.f32.gmra.mrb[0].mxu0 %v624
    %v626 = vpop.f32.mrb[0].mxu0
    %v627 = vadd.f32 0.0, %v626
    %v628 = vpop.f32.mrb[0].mxu0
    %629 = vmatprep.mubr.f32.mxu0 0.0
    %v630 = vand.u32 %v481, 4294901760
    %v631 = vsub.f32 %v481, %v630
    %v632 = vand.u32 %v631, 4294901760
    %v633 = vsub.f32 %v631, %v632
    %v634 = vand.u32 %v633, 4294901760
    %635 = vmatmul.mubr.f32.gmra.mrb[0].mxu0 %v634
    %v636 = vpop.f32.mrb[0].mxu0
    %v637 = vadd.f32 0.0, %v636
    %v638 = vpop.f32.mrb[0].mxu0
    %639 = vmatprep.mubr.f32.mxu0 0.0
    %v640 = vand.u32 %v484, 4294901760
    %v641 = vsub.f32 %v484, %v640
    %v642 = vand.u32 %v641, 4294901760
    %v643 = vsub.f32 %v641, %v642
    %v644 = vand.u32 %v643, 4294901760
    %645 = vmatmul.mubr.f32.gmra.mrb[0].mxu0 %v644
    %v646 = vpop.f32.mrb[0].mxu0
    %v647 = vadd.f32 0.0, %v646
    %v648 = vpop.f32.mrb[0].mxu0
    %649 = vmatprep.mubr.f32.mxu0 0.0
    %v650 = vand.u32 %v487, 4294901760
    %v651 = vsub.f32 %v487, %v650
    %v652 = vand.u32 %v651, 4294901760
    %v653 = vsub.f32 %v651, %v652
    %v654 = vand.u32 %v653, 4294901760
    %655 = vmatmul.mubr.f32.gmra.mrb[0].mxu0 %v654
    %v656 = vpop.f32.mrb[0].mxu0
    %v657 = vadd.f32 0.0, %v656
    %v658 = vpop.f32.mrb[0].mxu0
    %659 = vmatprep.mubr.f32.mxu0 0.0
    %v660 = vand.u32 %v490, 4294901760
    %v661 = vsub.f32 %v490, %v660
    %v662 = vand.u32 %v661, 4294901760
    %v663 = vsub.f32 %v661, %v662
    %v664 = vand.u32 %v663, 4294901760
    %665 = vmatmul.mubr.f32.gmra.mrb[0].mxu0 %v664
    %v666 = vpop.f32.mrb[0].mxu0
    %v667 = vadd.f32 0.0, %v666
    %v668 = vpop.f32.mrb[0].mxu0
    %669 = vmatprep.mubr.f32.mxu0 0.0
    %v670 = vand.u32 %v493, 4294901760
    %v671 = vsub.f32 %v493, %v670
    %v672 = vand.u32 %v671, 4294901760
    %v673 = vsub.f32 %v671, %v672
    %v674 = vand.u32 %v673, 4294901760
    %675 = vmatmul.mubr.f32.gmra.mrb[0].mxu0 %v674
    %v676 = vpop.f32.mrb[0].mxu0
    %v677 = vadd.f32 0.0, %v676
    %v678 = vpop.f32.mrb[0].mxu0
    %679 = vmatprep.mubr.f32.mxu0 0.0
    %v680 = vand.u32 %v496, 4294901760
    %v681 = vsub.f32 %v496, %v680
    %v682 = vand.u32 %v681, 4294901760
    %v683 = vsub.f32 %v681, %v682
    %v684 = vand.u32 %v683, 4294901760
    %685 = vmatmul.mubr.f32.gmra.mrb[0].mxu0 %v684
    %v686 = vpop.f32.mrb[0].mxu0
    %v687 = vadd.f32 0.0, %v686
    %v688 = vpop.f32.mrb[0].mxu0
    %689 = vmatprep.mubr.f32.mxu0 0.0
    %v690 = vand.u32 %v499, 4294901760
    %v691 = vsub.f32 %v499, %v690
    %v692 = vand.u32 %v691, 4294901760
    %v693 = vsub.f32 %v691, %v692
    %v694 = vand.u32 %v693, 4294901760
    %695 = vmatmul.mubr.f32.gmra.mrb[0].mxu0 %v694
    %v696 = vpop.f32.mrb[0].mxu0
    %v697 = vadd.f32 0.0, %v696
    %v698 = vpop.f32.mrb[0].mxu0
    %699 = vmatprep.mubr.f32.mxu0 0.0
    %v700 = vand.u32 %v502, 4294901760
    %v701 = vsub.f32 %v502, %v700
    %v702 = vand.u32 %v701, 4294901760
    %v703 = vsub.f32 %v701, %v702
    %v704 = vand.u32 %v703, 4294901760
    %705 = vmatmul.mubr.f32.gmra.mrb[0].mxu0 %v704
    %v706 = vpop.f32.mrb[0].mxu0
    %v707 = vadd.f32 0.0, %v706
    %v708 = vpop.f32.mrb[0].mxu0
    %709 = vmatprep.mubr.f32.mxu0 0.0
    %v710 = vand.u32 %v505, 4294901760
    %v711 = vsub.f32 %v505, %v710
    %v712 = vand.u32 %v711, 4294901760
    %v713 = vsub.f32 %v711, %v712
    %v714 = vand.u32 %v713, 4294901760
    %715 = vmatmul.mubr.f32.gmra.mrb[0].mxu0 %v714
    %v716 = vpop.f32.mrb[0].mxu0
    %v717 = vadd.f32 0.0, %v716
    %v718 = vpop.f32.mrb[0].mxu0
    %719 = vmatprep.mubr.f32.mxu0 0.0
    %v720 = vand.u32 %v508, 4294901760
    %v721 = vsub.f32 %v508, %v720
    %v722 = vand.u32 %v721, 4294901760
    %v723 = vsub.f32 %v721, %v722
    %v724 = vand.u32 %v723, 4294901760
    %725 = vmatmul.mubr.f32.gmra.mrb[0].mxu0 %v724
    %v726 = vpop.f32.mrb[0].mxu0
    %v727 = vadd.f32 0.0, %v726
    %v728 = vpop.f32.mrb[0].mxu0
    %729 = vmatprep.mubr.f32.mxu0 0.0
    %v730 = vand.u32 %v511, 4294901760
    %v731 = vsub.f32 %v511, %v730
    %v732 = vand.u32 %v731, 4294901760
    %v733 = vsub.f32 %v731, %v732
    %v734 = vand.u32 %v733, 4294901760
    %735 = vmatmul.mubr.f32.gmra.mrb[0].mxu0 %v734
    %v736 = vpop.f32.mrb[0].mxu0
    %v737 = vadd.f32 0.0, %v736
    %v738 = vpop.f32.mrb[0].mxu0
    %739 = vdwg.mxu0
    %740 = vmatprep.subr.mxu0 0.0
    %v741 = vand.u32 %v170, 4294901760
    %v742 = vsub.f32 %v170, %v741
    %v743 = vand.u32 %v742, 4294901760
    %v744 = vsub.f32 %v742, %v743
    %v745 = vand.u32 %v744, 4294901760
    %746 = vmatpush1.msra.mxu0 %v745
    %747 = vmatprep.subr.mxu0 0.0
    %v748 = vand.u32 %v171, 4294901760
    %v749 = vsub.f32 %v171, %v748
    %v750 = vand.u32 %v749, 4294901760
    %v751 = vsub.f32 %v749, %v750
    %v752 = vand.u32 %v751, 4294901760
    %753 = vmatpush1.msra.mxu0 %v752
    %754 = vmatprep.subr.mxu0 0.0
    %755 = vmatpush1.msra.mxu0 0.0
    %756 = vmatprep.subr.mxu0 0.0
    %757 = vmatpush1.msra.mxu0 0.0
    %758 = vmatprep.subr.mxu0 0.0
    %759 = vmatpush1.msra.mxu0 0.0
    %760 = vmatprep.subr.mxu0 0.0
    %761 = vmatpush1.msra.mxu0 0.0
    %762 = vmatprep.subr.mxu0 0.0
    %763 = vmatpush1.msra.mxu0 0.0
    %764 = vmatprep.subr.mxu0 0.0
    %765 = vmatpush1.msra.mxu0 0.0
    %766 = vmatprep.subr.mxu0 0.0
    %767 = vmatpush1.msra.mxu0 0.0
    %768 = vmatprep.subr.mxu0 0.0
    %769 = vmatpush1.msra.mxu0 0.0
    %770 = vmatprep.subr.mxu0 0.0
    %771 = vmatpush1.msra.mxu0 0.0
    %772 = vmatprep.subr.mxu0 0.0
    %773 = vmatpush1.msra.mxu0 0.0
    %774 = vmatprep.subr.mxu0 0.0
    %775 = vmatpush1.msra.mxu0 0.0
    %776 = vmatprep.subr.mxu0 0.0
    %777 = vmatpush1.msra.mxu0 0.0
    %778 = vmatprep.subr.mxu0 0.0
    %779 = vmatpush1.msra.mxu0 0.0
    %780 = vmatprep.subr.mxu0 0.0
    %781 = vmatpush1.msra.mxu0 0.0
    %782 = vmatprep.subr.mxu0 0.0
    %783 = vmatpush1.msra.mxu0 0.0
    %784 = vmatprep.subr.mxu0 0.0
    %785 = vmatpush1.msra.mxu0 0.0
    %786 = vmatprep.subr.mxu0 0.0
    %787 = vmatpush1.msra.mxu0 0.0
    %788 = vmatprep.subr.mxu0 0.0
    %789 = vmatpush1.msra.mxu0 0.0
    %790 = vmatprep.subr.mxu0 0.0
    %791 = vmatpush1.msra.mxu0 0.0
    %792 = vmatprep.subr.mxu0 0.0
    %793 = vmatpush1.msra.mxu0 0.0
    %794 = vmatprep.subr.mxu0 0.0
    %795 = vmatpush1.msra.mxu0 0.0
    %796 = vmatprep.subr.mxu0 0.0
    %797 = vmatpush1.msra.mxu0 0.0
    %798 = vmatprep.subr.mxu0 0.0
    %799 = vmatpush1.msra.mxu0 0.0
    %800 = vmatprep.subr.mxu0 0.0
    %801 = vmatpush1.msra.mxu0 0.0
    %802 = vmatprep.subr.mxu0 0.0
    %803 = vmatpush1.msra.mxu0 0.0
    %804 = vmatprep.subr.mxu0 0.0
    %805 = vmatpush1.msra.mxu0 0.0
    %806 = vmatprep.subr.mxu0 0.0
    %807 = vmatpush1.msra.mxu0 0.0
    %808 = vmatprep.subr.mxu0 0.0
    %809 = vmatpush1.msra.mxu0 0.0
    %810 = vmatprep.subr.mxu0 0.0
    %811 = vmatpush1.msra.mxu0 0.0
    %812 = vmatprep.subr.mxu0 0.0
    %813 = vmatpush1.msra.mxu0 0.0
    %814 = vmatprep.mubr.f32.mxu0 0.0
    %v815 = vand.u32 %v466, 4294901760
    %816 = vmatmul.mubr.f32.gmra.mrb[0].mxu0 %v815
    %v817 = vpop.f32.mrb[0].mxu0
    %v818 = vadd.f32 %v587, %v817
    %v819 = vpop.f32.mrb[0].mxu0
    %820 = vmatprep.mubr.f32.mxu0 0.0
    %v821 = vand.u32 %v469, 4294901760
    %822 = vmatmul.mubr.f32.gmra.mrb[0].mxu0 %v821
    %v823 = vpop.f32.mrb[0].mxu0
    %v824 = vadd.f32 %v597, %v823
    %v825 = vpop.f32.mrb[0].mxu0
    %826 = vmatprep.mubr.f32.mxu0 0.0
    %v827 = vand.u32 %v472, 4294901760
    %828 = vmatmul.mubr.f32.gmra.mrb[0].mxu0 %v827
    %v829 = vpop.f32.mrb[0].mxu0
    %v830 = vadd.f32 %v607, %v829
    %v831 = vpop.f32.mrb[0].mxu0
    %832 = vmatprep.mubr.f32.mxu0 0.0
    %v833 = vand.u32 %v475, 4294901760
    %834 = vmatmul.mubr.f32.gmra.mrb[0].mxu0 %v833
    %v835 = vpop.f32.mrb[0].mxu0
    %v836 = vadd.f32 %v617, %v835
    %v837 = vpop.f32.mrb[0].mxu0
    %838 = vmatprep.mubr.f32.mxu0 0.0
    %v839 = vand.u32 %v478, 4294901760
    %840 = vmatmul.mubr.f32.gmra.mrb[0].mxu0 %v839
    %v841 = vpop.f32.mrb[0].mxu0
    %v842 = vadd.f32 %v627, %v841
    %v843 = vpop.f32.mrb[0].mxu0
    %844 = vmatprep.mubr.f32.mxu0 0.0
    %v845 = vand.u32 %v481, 4294901760
    %846 = vmatmul.mubr.f32.gmra.mrb[0].mxu0 %v845
    %v847 = vpop.f32.mrb[0].mxu0
    %v848 = vadd.f32 %v637, %v847
    %v849 = vpop.f32.mrb[0].mxu0
    %850 = vmatprep.mubr.f32.mxu0 0.0
    %v851 = vand.u32 %v484, 4294901760
    %852 = vmatmul.mubr.f32.gmra.mrb[0].mxu0 %v851
    %v853 = vpop.f32.mrb[0].mxu0
    %v854 = vadd.f32 %v647, %v853
    %v855 = vpop.f32.mrb[0].mxu0
    %856 = vmatprep.mubr.f32.mxu0 0.0
    %v857 = vand.u32 %v487, 4294901760
    %858 = vmatmul.mubr.f32.gmra.mrb[0].mxu0 %v857
    %v859 = vpop.f32.mrb[0].mxu0
    %v860 = vadd.f32 %v657, %v859
    %v861 = vpop.f32.mrb[0].mxu0
    %862 = vmatprep.mubr.f32.mxu0 0.0
    %v863 = vand.u32 %v490, 4294901760
    %864 = vmatmul.mubr.f32.gmra.mrb[0].mxu0 %v863
    %v865 = vpop.f32.mrb[0].mxu0
    %v866 = vadd.f32 %v667, %v865
    %v867 = vpop.f32.mrb[0].mxu0
    %868 = vmatprep.mubr.f32.mxu0 0.0
    %v869 = vand.u32 %v493, 4294901760
    %870 = vmatmul.mubr.f32.gmra.mrb[0].mxu0 %v869
    %v871 = vpop.f32.mrb[0].mxu0
    %v872 = vadd.f32 %v677, %v871
    %v873 = vpop.f32.mrb[0].mxu0
    %874 = vmatprep.mubr.f32.mxu0 0.0
    %v875 = vand.u32 %v496, 4294901760
    %876 = vmatmul.mubr.f32.gmra.mrb[0].mxu0 %v875
    %v877 = vpop.f32.mrb[0].mxu0
    %v878 = vadd.f32 %v687, %v877
    %v879 = vpop.f32.mrb[0].mxu0
    %880 = vmatprep.mubr.f32.mxu0 0.0
    %v881 = vand.u32 %v499, 4294901760
    %882 = vmatmul.mubr.f32.gmra.mrb[0].mxu0 %v881
    %v883 = vpop.f32.mrb[0].mxu0
    %v884 = vadd.f32 %v697, %v883
    %v885 = vpop.f32.mrb[0].mxu0
    %886 = vmatprep.mubr.f32.mxu0 0.0
    %v887 = vand.u32 %v502, 4294901760
    %888 = vmatmul.mubr.f32.gmra.mrb[0].mxu0 %v887
    %v889 = vpop.f32.mrb[0].mxu0
    %v890 = vadd.f32 %v707, %v889
    %v891 = vpop.f32.mrb[0].mxu0
    %892 = vmatprep.mubr.f32.mxu0 0.0
    %v893 = vand.u32 %v505, 4294901760
    %894 = vmatmul.mubr.f32.gmra.mrb[0].mxu0 %v893
    %v895 = vpop.f32.mrb[0].mxu0
    %v896 = vadd.f32 %v717, %v895
    %v897 = vpop.f32.mrb[0].mxu0
    %898 = vmatprep.mubr.f32.mxu0 0.0
    %v899 = vand.u32 %v508, 4294901760
    %900 = vmatmul.mubr.f32.gmra.mrb[0].mxu0 %v899
    %v901 = vpop.f32.mrb[0].mxu0
    %v902 = vadd.f32 %v727, %v901
    %v903 = vpop.f32.mrb[0].mxu0
    %904 = vmatprep.mubr.f32.mxu0 0.0
    %v905 = vand.u32 %v511, 4294901760
    %906 = vmatmul.mubr.f32.gmra.mrb[0].mxu0 %v905
    %v907 = vpop.f32.mrb[0].mxu0
    %v908 = vadd.f32 %v737, %v907
    %v909 = vpop.f32.mrb[0].mxu0
    %910 = vdwg.mxu0
    %911 = vmatprep.subr.mxu0 0.0
    %v912 = vand.u32 %v170, 4294901760
    %v913 = vsub.f32 %v170, %v912
    %914 = vmatpush1.msra.mxu0 %v913
    %915 = vmatprep.subr.mxu0 0.0
    %v916 = vand.u32 %v171, 4294901760
    %v917 = vsub.f32 %v171, %v916
    %918 = vmatpush1.msra.mxu0 %v917
    %919 = vmatprep.subr.mxu0 0.0
    %920 = vmatpush1.msra.mxu0 0.0
    %921 = vmatprep.subr.mxu0 0.0
    %922 = vmatpush1.msra.mxu0 0.0
    %923 = vmatprep.subr.mxu0 0.0
    %924 = vmatpush1.msra.mxu0 0.0
    %925 = vmatprep.subr.mxu0 0.0
    %926 = vmatpush1.msra.mxu0 0.0
    %927 = vmatprep.subr.mxu0 0.0
    %928 = vmatpush1.msra.mxu0 0.0
    %929 = vmatprep.subr.mxu0 0.0
    %930 = vmatpush1.msra.mxu0 0.0
    %931 = vmatprep.subr.mxu0 0.0
    %932 = vmatpush1.msra.mxu0 0.0
    %933 = vmatprep.subr.mxu0 0.0
    %934 = vmatpush1.msra.mxu0 0.0
    %935 = vmatprep.subr.mxu0 0.0
    %936 = vmatpush1.msra.mxu0 0.0
    %937 = vmatprep.subr.mxu0 0.0
    %938 = vmatpush1.msra.mxu0 0.0
    %939 = vmatprep.subr.mxu0 0.0
    %940 = vmatpush1.msra.mxu0 0.0
    %941 = vmatprep.subr.mxu0 0.0
    %942 = vmatpush1.msra.mxu0 0.0
    %943 = vmatprep.subr.mxu0 0.0
    %944 = vmatpush1.msra.mxu0 0.0
    %945 = vmatprep.subr.mxu0 0.0
    %946 = vmatpush1.msra.mxu0 0.0
    %947 = vmatprep.subr.mxu0 0.0
    %948 = vmatpush1.msra.mxu0 0.0
    %949 = vmatprep.subr.mxu0 0.0
    %950 = vmatpush1.msra.mxu0 0.0
    %951 = vmatprep.subr.mxu0 0.0
    %952 = vmatpush1.msra.mxu0 0.0
    %953 = vmatprep.subr.mxu0 0.0
    %954 = vmatpush1.msra.mxu0 0.0
    %955 = vmatprep.subr.mxu0 0.0
    %956 = vmatpush1.msra.mxu0 0.0
    %957 = vmatprep.subr.mxu0 0.0
    %958 = vmatpush1.msra.mxu0 0.0
    %959 = vmatprep.subr.mxu0 0.0
    %960 = vmatpush1.msra.mxu0 0.0
    %961 = vmatprep.subr.mxu0 0.0
    %962 = vmatpush1.msra.mxu0 0.0
    %963 = vmatprep.subr.mxu0 0.0
    %964 = vmatpush1.msra.mxu0 0.0
    %965 = vmatprep.subr.mxu0 0.0
    %966 = vmatpush1.msra.mxu0 0.0
    %967 = vmatprep.subr.mxu0 0.0
    %968 = vmatpush1.msra.mxu0 0.0
    %969 = vmatprep.subr.mxu0 0.0
    %970 = vmatpush1.msra.mxu0 0.0
    %971 = vmatprep.subr.mxu0 0.0
    %972 = vmatpush1.msra.mxu0 0.0
    %973 = vmatprep.subr.mxu0 0.0
    %974 = vmatpush1.msra.mxu0 0.0
    %975 = vmatprep.subr.mxu0 0.0
    %976 = vmatpush1.msra.mxu0 0.0
    %977 = vmatprep.subr.mxu0 0.0
    %978 = vmatpush1.msra.mxu0 0.0
    %979 = vmatprep.mubr.f32.mxu0 0.0
    %v980 = vand.u32 %v466, 4294901760
    %v981 = vsub.f32 %v466, %v980
    %982 = vmatmul.mubr.f32.gmra.mrb[0].mxu0 %v981
    %v983 = vpop.f32.mrb[0].mxu0
    %v984 = vadd.f32 %v818, %v983
    %v985 = vpop.f32.mrb[0].mxu0
    %986 = vmatprep.mubr.f32.mxu0 0.0
    %v987 = vand.u32 %v469, 4294901760
    %v988 = vsub.f32 %v469, %v987
    %989 = vmatmul.mubr.f32.gmra.mrb[0].mxu0 %v988
    %v990 = vpop.f32.mrb[0].mxu0
    %v991 = vadd.f32 %v824, %v990
    %v992 = vpop.f32.mrb[0].mxu0
    %993 = vmatprep.mubr.f32.mxu0 0.0
    %v994 = vand.u32 %v472, 4294901760
    %v995 = vsub.f32 %v472, %v994
    %996 = vmatmul.mubr.f32.gmra.mrb[0].mxu0 %v995
    %v997 = vpop.f32.mrb[0].mxu0
    %v998 = vadd.f32 %v830, %v997
    %v999 = vpop.f32.mrb[0].mxu0
    %1000 = vmatprep.mubr.f32.mxu0 0.0
    %v1001 = vand.u32 %v475, 4294901760
    %v1002 = vsub.f32 %v475, %v1001
    %1003 = vmatmul.mubr.f32.gmra.mrb[0].mxu0 %v1002
    %v1004 = vpop.f32.mrb[0].mxu0
    %v1005 = vadd.f32 %v836, %v1004
    %v1006 = vpop.f32.mrb[0].mxu0
    %1007 = vmatprep.mubr.f32.mxu0 0.0
    %v1008 = vand.u32 %v478, 4294901760
    %v1009 = vsub.f32 %v478, %v1008
    %1010 = vmatmul.mubr.f32.gmra.mrb[0].mxu0 %v1009
    %v1011 = vpop.f32.mrb[0].mxu0
    %v1012 = vadd.f32 %v842, %v1011
    %v1013 = vpop.f32.mrb[0].mxu0
    %1014 = vmatprep.mubr.f32.mxu0 0.0
    %v1015 = vand.u32 %v481, 4294901760
    %v1016 = vsub.f32 %v481, %v1015
    %1017 = vmatmul.mubr.f32.gmra.mrb[0].mxu0 %v1016
    %v1018 = vpop.f32.mrb[0].mxu0
    %v1019 = vadd.f32 %v848, %v1018
    %v1020 = vpop.f32.mrb[0].mxu0
    %1021 = vmatprep.mubr.f32.mxu0 0.0
    %v1022 = vand.u32 %v484, 4294901760
    %v1023 = vsub.f32 %v484, %v1022
    %1024 = vmatmul.mubr.f32.gmra.mrb[0].mxu0 %v1023
    %v1025 = vpop.f32.mrb[0].mxu0
    %v1026 = vadd.f32 %v854, %v1025
    %v1027 = vpop.f32.mrb[0].mxu0
    %1028 = vmatprep.mubr.f32.mxu0 0.0
    %v1029 = vand.u32 %v487, 4294901760
    %v1030 = vsub.f32 %v487, %v1029
    %1031 = vmatmul.mubr.f32.gmra.mrb[0].mxu0 %v1030
    %v1032 = vpop.f32.mrb[0].mxu0
    %v1033 = vadd.f32 %v860, %v1032
    %v1034 = vpop.f32.mrb[0].mxu0
    %1035 = vmatprep.mubr.f32.mxu0 0.0
    %v1036 = vand.u32 %v490, 4294901760
    %v1037 = vsub.f32 %v490, %v1036
    %1038 = vmatmul.mubr.f32.gmra.mrb[0].mxu0 %v1037
    %v1039 = vpop.f32.mrb[0].mxu0
    %v1040 = vadd.f32 %v866, %v1039
    %v1041 = vpop.f32.mrb[0].mxu0
    %1042 = vmatprep.mubr.f32.mxu0 0.0
    %v1043 = vand.u32 %v493, 4294901760
    %v1044 = vsub.f32 %v493, %v1043
    %1045 = vmatmul.mubr.f32.gmra.mrb[0].mxu0 %v1044
    %v1046 = vpop.f32.mrb[0].mxu0
    %v1047 = vadd.f32 %v872, %v1046
    %v1048 = vpop.f32.mrb[0].mxu0
    %1049 = vmatprep.mubr.f32.mxu0 0.0
    %v1050 = vand.u32 %v496, 4294901760
    %v1051 = vsub.f32 %v496, %v1050
    %1052 = vmatmul.mubr.f32.gmra.mrb[0].mxu0 %v1051
    %v1053 = vpop.f32.mrb[0].mxu0
    %v1054 = vadd.f32 %v878, %v1053
    %v1055 = vpop.f32.mrb[0].mxu0
    %1056 = vmatprep.mubr.f32.mxu0 0.0
    %v1057 = vand.u32 %v499, 4294901760
    %v1058 = vsub.f32 %v499, %v1057
    %1059 = vmatmul.mubr.f32.gmra.mrb[0].mxu0 %v1058
    %v1060 = vpop.f32.mrb[0].mxu0
    %v1061 = vadd.f32 %v884, %v1060
    %v1062 = vpop.f32.mrb[0].mxu0
    %1063 = vmatprep.mubr.f32.mxu0 0.0
    %v1064 = vand.u32 %v502, 4294901760
    %v1065 = vsub.f32 %v502, %v1064
    %1066 = vmatmul.mubr.f32.gmra.mrb[0].mxu0 %v1065
    %v1067 = vpop.f32.mrb[0].mxu0
    %v1068 = vadd.f32 %v890, %v1067
    %v1069 = vpop.f32.mrb[0].mxu0
    %1070 = vmatprep.mubr.f32.mxu0 0.0
    %v1071 = vand.u32 %v505, 4294901760
    %v1072 = vsub.f32 %v505, %v1071
    %1073 = vmatmul.mubr.f32.gmra.mrb[0].mxu0 %v1072
    %v1074 = vpop.f32.mrb[0].mxu0
    %v1075 = vadd.f32 %v896, %v1074
    %v1076 = vpop.f32.mrb[0].mxu0
    %1077 = vmatprep.mubr.f32.mxu0 0.0
    %v1078 = vand.u32 %v508, 4294901760
    %v1079 = vsub.f32 %v508, %v1078
    %1080 = vmatmul.mubr.f32.gmra.mrb[0].mxu0 %v1079
    %v1081 = vpop.f32.mrb[0].mxu0
    %v1082 = vadd.f32 %v902, %v1081
    %v1083 = vpop.f32.mrb[0].mxu0
    %1084 = vmatprep.mubr.f32.mxu0 0.0
    %v1085 = vand.u32 %v511, 4294901760
    %v1086 = vsub.f32 %v511, %v1085
    %1087 = vmatmul.mubr.f32.gmra.mrb[0].mxu0 %v1086
    %v1088 = vpop.f32.mrb[0].mxu0
    %v1089 = vadd.f32 %v908, %v1088
    %v1090 = vpop.f32.mrb[0].mxu0
    %1091 = vdwg.mxu0
    %1092 = vmatprep.subr.mxu0 0.0
    %v1093 = vand.u32 %v170, 4294901760
    %1094 = vmatpush1.msra.mxu0 %v1093
    %1095 = vmatprep.subr.mxu0 0.0
    %v1096 = vand.u32 %v171, 4294901760
    %1097 = vmatpush1.msra.mxu0 %v1096
    %1098 = vmatprep.subr.mxu0 0.0
    %1099 = vmatpush1.msra.mxu0 0.0
    %1100 = vmatprep.subr.mxu0 0.0
    %1101 = vmatpush1.msra.mxu0 0.0
    %1102 = vmatprep.subr.mxu0 0.0
    %1103 = vmatpush1.msra.mxu0 0.0
    %1104 = vmatprep.subr.mxu0 0.0
    %1105 = vmatpush1.msra.mxu0 0.0
    %1106 = vmatprep.subr.mxu0 0.0
    %1107 = vmatpush1.msra.mxu0 0.0
    %1108 = vmatprep.subr.mxu0 0.0
    %1109 = vmatpush1.msra.mxu0 0.0
    %1110 = vmatprep.subr.mxu0 0.0
    %1111 = vmatpush1.msra.mxu0 0.0
    %1112 = vmatprep.subr.mxu0 0.0
    %1113 = vmatpush1.msra.mxu0 0.0
    %1114 = vmatprep.subr.mxu0 0.0
    %1115 = vmatpush1.msra.mxu0 0.0
    %1116 = vmatprep.subr.mxu0 0.0
    %1117 = vmatpush1.msra.mxu0 0.0
    %1118 = vmatprep.subr.mxu0 0.0
    %1119 = vmatpush1.msra.mxu0 0.0
    %1120 = vmatprep.subr.mxu0 0.0
    %1121 = vmatpush1.msra.mxu0 0.0
    %1122 = vmatprep.subr.mxu0 0.0
    %1123 = vmatpush1.msra.mxu0 0.0
    %1124 = vmatprep.subr.mxu0 0.0
    %1125 = vmatpush1.msra.mxu0 0.0
    %1126 = vmatprep.subr.mxu0 0.0
    %1127 = vmatpush1.msra.mxu0 0.0
    %1128 = vmatprep.subr.mxu0 0.0
    %1129 = vmatpush1.msra.mxu0 0.0
    %1130 = vmatprep.subr.mxu0 0.0
    %1131 = vmatpush1.msra.mxu0 0.0
    %1132 = vmatprep.subr.mxu0 0.0
    %1133 = vmatpush1.msra.mxu0 0.0
    %1134 = vmatprep.subr.mxu0 0.0
    %1135 = vmatpush1.msra.mxu0 0.0
    %1136 = vmatprep.subr.mxu0 0.0
    %1137 = vmatpush1.msra.mxu0 0.0
    %1138 = vmatprep.subr.mxu0 0.0
    %1139 = vmatpush1.msra.mxu0 0.0
    %1140 = vmatprep.subr.mxu0 0.0
    %1141 = vmatpush1.msra.mxu0 0.0
    %1142 = vmatprep.subr.mxu0 0.0
    %1143 = vmatpush1.msra.mxu0 0.0
    %1144 = vmatprep.subr.mxu0 0.0
    %1145 = vmatpush1.msra.mxu0 0.0
    %1146 = vmatprep.subr.mxu0 0.0
    %1147 = vmatpush1.msra.mxu0 0.0
    %1148 = vmatprep.subr.mxu0 0.0
    %1149 = vmatpush1.msra.mxu0 0.0
    %1150 = vmatprep.subr.mxu0 0.0
    %1151 = vmatpush1.msra.mxu0 0.0
    %1152 = vmatprep.subr.mxu0 0.0
    %1153 = vmatpush1.msra.mxu0 0.0
    %1154 = vmatprep.subr.mxu0 0.0
    %1155 = vmatpush1.msra.mxu0 0.0
    %1156 = vmatprep.subr.mxu0 0.0
    %1157 = vmatpush1.msra.mxu0 0.0
    %1158 = vmatprep.mubr.f32.mxu0 0.0
    %v1159 = vand.u32 %v466, 4294901760
    %v1160 = vsub.f32 %v466, %v1159
    %v1161 = vand.u32 %v1160, 4294901760
    %1162 = vmatmul.mubr.f32.gmra.mrb[0].mxu0 %v1161
    %v1163 = vpop.f32.mrb[0].mxu0
    %v1164 = vadd.f32 %v984, %v1163
    %v1165 = vpop.f32.mrb[0].mxu0
    %1166 = vmatprep.mubr.f32.mxu0 0.0
    %v1167 = vand.u32 %v469, 4294901760
    %v1168 = vsub.f32 %v469, %v1167
    %v1169 = vand.u32 %v1168, 4294901760
    %1170 = vmatmul.mubr.f32.gmra.mrb[0].mxu0 %v1169
    %v1171 = vpop.f32.mrb[0].mxu0
    %v1172 = vadd.f32 %v991, %v1171
    %v1173 = vpop.f32.mrb[0].mxu0
    %1174 = vmatprep.mubr.f32.mxu0 0.0
    %v1175 = vand.u32 %v472, 4294901760
    %v1176 = vsub.f32 %v472, %v1175
    %v1177 = vand.u32 %v1176, 4294901760
    %1178 = vmatmul.mubr.f32.gmra.mrb[0].mxu0 %v1177
    %v1179 = vpop.f32.mrb[0].mxu0
    %v1180 = vadd.f32 %v998, %v1179
    %v1181 = vpop.f32.mrb[0].mxu0
    %1182 = vmatprep.mubr.f32.mxu0 0.0
    %v1183 = vand.u32 %v475, 4294901760
    %v1184 = vsub.f32 %v475, %v1183
    %v1185 = vand.u32 %v1184, 4294901760
    %1186 = vmatmul.mubr.f32.gmra.mrb[0].mxu0 %v1185
    %v1187 = vpop.f32.mrb[0].mxu0
    %v1188 = vadd.f32 %v1005, %v1187
    %v1189 = vpop.f32.mrb[0].mxu0
    %1190 = vmatprep.mubr.f32.mxu0 0.0
    %v1191 = vand.u32 %v478, 4294901760
    %v1192 = vsub.f32 %v478, %v1191
    %v1193 = vand.u32 %v1192, 4294901760
    %1194 = vmatmul.mubr.f32.gmra.mrb[0].mxu0 %v1193
    %v1195 = vpop.f32.mrb[0].mxu0
    %v1196 = vadd.f32 %v1012, %v1195
    %v1197 = vpop.f32.mrb[0].mxu0
    %1198 = vmatprep.mubr.f32.mxu0 0.0
    %v1199 = vand.u32 %v481, 4294901760
    %v1200 = vsub.f32 %v481, %v1199
    %v1201 = vand.u32 %v1200, 4294901760
    %1202 = vmatmul.mubr.f32.gmra.mrb[0].mxu0 %v1201
    %v1203 = vpop.f32.mrb[0].mxu0
    %v1204 = vadd.f32 %v1019, %v1203
    %v1205 = vpop.f32.mrb[0].mxu0
    %1206 = vmatprep.mubr.f32.mxu0 0.0
    %v1207 = vand.u32 %v484, 4294901760
    %v1208 = vsub.f32 %v484, %v1207
    %v1209 = vand.u32 %v1208, 4294901760
    %1210 = vmatmul.mubr.f32.gmra.mrb[0].mxu0 %v1209
    %v1211 = vpop.f32.mrb[0].mxu0
    %v1212 = vadd.f32 %v1026, %v1211
    %v1213 = vpop.f32.mrb[0].mxu0
    %1214 = vmatprep.mubr.f32.mxu0 0.0
    %v1215 = vand.u32 %v487, 4294901760
    %v1216 = vsub.f32 %v487, %v1215
    %v1217 = vand.u32 %v1216, 4294901760
    %1218 = vmatmul.mubr.f32.gmra.mrb[0].mxu0 %v1217
    %v1219 = vpop.f32.mrb[0].mxu0
    %v1220 = vadd.f32 %v1033, %v1219
    %v1221 = vpop.f32.mrb[0].mxu0
    %1222 = vmatprep.mubr.f32.mxu0 0.0
    %v1223 = vand.u32 %v490, 4294901760
    %v1224 = vsub.f32 %v490, %v1223
    %v1225 = vand.u32 %v1224, 4294901760
    %1226 = vmatmul.mubr.f32.gmra.mrb[0].mxu0 %v1225
    %v1227 = vpop.f32.mrb[0].mxu0
    %v1228 = vadd.f32 %v1040, %v1227
    %v1229 = vpop.f32.mrb[0].mxu0
    %1230 = vmatprep.mubr.f32.mxu0 0.0
    %v1231 = vand.u32 %v493, 4294901760
    %v1232 = vsub.f32 %v493, %v1231
    %v1233 = vand.u32 %v1232, 4294901760
    %1234 = vmatmul.mubr.f32.gmra.mrb[0].mxu0 %v1233
    %v1235 = vpop.f32.mrb[0].mxu0
    %v1236 = vadd.f32 %v1047, %v1235
    %v1237 = vpop.f32.mrb[0].mxu0
    %1238 = vmatprep.mubr.f32.mxu0 0.0
    %v1239 = vand.u32 %v496, 4294901760
    %v1240 = vsub.f32 %v496, %v1239
    %v1241 = vand.u32 %v1240, 4294901760
    %1242 = vmatmul.mubr.f32.gmra.mrb[0].mxu0 %v1241
    %v1243 = vpop.f32.mrb[0].mxu0
    %v1244 = vadd.f32 %v1054, %v1243
    %v1245 = vpop.f32.mrb[0].mxu0
    %1246 = vmatprep.mubr.f32.mxu0 0.0
    %v1247 = vand.u32 %v499, 4294901760
    %v1248 = vsub.f32 %v499, %v1247
    %v1249 = vand.u32 %v1248, 4294901760
    %1250 = vmatmul.mubr.f32.gmra.mrb[0].mxu0 %v1249
    %v1251 = vpop.f32.mrb[0].mxu0
    %v1252 = vadd.f32 %v1061, %v1251
    %v1253 = vpop.f32.mrb[0].mxu0
    %1254 = vmatprep.mubr.f32.mxu0 0.0
    %v1255 = vand.u32 %v502, 4294901760
    %v1256 = vsub.f32 %v502, %v1255
    %v1257 = vand.u32 %v1256, 4294901760
    %1258 = vmatmul.mubr.f32.gmra.mrb[0].mxu0 %v1257
    %v1259 = vpop.f32.mrb[0].mxu0
    %v1260 = vadd.f32 %v1068, %v1259
    %v1261 = vpop.f32.mrb[0].mxu0
    %1262 = vmatprep.mubr.f32.mxu0 0.0
    %v1263 = vand.u32 %v505, 4294901760
    %v1264 = vsub.f32 %v505, %v1263
    %v1265 = vand.u32 %v1264, 4294901760
    %1266 = vmatmul.mubr.f32.gmra.mrb[0].mxu0 %v1265
    %v1267 = vpop.f32.mrb[0].mxu0
    %v1268 = vadd.f32 %v1075, %v1267
    %v1269 = vpop.f32.mrb[0].mxu0
    %1270 = vmatprep.mubr.f32.mxu0 0.0
    %v1271 = vand.u32 %v508, 4294901760
    %v1272 = vsub.f32 %v508, %v1271
    %v1273 = vand.u32 %v1272, 4294901760
    %1274 = vmatmul.mubr.f32.gmra.mrb[0].mxu0 %v1273
    %v1275 = vpop.f32.mrb[0].mxu0
    %v1276 = vadd.f32 %v1082, %v1275
    %v1277 = vpop.f32.mrb[0].mxu0
    %1278 = vmatprep.mubr.f32.mxu0 0.0
    %v1279 = vand.u32 %v511, 4294901760
    %v1280 = vsub.f32 %v511, %v1279
    %v1281 = vand.u32 %v1280, 4294901760
    %1282 = vmatmul.mubr.f32.gmra.mrb[0].mxu0 %v1281
    %v1283 = vpop.f32.mrb[0].mxu0
    %v1284 = vadd.f32 %v1089, %v1283
    %v1285 = vpop.f32.mrb[0].mxu0
    %1286 = vdwg.mxu0
    %1287 = vmatprep.subr.mxu0 0.0
    %v1288 = vand.u32 %v170, 4294901760
    %v1289 = vsub.f32 %v170, %v1288
    %v1290 = vand.u32 %v1289, 4294901760
    %1291 = vmatpush1.msra.mxu0 %v1290
    %1292 = vmatprep.subr.mxu0 0.0
    %v1293 = vand.u32 %v171, 4294901760
    %v1294 = vsub.f32 %v171, %v1293
    %v1295 = vand.u32 %v1294, 4294901760
    %1296 = vmatpush1.msra.mxu0 %v1295
    %1297 = vmatprep.subr.mxu0 0.0
    %1298 = vmatpush1.msra.mxu0 0.0
    %1299 = vmatprep.subr.mxu0 0.0
    %1300 = vmatpush1.msra.mxu0 0.0
    %1301 = vmatprep.subr.mxu0 0.0
    %1302 = vmatpush1.msra.mxu0 0.0
    %1303 = vmatprep.subr.mxu0 0.0
    %1304 = vmatpush1.msra.mxu0 0.0
    %1305 = vmatprep.subr.mxu0 0.0
    %1306 = vmatpush1.msra.mxu0 0.0
    %1307 = vmatprep.subr.mxu0 0.0
    %1308 = vmatpush1.msra.mxu0 0.0
    %1309 = vmatprep.subr.mxu0 0.0
    %1310 = vmatpush1.msra.mxu0 0.0
    %1311 = vmatprep.subr.mxu0 0.0
    %1312 = vmatpush1.msra.mxu0 0.0
    %1313 = vmatprep.subr.mxu0 0.0
    %1314 = vmatpush1.msra.mxu0 0.0
    %1315 = vmatprep.subr.mxu0 0.0
    %1316 = vmatpush1.msra.mxu0 0.0
    %1317 = vmatprep.subr.mxu0 0.0
    %1318 = vmatpush1.msra.mxu0 0.0
    %1319 = vmatprep.subr.mxu0 0.0
    %1320 = vmatpush1.msra.mxu0 0.0
    %1321 = vmatprep.subr.mxu0 0.0
    %1322 = vmatpush1.msra.mxu0 0.0
    %1323 = vmatprep.subr.mxu0 0.0
    %1324 = vmatpush1.msra.mxu0 0.0
    %1325 = vmatprep.subr.mxu0 0.0
    %1326 = vmatpush1.msra.mxu0 0.0
    %1327 = vmatprep.subr.mxu0 0.0
    %1328 = vmatpush1.msra.mxu0 0.0
    %1329 = vmatprep.subr.mxu0 0.0
    %1330 = vmatpush1.msra.mxu0 0.0
    %1331 = vmatprep.subr.mxu0 0.0
    %1332 = vmatpush1.msra.mxu0 0.0
    %1333 = vmatprep.subr.mxu0 0.0
    %1334 = vmatpush1.msra.mxu0 0.0
    %1335 = vmatprep.subr.mxu0 0.0
    %1336 = vmatpush1.msra.mxu0 0.0
    %1337 = vmatprep.subr.mxu0 0.0
    %1338 = vmatpush1.msra.mxu0 0.0
    %1339 = vmatprep.subr.mxu0 0.0
    %1340 = vmatpush1.msra.mxu0 0.0
    %1341 = vmatprep.subr.mxu0 0.0
    %1342 = vmatpush1.msra.mxu0 0.0
    %1343 = vmatprep.subr.mxu0 0.0
    %1344 = vmatpush1.msra.mxu0 0.0
    %1345 = vmatprep.subr.mxu0 0.0
    %1346 = vmatpush1.msra.mxu0 0.0
    %1347 = vmatprep.subr.mxu0 0.0
    %1348 = vmatpush1.msra.mxu0 0.0
    %1349 = vmatprep.subr.mxu0 0.0
    %1350 = vmatpush1.msra.mxu0 0.0
    %1351 = vmatprep.subr.mxu0 0.0
    %1352 = vmatpush1.msra.mxu0 0.0
    %1353 = vmatprep.subr.mxu0 0.0
    %1354 = vmatpush1.msra.mxu0 0.0
    %1355 = vmatprep.subr.mxu0 0.0
    %1356 = vmatpush1.msra.mxu0 0.0
    %1357 = vmatprep.mubr.f32.mxu0 0.0
    %v1358 = vand.u32 %v466, 4294901760
    %1359 = vmatmul.mubr.f32.gmra.mrb[0].mxu0 %v1358
    %v1360 = vpop.f32.mrb[0].mxu0
    %v1361 = vadd.f32 %v1164, %v1360
    %v1362 = vpop.f32.mrb[0].mxu0
    %1363 = vmatprep.mubr.f32.mxu0 0.0
    %v1364 = vand.u32 %v469, 4294901760
    %1365 = vmatmul.mubr.f32.gmra.mrb[0].mxu0 %v1364
    %v1366 = vpop.f32.mrb[0].mxu0
    %v1367 = vadd.f32 %v1172, %v1366
    %v1368 = vpop.f32.mrb[0].mxu0
    %1369 = vmatprep.mubr.f32.mxu0 0.0
    %v1370 = vand.u32 %v472, 4294901760
    %1371 = vmatmul.mubr.f32.gmra.mrb[0].mxu0 %v1370
    %v1372 = vpop.f32.mrb[0].mxu0
    %v1373 = vadd.f32 %v1180, %v1372
    %v1374 = vpop.f32.mrb[0].mxu0
    %1375 = vmatprep.mubr.f32.mxu0 0.0
    %v1376 = vand.u32 %v475, 4294901760
    %1377 = vmatmul.mubr.f32.gmra.mrb[0].mxu0 %v1376
    %v1378 = vpop.f32.mrb[0].mxu0
    %v1379 = vadd.f32 %v1188, %v1378
    %v1380 = vpop.f32.mrb[0].mxu0
    %1381 = vmatprep.mubr.f32.mxu0 0.0
    %v1382 = vand.u32 %v478, 4294901760
    %1383 = vmatmul.mubr.f32.gmra.mrb[0].mxu0 %v1382
    %v1384 = vpop.f32.mrb[0].mxu0
    %v1385 = vadd.f32 %v1196, %v1384
    %v1386 = vpop.f32.mrb[0].mxu0
    %1387 = vmatprep.mubr.f32.mxu0 0.0
    %v1388 = vand.u32 %v481, 4294901760
    %1389 = vmatmul.mubr.f32.gmra.mrb[0].mxu0 %v1388
    %v1390 = vpop.f32.mrb[0].mxu0
    %v1391 = vadd.f32 %v1204, %v1390
    %v1392 = vpop.f32.mrb[0].mxu0
    %1393 = vmatprep.mubr.f32.mxu0 0.0
    %v1394 = vand.u32 %v484, 4294901760
    %1395 = vmatmul.mubr.f32.gmra.mrb[0].mxu0 %v1394
    %v1396 = vpop.f32.mrb[0].mxu0
    %v1397 = vadd.f32 %v1212, %v1396
    %v1398 = vpop.f32.mrb[0].mxu0
    %1399 = vmatprep.mubr.f32.mxu0 0.0
    %v1400 = vand.u32 %v487, 4294901760
    %1401 = vmatmul.mubr.f32.gmra.mrb[0].mxu0 %v1400
    %v1402 = vpop.f32.mrb[0].mxu0
    %v1403 = vadd.f32 %v1220, %v1402
    %v1404 = vpop.f32.mrb[0].mxu0
    %1405 = vmatprep.mubr.f32.mxu0 0.0
    %v1406 = vand.u32 %v490, 4294901760
    %1407 = vmatmul.mubr.f32.gmra.mrb[0].mxu0 %v1406
    %v1408 = vpop.f32.mrb[0].mxu0
    %v1409 = vadd.f32 %v1228, %v1408
    %v1410 = vpop.f32.mrb[0].mxu0
    %1411 = vmatprep.mubr.f32.mxu0 0.0
    %v1412 = vand.u32 %v493, 4294901760
    %1413 = vmatmul.mubr.f32.gmra.mrb[0].mxu0 %v1412
    %v1414 = vpop.f32.mrb[0].mxu0
    %v1415 = vadd.f32 %v1236, %v1414
    %v1416 = vpop.f32.mrb[0].mxu0
    %1417 = vmatprep.mubr.f32.mxu0 0.0
    %v1418 = vand.u32 %v496, 4294901760
    %1419 = vmatmul.mubr.f32.gmra.mrb[0].mxu0 %v1418
    %v1420 = vpop.f32.mrb[0].mxu0
    %v1421 = vadd.f32 %v1244, %v1420
    %v1422 = vpop.f32.mrb[0].mxu0
    %1423 = vmatprep.mubr.f32.mxu0 0.0
    %v1424 = vand.u32 %v499, 4294901760
    %1425 = vmatmul.mubr.f32.gmra.mrb[0].mxu0 %v1424
    %v1426 = vpop.f32.mrb[0].mxu0
    %v1427 = vadd.f32 %v1252, %v1426
    %v1428 = vpop.f32.mrb[0].mxu0
    %1429 = vmatprep.mubr.f32.mxu0 0.0
    %v1430 = vand.u32 %v502, 4294901760
    %1431 = vmatmul.mubr.f32.gmra.mrb[0].mxu0 %v1430
    %v1432 = vpop.f32.mrb[0].mxu0
    %v1433 = vadd.f32 %v1260, %v1432
    %v1434 = vpop.f32.mrb[0].mxu0
    %1435 = vmatprep.mubr.f32.mxu0 0.0
    %v1436 = vand.u32 %v505, 4294901760
    %1437 = vmatmul.mubr.f32.gmra.mrb[0].mxu0 %v1436
    %v1438 = vpop.f32.mrb[0].mxu0
    %v1439 = vadd.f32 %v1268, %v1438
    %v1440 = vpop.f32.mrb[0].mxu0
    %1441 = vmatprep.mubr.f32.mxu0 0.0
    %v1442 = vand.u32 %v508, 4294901760
    %1443 = vmatmul.mubr.f32.gmra.mrb[0].mxu0 %v1442
    %v1444 = vpop.f32.mrb[0].mxu0
    %v1445 = vadd.f32 %v1276, %v1444
    %v1446 = vpop.f32.mrb[0].mxu0
    %1447 = vmatprep.mubr.f32.mxu0 0.0
    %v1448 = vand.u32 %v511, 4294901760
    %1449 = vmatmul.mubr.f32.gmra.mrb[0].mxu0 %v1448
    %v1450 = vpop.f32.mrb[0].mxu0
    %v1451 = vadd.f32 %v1284, %v1450
    %v1452 = vpop.f32.mrb[0].mxu0
    %1453 = vdwg.mxu0
    %1454 = vmatprep.subr.mxu0 0.0
    %v1455 = vand.u32 %v170, 4294901760
    %1456 = vmatpush1.msra.mxu0 %v1455
    %1457 = vmatprep.subr.mxu0 0.0
    %v1458 = vand.u32 %v171, 4294901760
    %1459 = vmatpush1.msra.mxu0 %v1458
    %1460 = vmatprep.subr.mxu0 0.0
    %1461 = vmatpush1.msra.mxu0 0.0
    %1462 = vmatprep.subr.mxu0 0.0
    %1463 = vmatpush1.msra.mxu0 0.0
    %1464 = vmatprep.subr.mxu0 0.0
    %1465 = vmatpush1.msra.mxu0 0.0
    %1466 = vmatprep.subr.mxu0 0.0
    %1467 = vmatpush1.msra.mxu0 0.0
    %1468 = vmatprep.subr.mxu0 0.0
    %1469 = vmatpush1.msra.mxu0 0.0
    %1470 = vmatprep.subr.mxu0 0.0
    %1471 = vmatpush1.msra.mxu0 0.0
    %1472 = vmatprep.subr.mxu0 0.0
    %1473 = vmatpush1.msra.mxu0 0.0
    %1474 = vmatprep.subr.mxu0 0.0
    %1475 = vmatpush1.msra.mxu0 0.0
    %1476 = vmatprep.subr.mxu0 0.0
    %1477 = vmatpush1.msra.mxu0 0.0
    %1478 = vmatprep.subr.mxu0 0.0
    %1479 = vmatpush1.msra.mxu0 0.0
    %1480 = vmatprep.subr.mxu0 0.0
    %1481 = vmatpush1.msra.mxu0 0.0
    %1482 = vmatprep.subr.mxu0 0.0
    %1483 = vmatpush1.msra.mxu0 0.0
    %1484 = vmatprep.subr.mxu0 0.0
    %1485 = vmatpush1.msra.mxu0 0.0
    %1486 = vmatprep.subr.mxu0 0.0
    %1487 = vmatpush1.msra.mxu0 0.0
    %1488 = vmatprep.subr.mxu0 0.0
    %1489 = vmatpush1.msra.mxu0 0.0
    %1490 = vmatprep.subr.mxu0 0.0
    %1491 = vmatpush1.msra.mxu0 0.0
    %1492 = vmatprep.subr.mxu0 0.0
    %1493 = vmatpush1.msra.mxu0 0.0
    %1494 = vmatprep.subr.mxu0 0.0
    %1495 = vmatpush1.msra.mxu0 0.0
    %1496 = vmatprep.subr.mxu0 0.0
    %1497 = vmatpush1.msra.mxu0 0.0
    %1498 = vmatprep.subr.mxu0 0.0
    %1499 = vmatpush1.msra.mxu0 0.0
    %1500 = vmatprep.subr.mxu0 0.0
    %1501 = vmatpush1.msra.mxu0 0.0
    %1502 = vmatprep.subr.mxu0 0.0
    %1503 = vmatpush1.msra.mxu0 0.0
    %1504 = vmatprep.subr.mxu0 0.0
    %1505 = vmatpush1.msra.mxu0 0.0
    %1506 = vmatprep.subr.mxu0 0.0
    %1507 = vmatpush1.msra.mxu0 0.0
    %1508 = vmatprep.subr.mxu0 0.0
    %1509 = vmatpush1.msra.mxu0 0.0
    %1510 = vmatprep.subr.mxu0 0.0
    %1511 = vmatpush1.msra.mxu0 0.0
    %1512 = vmatprep.subr.mxu0 0.0
    %1513 = vmatpush1.msra.mxu0 0.0
    %1514 = vmatprep.subr.mxu0 0.0
    %1515 = vmatpush1.msra.mxu0 0.0
    %1516 = vmatprep.subr.mxu0 0.0
    %1517 = vmatpush1.msra.mxu0 0.0
    %1518 = vmatprep.subr.mxu0 0.0
    %1519 = vmatpush1.msra.mxu0 0.0
    %1520 = vmatprep.mubr.f32.mxu0 0.0
    %v1521 = vand.u32 %v466, 4294901760
    %1522 = vmatmul.mubr.f32.gmra.mrb[0].mxu0 %v1521
    %v1523 = vpop.f32.mrb[0].mxu0
    %v1524 = vadd.f32 %v1361, %v1523
    %v1525 = vpop.f32.mrb[0].mxu0
    %1526 = vmatprep.mubr.f32.mxu0 0.0
    %v1527 = vand.u32 %v469, 4294901760
    %1528 = vmatmul.mubr.f32.gmra.mrb[0].mxu0 %v1527
    %v1529 = vpop.f32.mrb[0].mxu0
    %v1530 = vadd.f32 %v1367, %v1529
    %v1531 = vpop.f32.mrb[0].mxu0
    %1532 = vmatprep.mubr.f32.mxu0 0.0
    %v1533 = vand.u32 %v472, 4294901760
    %1534 = vmatmul.mubr.f32.gmra.mrb[0].mxu0 %v1533
    %v1535 = vpop.f32.mrb[0].mxu0
    %v1536 = vadd.f32 %v1373, %v1535
    %v1537 = vpop.f32.mrb[0].mxu0
    %1538 = vmatprep.mubr.f32.mxu0 0.0
    %v1539 = vand.u32 %v475, 4294901760
    %1540 = vmatmul.mubr.f32.gmra.mrb[0].mxu0 %v1539
    %v1541 = vpop.f32.mrb[0].mxu0
    %v1542 = vadd.f32 %v1379, %v1541
    %v1543 = vpop.f32.mrb[0].mxu0
    %1544 = vmatprep.mubr.f32.mxu0 0.0
    %v1545 = vand.u32 %v478, 4294901760
    %1546 = vmatmul.mubr.f32.gmra.mrb[0].mxu0 %v1545
    %v1547 = vpop.f32.mrb[0].mxu0
    %v1548 = vadd.f32 %v1385, %v1547
    %v1549 = vpop.f32.mrb[0].mxu0
    %1550 = vmatprep.mubr.f32.mxu0 0.0
    %v1551 = vand.u32 %v481, 4294901760
    %1552 = vmatmul.mubr.f32.gmra.mrb[0].mxu0 %v1551
    %v1553 = vpop.f32.mrb[0].mxu0
    %v1554 = vadd.f32 %v1391, %v1553
    %v1555 = vpop.f32.mrb[0].mxu0
    %1556 = vmatprep.mubr.f32.mxu0 0.0
    %v1557 = vand.u32 %v484, 4294901760
    %1558 = vmatmul.mubr.f32.gmra.mrb[0].mxu0 %v1557
    %v1559 = vpop.f32.mrb[0].mxu0
    %v1560 = vadd.f32 %v1397, %v1559
    %v1561 = vpop.f32.mrb[0].mxu0
    %1562 = vmatprep.mubr.f32.mxu0 0.0
    %v1563 = vand.u32 %v487, 4294901760
    %1564 = vmatmul.mubr.f32.gmra.mrb[0].mxu0 %v1563
    %v1565 = vpop.f32.mrb[0].mxu0
    %v1566 = vadd.f32 %v1403, %v1565
    %v1567 = vpop.f32.mrb[0].mxu0
    %1568 = vmatprep.mubr.f32.mxu0 0.0
    %v1569 = vand.u32 %v490, 4294901760
    %1570 = vmatmul.mubr.f32.gmra.mrb[0].mxu0 %v1569
    %v1571 = vpop.f32.mrb[0].mxu0
    %v1572 = vadd.f32 %v1409, %v1571
    %v1573 = vpop.f32.mrb[0].mxu0
    %1574 = vmatprep.mubr.f32.mxu0 0.0
    %v1575 = vand.u32 %v493, 4294901760
    %1576 = vmatmul.mubr.f32.gmra.mrb[0].mxu0 %v1575
    %v1577 = vpop.f32.mrb[0].mxu0
    %v1578 = vadd.f32 %v1415, %v1577
    %v1579 = vpop.f32.mrb[0].mxu0
    %1580 = vmatprep.mubr.f32.mxu0 0.0
    %v1581 = vand.u32 %v496, 4294901760
    %1582 = vmatmul.mubr.f32.gmra.mrb[0].mxu0 %v1581
    %v1583 = vpop.f32.mrb[0].mxu0
    %v1584 = vadd.f32 %v1421, %v1583
    %v1585 = vpop.f32.mrb[0].mxu0
    %1586 = vmatprep.mubr.f32.mxu0 0.0
    %v1587 = vand.u32 %v499, 4294901760
    %1588 = vmatmul.mubr.f32.gmra.mrb[0].mxu0 %v1587
    %v1589 = vpop.f32.mrb[0].mxu0
    %v1590 = vadd.f32 %v1427, %v1589
    %v1591 = vpop.f32.mrb[0].mxu0
    %1592 = vmatprep.mubr.f32.mxu0 0.0
    %v1593 = vand.u32 %v502, 4294901760
    %1594 = vmatmul.mubr.f32.gmra.mrb[0].mxu0 %v1593
    %v1595 = vpop.f32.mrb[0].mxu0
    %v1596 = vadd.f32 %v1433, %v1595
    %v1597 = vpop.f32.mrb[0].mxu0
    %1598 = vmatprep.mubr.f32.mxu0 0.0
    %v1599 = vand.u32 %v505, 4294901760
    %1600 = vmatmul.mubr.f32.gmra.mrb[0].mxu0 %v1599
    %v1601 = vpop.f32.mrb[0].mxu0
    %v1602 = vadd.f32 %v1439, %v1601
    %v1603 = vpop.f32.mrb[0].mxu0
    %1604 = vmatprep.mubr.f32.mxu0 0.0
    %v1605 = vand.u32 %v508, 4294901760
    %1606 = vmatmul.mubr.f32.gmra.mrb[0].mxu0 %v1605
    %v1607 = vpop.f32.mrb[0].mxu0
    %v1608 = vadd.f32 %v1445, %v1607
    %v1609 = vpop.f32.mrb[0].mxu0
    %1610 = vmatprep.mubr.f32.mxu0 0.0
    %v1611 = vand.u32 %v511, 4294901760
    %1612 = vmatmul.mubr.f32.gmra.mrb[0].mxu0 %v1611
    %v1613 = vpop.f32.mrb[0].mxu0
    %v1614 = vadd.f32 %v1451, %v1613
    %v1615 = vpop.f32.mrb[0].mxu0
    %1616 = vdwg.mxu0
    %v1617 = vld [vmem:[#allocation10] sm:$0xff]
    %v1618 = vld [vmem:[#allocation10 + $0x8] sm:$0xff]
    %v1619 = vld [vmem:[#allocation10 + $0x10] sm:$0xff]
    %v1620 = vld [vmem:[#allocation10 + $0x18] sm:$0xff]
    %v1621 = vld [vmem:[#allocation10 + $0x20] sm:$0xff]
    %v1622 = vld [vmem:[#allocation10 + $0x28] sm:$0xff]
    %v1623 = vld [vmem:[#allocation10 + $0x30] sm:$0xff]
    %v1624 = vld [vmem:[#allocation10 + $0x38] sm:$0xff]
    %v1625 = vld [vmem:[#allocation10 + $0x40] sm:$0xff]
    %v1626 = vld [vmem:[#allocation10 + $0x48] sm:$0xff]
    %v1627 = vld [vmem:[#allocation10 + $0x50] sm:$0xff]
    %v1628 = vld [vmem:[#allocation10 + $0x58] sm:$0xff]
    %v1629 = vld [vmem:[#allocation10 + $0x60] sm:$0xff]
    %v1630 = vld [vmem:[#allocation10 + $0x68] sm:$0xff]
    %v1631 = vld [vmem:[#allocation10 + $0x70] sm:$0xff]
    %v1632 = vld [vmem:[#allocation10 + $0x78] sm:$0xff]
    %v1633 = vld [vmem:[#allocation13] sm:$0xff]
    %v1634 = vld [vmem:[#allocation13 + $0x8] sm:$0xff]
    %v1635 = vld [vmem:[#allocation13 + $0x10] sm:$0xff]
    %v1636 = vld [vmem:[#allocation13 + $0x18] sm:$0xff]
    %v1637 = vld [vmem:[#allocation15] sm:$0xff]
    %v1638 = vld [vmem:[#allocation15 + $0x8] sm:$0xff]
    %v1639 = vld [vmem:[#allocation15 + $0x10] sm:$0xff]
    %v1640 = vld [vmem:[#allocation15 + $0x18] sm:$0xff]
    %vm1641 = vcmask 261120
    %v1643 = vsel %vm1641, %v1524, 0
    %v1646 = vsel %vm1641, %v1530, 0
    %v1649 = vsel %vm1641, %v1536, 0
    %v1652 = vsel %vm1641, %v1542, 0
    %v1655 = vsel %vm1641, %v1548, 0
    %v1658 = vsel %vm1641, %v1554, 0
    %v1661 = vsel %vm1641, %v1560, 0
    %v1664 = vsel %vm1641, %v1566, 0
    %v1667 = vsel %vm1641, %v1572, 0
    %v1670 = vsel %vm1641, %v1578, 0
    %v1673 = vsel %vm1641, %v1584, 0
    %v1676 = vsel %vm1641, %v1590, 0
    %v1679 = vsel %vm1641, %v1596, 0
    %v1682 = vsel %vm1641, %v1602, 0
    %v1685 = vsel %vm1641, %v1608, 0
    %v1688 = vsel %vm1641, %v1614, 0
    %1690 = vmatprep.subr.mxu0 0.0
    %v1691 = vand.u32 %v1637, 4294901760
    %1692 = vmatpush1.msra.mxu0 %v1691
    %1693 = vmatprep.subr.mxu0 0.0
    %v1694 = vand.u32 %v1638, 4294901760
    %1695 = vmatpush1.msra.mxu0 %v1694
    %1696 = vmatprep.subr.mxu0 0.0
    %v1697 = vand.u32 %v1639, 4294901760
    %1698 = vmatpush1.msra.mxu0 %v1697
    %1699 = vmatprep.subr.mxu0 0.0
    %v1700 = vand.u32 %v1640, 4294901760
    %1701 = vmatpush1.msra.mxu0 %v1700
    %1702 = vmatprep.subr.mxu0 0.0
    %1703 = vmatpush1.msra.mxu0 0.0
    %1704 = vmatprep.subr.mxu0 0.0
    %1705 = vmatpush1.msra.mxu0 0.0
    %1706 = vmatprep.subr.mxu0 0.0
    %1707 = vmatpush1.msra.mxu0 0.0
    %1708 = vmatprep.subr.mxu0 0.0
    %1709 = vmatpush1.msra.mxu0 0.0
    %1710 = vmatprep.subr.mxu0 0.0
    %1711 = vmatpush1.msra.mxu0 0.0
    %1712 = vmatprep.subr.mxu0 0.0
    %1713 = vmatpush1.msra.mxu0 0.0
    %1714 = vmatprep.subr.mxu0 0.0
    %1715 = vmatpush1.msra.mxu0 0.0
    %1716 = vmatprep.subr.mxu0 0.0
    %1717 = vmatpush1.msra.mxu0 0.0
    %1718 = vmatprep.subr.mxu0 0.0
    %1719 = vmatpush1.msra.mxu0 0.0
    %1720 = vmatprep.subr.mxu0 0.0
    %1721 = vmatpush1.msra.mxu0 0.0
    %1722 = vmatprep.subr.mxu0 0.0
    %1723 = vmatpush1.msra.mxu0 0.0
    %1724 = vmatprep.subr.mxu0 0.0
    %1725 = vmatpush1.msra.mxu0 0.0
    %1726 = vmatprep.subr.mxu0 0.0
    %1727 = vmatpush1.msra.mxu0 0.0
    %1728 = vmatprep.subr.mxu0 0.0
    %1729 = vmatpush1.msra.mxu0 0.0
    %1730 = vmatprep.subr.mxu0 0.0
    %1731 = vmatpush1.msra.mxu0 0.0
    %1732 = vmatprep.subr.mxu0 0.0
    %1733 = vmatpush1.msra.mxu0 0.0
    %1734 = vmatprep.subr.mxu0 0.0
    %1735 = vmatpush1.msra.mxu0 0.0
    %1736 = vmatprep.subr.mxu0 0.0
    %1737 = vmatpush1.msra.mxu0 0.0
    %1738 = vmatprep.subr.mxu0 0.0
    %1739 = vmatpush1.msra.mxu0 0.0
    %1740 = vmatprep.subr.mxu0 0.0
    %1741 = vmatpush1.msra.mxu0 0.0
    %1742 = vmatprep.subr.mxu0 0.0
    %1743 = vmatpush1.msra.mxu0 0.0
    %1744 = vmatprep.subr.mxu0 0.0
    %1745 = vmatpush1.msra.mxu0 0.0
    %1746 = vmatprep.subr.mxu0 0.0
    %1747 = vmatpush1.msra.mxu0 0.0
    %1748 = vmatprep.subr.mxu0 0.0
    %1749 = vmatpush1.msra.mxu0 0.0
    %1750 = vmatprep.subr.mxu0 0.0
    %1751 = vmatpush1.msra.mxu0 0.0
    %1752 = vmatprep.subr.mxu0 0.0
    %1753 = vmatpush1.msra.mxu0 0.0
    %1754 = vmatprep.subr.mxu0 0.0
    %1755 = vmatpush1.msra.mxu0 0.0
    %1756 = vmatprep.subr.mxu0 0.0
    %1757 = vmatpush1.msra.mxu0 0.0
    %1758 = vmatprep.mubr.f32.mxu0 0.0
    %v1759 = vand.u32 %v1643, 4294901760
    %v1760 = vsub.f32 %v1643, %v1759
    %v1761 = vand.u32 %v1760, 4294901760
    %v1762 = vsub.f32 %v1760, %v1761
    %v1763 = vand.u32 %v1762, 4294901760
    %1764 = vmatmul.mubr.f32.gmra.mrb[0].mxu0 %v1763
    %v1765 = vpop.f32.mrb[0].mxu0
    %v1766 = vadd.f32 0.0, %v1765
    %v1767 = vpop.f32.mrb[0].mxu0
    %1768 = vmatprep.mubr.f32.mxu0 0.0
    %v1769 = vand.u32 %v1646, 4294901760
    %v1770 = vsub.f32 %v1646, %v1769
    %v1771 = vand.u32 %v1770, 4294901760
    %v1772 = vsub.f32 %v1770, %v1771
    %v1773 = vand.u32 %v1772, 4294901760
    %1774 = vmatmul.mubr.f32.gmra.mrb[0].mxu0 %v1773
    %v1775 = vpop.f32.mrb[0].mxu0
    %v1776 = vadd.f32 0.0, %v1775
    %v1777 = vpop.f32.mrb[0].mxu0
    %1778 = vmatprep.mubr.f32.mxu0 0.0
    %v1779 = vand.u32 %v1649, 4294901760
    %v1780 = vsub.f32 %v1649, %v1779
    %v1781 = vand.u32 %v1780, 4294901760
    %v1782 = vsub.f32 %v1780, %v1781
    %v1783 = vand.u32 %v1782, 4294901760
    %1784 = vmatmul.mubr.f32.gmra.mrb[0].mxu0 %v1783
    %v1785 = vpop.f32.mrb[0].mxu0
    %v1786 = vadd.f32 0.0, %v1785
    %v1787 = vpop.f32.mrb[0].mxu0
    %1788 = vmatprep.mubr.f32.mxu0 0.0
    %v1789 = vand.u32 %v1652, 4294901760
    %v1790 = vsub.f32 %v1652, %v1789
    %v1791 = vand.u32 %v1790, 4294901760
    %v1792 = vsub.f32 %v1790, %v1791
    %v1793 = vand.u32 %v1792, 4294901760
    %1794 = vmatmul.mubr.f32.gmra.mrb[0].mxu0 %v1793
    %v1795 = vpop.f32.mrb[0].mxu0
    %v1796 = vadd.f32 0.0, %v1795
    %v1797 = vpop.f32.mrb[0].mxu0
    %1798 = vmatprep.mubr.f32.mxu0 0.0
    %v1799 = vand.u32 %v1655, 4294901760
    %v1800 = vsub.f32 %v1655, %v1799
    %v1801 = vand.u32 %v1800, 4294901760
    %v1802 = vsub.f32 %v1800, %v1801
    %v1803 = vand.u32 %v1802, 4294901760
    %1804 = vmatmul.mubr.f32.gmra.mrb[0].mxu0 %v1803
    %v1805 = vpop.f32.mrb[0].mxu0
    %v1806 = vadd.f32 0.0, %v1805
    %v1807 = vpop.f32.mrb[0].mxu0
    %1808 = vmatprep.mubr.f32.mxu0 0.0
    %v1809 = vand.u32 %v1658, 4294901760
    %v1810 = vsub.f32 %v1658, %v1809
    %v1811 = vand.u32 %v1810, 4294901760
    %v1812 = vsub.f32 %v1810, %v1811
    %v1813 = vand.u32 %v1812, 4294901760
    %1814 = vmatmul.mubr.f32.gmra.mrb[0].mxu0 %v1813
    %v1815 = vpop.f32.mrb[0].mxu0
    %v1816 = vadd.f32 0.0, %v1815
    %v1817 = vpop.f32.mrb[0].mxu0
    %1818 = vmatprep.mubr.f32.mxu0 0.0
    %v1819 = vand.u32 %v1661, 4294901760
    %v1820 = vsub.f32 %v1661, %v1819
    %v1821 = vand.u32 %v1820, 4294901760
    %v1822 = vsub.f32 %v1820, %v1821
    %v1823 = vand.u32 %v1822, 4294901760
    %1824 = vmatmul.mubr.f32.gmra.mrb[0].mxu0 %v1823
    %v1825 = vpop.f32.mrb[0].mxu0
    %v1826 = vadd.f32 0.0, %v1825
    %v1827 = vpop.f32.mrb[0].mxu0
    %1828 = vmatprep.mubr.f32.mxu0 0.0
    %v1829 = vand.u32 %v1664, 4294901760
    %v1830 = vsub.f32 %v1664, %v1829
    %v1831 = vand.u32 %v1830, 4294901760
    %v1832 = vsub.f32 %v1830, %v1831
    %v1833 = vand.u32 %v1832, 4294901760
    %1834 = vmatmul.mubr.f32.gmra.mrb[0].mxu0 %v1833
    %v1835 = vpop.f32.mrb[0].mxu0
    %v1836 = vadd.f32 0.0, %v1835
    %v1837 = vpop.f32.mrb[0].mxu0
    %1838 = vmatprep.mubr.f32.mxu0 0.0
    %v1839 = vand.u32 %v1667, 4294901760
    %v1840 = vsub.f32 %v1667, %v1839
    %v1841 = vand.u32 %v1840, 4294901760
    %v1842 = vsub.f32 %v1840, %v1841
    %v1843 = vand.u32 %v1842, 4294901760
    %1844 = vmatmul.mubr.f32.gmra.mrb[0].mxu0 %v1843
    %v1845 = vpop.f32.mrb[0].mxu0
    %v1846 = vadd.f32 0.0, %v1845
    %v1847 = vpop.f32.mrb[0].mxu0
    %1848 = vmatprep.mubr.f32.mxu0 0.0
    %v1849 = vand.u32 %v1670, 4294901760
    %v1850 = vsub.f32 %v1670, %v1849
    %v1851 = vand.u32 %v1850, 4294901760
    %v1852 = vsub.f32 %v1850, %v1851
    %v1853 = vand.u32 %v1852, 4294901760
    %1854 = vmatmul.mubr.f32.gmra.mrb[0].mxu0 %v1853
    %v1855 = vpop.f32.mrb[0].mxu0
    %v1856 = vadd.f32 0.0, %v1855
    %v1857 = vpop.f32.mrb[0].mxu0
    %1858 = vmatprep.mubr.f32.mxu0 0.0
    %v1859 = vand.u32 %v1673, 4294901760
    %v1860 = vsub.f32 %v1673, %v1859
    %v1861 = vand.u32 %v1860, 4294901760
    %v1862 = vsub.f32 %v1860, %v1861
    %v1863 = vand.u32 %v1862, 4294901760
    %1864 = vmatmul.mubr.f32.gmra.mrb[0].mxu0 %v1863
    %v1865 = vpop.f32.mrb[0].mxu0
    %v1866 = vadd.f32 0.0, %v1865
    %v1867 = vpop.f32.mrb[0].mxu0
    %1868 = vmatprep.mubr.f32.mxu0 0.0
    %v1869 = vand.u32 %v1676, 4294901760
    %v1870 = vsub.f32 %v1676, %v1869
    %v1871 = vand.u32 %v1870, 4294901760
    %v1872 = vsub.f32 %v1870, %v1871
    %v1873 = vand.u32 %v1872, 4294901760
    %1874 = vmatmul.mubr.f32.gmra.mrb[0].mxu0 %v1873
    %v1875 = vpop.f32.mrb[0].mxu0
    %v1876 = vadd.f32 0.0, %v1875
    %v1877 = vpop.f32.mrb[0].mxu0
    %1878 = vmatprep.mubr.f32.mxu0 0.0
    %v1879 = vand.u32 %v1679, 4294901760
    %v1880 = vsub.f32 %v1679, %v1879
    %v1881 = vand.u32 %v1880, 4294901760
    %v1882 = vsub.f32 %v1880, %v1881
    %v1883 = vand.u32 %v1882, 4294901760
    %1884 = vmatmul.mubr.f32.gmra.mrb[0].mxu0 %v1883
    %v1885 = vpop.f32.mrb[0].mxu0
    %v1886 = vadd.f32 0.0, %v1885
    %v1887 = vpop.f32.mrb[0].mxu0
    %1888 = vmatprep.mubr.f32.mxu0 0.0
    %v1889 = vand.u32 %v1682, 4294901760
    %v1890 = vsub.f32 %v1682, %v1889
    %v1891 = vand.u32 %v1890, 4294901760
    %v1892 = vsub.f32 %v1890, %v1891
    %v1893 = vand.u32 %v1892, 4294901760
    %1894 = vmatmul.mubr.f32.gmra.mrb[0].mxu0 %v1893
    %v1895 = vpop.f32.mrb[0].mxu0
    %v1896 = vadd.f32 0.0, %v1895
    %v1897 = vpop.f32.mrb[0].mxu0
    %1898 = vmatprep.mubr.f32.mxu0 0.0
    %v1899 = vand.u32 %v1685, 4294901760
    %v1900 = vsub.f32 %v1685, %v1899
    %v1901 = vand.u32 %v1900, 4294901760
    %v1902 = vsub.f32 %v1900, %v1901
    %v1903 = vand.u32 %v1902, 4294901760
    %1904 = vmatmul.mubr.f32.gmra.mrb[0].mxu0 %v1903
    %v1905 = vpop.f32.mrb[0].mxu0
    %v1906 = vadd.f32 0.0, %v1905
    %v1907 = vpop.f32.mrb[0].mxu0
    %1908 = vmatprep.mubr.f32.mxu0 0.0
    %v1909 = vand.u32 %v1688, 4294901760
    %v1910 = vsub.f32 %v1688, %v1909
    %v1911 = vand.u32 %v1910, 4294901760
    %v1912 = vsub.f32 %v1910, %v1911
    %v1913 = vand.u32 %v1912, 4294901760
    %1914 = vmatmul.mubr.f32.gmra.mrb[0].mxu0 %v1913
    %v1915 = vpop.f32.mrb[0].mxu0
    %v1916 = vadd.f32 0.0, %v1915
    %v1917 = vpop.f32.mrb[0].mxu0
    %1918 = vdwg.mxu0
    %1919 = vmatprep.subr.mxu0 0.0
    %v1920 = vand.u32 %v1637, 4294901760
    %v1921 = vsub.f32 %v1637, %v1920
    %v1922 = vand.u32 %v1921, 4294901760
    %v1923 = vsub.f32 %v1921, %v1922
    %v1924 = vand.u32 %v1923, 4294901760
    %1925 = vmatpush1.msra.mxu0 %v1924
    %1926 = vmatprep.subr.mxu0 0.0
    %v1927 = vand.u32 %v1638, 4294901760
    %v1928 = vsub.f32 %v1638, %v1927
    %v1929 = vand.u32 %v1928, 4294901760
    %v1930 = vsub.f32 %v1928, %v1929
    %v1931 = vand.u32 %v1930, 4294901760
    %1932 = vmatpush1.msra.mxu0 %v1931
    %1933 = vmatprep.subr.mxu0 0.0
    %v1934 = vand.u32 %v1639, 4294901760
    %v1935 = vsub.f32 %v1639, %v1934
    %v1936 = vand.u32 %v1935, 4294901760
    %v1937 = vsub.f32 %v1935, %v1936
    %v1938 = vand.u32 %v1937, 4294901760
    %1939 = vmatpush1.msra.mxu0 %v1938
    %1940 = vmatprep.subr.mxu0 0.0
    %v1941 = vand.u32 %v1640, 4294901760
    %v1942 = vsub.f32 %v1640, %v1941
    %v1943 = vand.u32 %v1942, 4294901760
    %v1944 = vsub.f32 %v1942, %v1943
    %v1945 = vand.u32 %v1944, 4294901760
    %1946 = vmatpush1.msra.mxu0 %v1945
    %1947 = vmatprep.subr.mxu0 0.0
    %1948 = vmatpush1.msra.mxu0 0.0
    %1949 = vmatprep.subr.mxu0 0.0
    %1950 = vmatpush1.msra.mxu0 0.0
    %1951 = vmatprep.subr.mxu0 0.0
    %1952 = vmatpush1.msra.mxu0 0.0
    %1953 = vmatprep.subr.mxu0 0.0
    %1954 = vmatpush1.msra.mxu0 0.0
    %1955 = vmatprep.subr.mxu0 0.0
    %1956 = vmatpush1.msra.mxu0 0.0
    %1957 = vmatprep.subr.mxu0 0.0
    %1958 = vmatpush1.msra.mxu0 0.0
    %1959 = vmatprep.subr.mxu0 0.0
    %1960 = vmatpush1.msra.mxu0 0.0
    %1961 = vmatprep.subr.mxu0 0.0
    %1962 = vmatpush1.msra.mxu0 0.0
    %1963 = vmatprep.subr.mxu0 0.0
    %1964 = vmatpush1.msra.mxu0 0.0
    %1965 = vmatprep.subr.mxu0 0.0
    %1966 = vmatpush1.msra.mxu0 0.0
    %1967 = vmatprep.subr.mxu0 0.0
    %1968 = vmatpush1.msra.mxu0 0.0
    %1969 = vmatprep.subr.mxu0 0.0
    %1970 = vmatpush1.msra.mxu0 0.0
    %1971 = vmatprep.subr.mxu0 0.0
    %1972 = vmatpush1.msra.mxu0 0.0
    %1973 = vmatprep.subr.mxu0 0.0
    %1974 = vmatpush1.msra.mxu0 0.0
    %1975 = vmatprep.subr.mxu0 0.0
    %1976 = vmatpush1.msra.mxu0 0.0
    %1977 = vmatprep.subr.mxu0 0.0
    %1978 = vmatpush1.msra.mxu0 0.0
    %1979 = vmatprep.subr.mxu0 0.0
    %1980 = vmatpush1.msra.mxu0 0.0
    %1981 = vmatprep.subr.mxu0 0.0
    %1982 = vmatpush1.msra.mxu0 0.0
    %1983 = vmatprep.subr.mxu0 0.0
    %1984 = vmatpush1.msra.mxu0 0.0
    %1985 = vmatprep.subr.mxu0 0.0
    %1986 = vmatpush1.msra.mxu0 0.0
    %1987 = vmatprep.subr.mxu0 0.0
    %1988 = vmatpush1.msra.mxu0 0.0
    %1989 = vmatprep.subr.mxu0 0.0
    %1990 = vmatpush1.msra.mxu0 0.0
    %1991 = vmatprep.subr.mxu0 0.0
    %1992 = vmatpush1.msra.mxu0 0.0
    %1993 = vmatprep.subr.mxu0 0.0
    %1994 = vmatpush1.msra.mxu0 0.0
    %1995 = vmatprep.subr.mxu0 0.0
    %1996 = vmatpush1.msra.mxu0 0.0
    %1997 = vmatprep.subr.mxu0 0.0
    %1998 = vmatpush1.msra.mxu0 0.0
    %1999 = vmatprep.subr.mxu0 0.0
    %2000 = vmatpush1.msra.mxu0 0.0
    %2001 = vmatprep.subr.mxu0 0.0
    %2002 = vmatpush1.msra.mxu0 0.0
    %2003 = vmatprep.mubr.f32.mxu0 0.0
    %v2004 = vand.u32 %v1643, 4294901760
    %2005 = vmatmul.mubr.f32.gmra.mrb[0].mxu0 %v2004
    %v2006 = vpop.f32.mrb[0].mxu0
    %v2007 = vadd.f32 %v1766, %v2006
    %v2008 = vpop.f32.mrb[0].mxu0
    %2009 = vmatprep.mubr.f32.mxu0 0.0
    %v2010 = vand.u32 %v1646, 4294901760
    %2011 = vmatmul.mubr.f32.gmra.mrb[0].mxu0 %v2010
    %v2012 = vpop.f32.mrb[0].mxu0
    %v2013 = vadd.f32 %v1776, %v2012
    %v2014 = vpop.f32.mrb[0].mxu0
    %2015 = vmatprep.mubr.f32.mxu0 0.0
    %v2016 = vand.u32 %v1649, 4294901760
    %2017 = vmatmul.mubr.f32.gmra.mrb[0].mxu0 %v2016
    %v2018 = vpop.f32.mrb[0].mxu0
    %v2019 = vadd.f32 %v1786, %v2018
    %v2020 = vpop.f32.mrb[0].mxu0
    %2021 = vmatprep.mubr.f32.mxu0 0.0
    %v2022 = vand.u32 %v1652, 4294901760
    %2023 = vmatmul.mubr.f32.gmra.mrb[0].mxu0 %v2022
    %v2024 = vpop.f32.mrb[0].mxu0
    %v2025 = vadd.f32 %v1796, %v2024
    %v2026 = vpop.f32.mrb[0].mxu0
    %2027 = vmatprep.mubr.f32.mxu0 0.0
    %v2028 = vand.u32 %v1655, 4294901760
    %2029 = vmatmul.mubr.f32.gmra.mrb[0].mxu0 %v2028
    %v2030 = vpop.f32.mrb[0].mxu0
    %v2031 = vadd.f32 %v1806, %v2030
    %v2032 = vpop.f32.mrb[0].mxu0
    %2033 = vmatprep.mubr.f32.mxu0 0.0
    %v2034 = vand.u32 %v1658, 4294901760
    %2035 = vmatmul.mubr.f32.gmra.mrb[0].mxu0 %v2034
    %v2036 = vpop.f32.mrb[0].mxu0
    %v2037 = vadd.f32 %v1816, %v2036
    %v2038 = vpop.f32.mrb[0].mxu0
    %2039 = vmatprep.mubr.f32.mxu0 0.0
    %v2040 = vand.u32 %v1661, 4294901760
    %2041 = vmatmul.mubr.f32.gmra.mrb[0].mxu0 %v2040
    %v2042 = vpop.f32.mrb[0].mxu0
    %v2043 = vadd.f32 %v1826, %v2042
    %v2044 = vpop.f32.mrb[0].mxu0
    %2045 = vmatprep.mubr.f32.mxu0 0.0
    %v2046 = vand.u32 %v1664, 4294901760
    %2047 = vmatmul.mubr.f32.gmra.mrb[0].mxu0 %v2046
    %v2048 = vpop.f32.mrb[0].mxu0
    %v2049 = vadd.f32 %v1836, %v2048
    %v2050 = vpop.f32.mrb[0].mxu0
    %2051 = vmatprep.mubr.f32.mxu0 0.0
    %v2052 = vand.u32 %v1667, 4294901760
    %2053 = vmatmul.mubr.f32.gmra.mrb[0].mxu0 %v2052
    %v2054 = vpop.f32.mrb[0].mxu0
    %v2055 = vadd.f32 %v1846, %v2054
    %v2056 = vpop.f32.mrb[0].mxu0
    %2057 = vmatprep.mubr.f32.mxu0 0.0
    %v2058 = vand.u32 %v1670, 4294901760
    %2059 = vmatmul.mubr.f32.gmra.mrb[0].mxu0 %v2058
    %v2060 = vpop.f32.mrb[0].mxu0
    %v2061 = vadd.f32 %v1856, %v2060
    %v2062 = vpop.f32.mrb[0].mxu0
    %2063 = vmatprep.mubr.f32.mxu0 0.0
    %v2064 = vand.u32 %v1673, 4294901760
    %2065 = vmatmul.mubr.f32.gmra.mrb[0].mxu0 %v2064
    %v2066 = vpop.f32.mrb[0].mxu0
    %v2067 = vadd.f32 %v1866, %v2066
    %v2068 = vpop.f32.mrb[0].mxu0
    %2069 = vmatprep.mubr.f32.mxu0 0.0
    %v2070 = vand.u32 %v1676, 4294901760
    %2071 = vmatmul.mubr.f32.gmra.mrb[0].mxu0 %v2070
    %v2072 = vpop.f32.mrb[0].mxu0
    %v2073 = vadd.f32 %v1876, %v2072
    %v2074 = vpop.f32.mrb[0].mxu0
    %2075 = vmatprep.mubr.f32.mxu0 0.0
    %v2076 = vand.u32 %v1679, 4294901760
    %2077 = vmatmul.mubr.f32.gmra.mrb[0].mxu0 %v2076
    %v2078 = vpop.f32.mrb[0].mxu0
    %v2079 = vadd.f32 %v1886, %v2078
    %v2080 = vpop.f32.mrb[0].mxu0
    %2081 = vmatprep.mubr.f32.mxu0 0.0
    %v2082 = vand.u32 %v1682, 4294901760
    %2083 = vmatmul.mubr.f32.gmra.mrb[0].mxu0 %v2082
    %v2084 = vpop.f32.mrb[0].mxu0
    %v2085 = vadd.f32 %v1896, %v2084
    %v2086 = vpop.f32.mrb[0].mxu0
    %2087 = vmatprep.mubr.f32.mxu0 0.0
    %v2088 = vand.u32 %v1685, 4294901760
    %2089 = vmatmul.mubr.f32.gmra.mrb[0].mxu0 %v2088
    %v2090 = vpop.f32.mrb[0].mxu0
    %v2091 = vadd.f32 %v1906, %v2090
    %v2092 = vpop.f32.mrb[0].mxu0
    %2093 = vmatprep.mubr.f32.mxu0 0.0
    %v2094 = vand.u32 %v1688, 4294901760
    %2095 = vmatmul.mubr.f32.gmra.mrb[0].mxu0 %v2094
    %v2096 = vpop.f32.mrb[0].mxu0
    %v2097 = vadd.f32 %v1916, %v2096
    %v2098 = vpop.f32.mrb[0].mxu0
    %2099 = vdwg.mxu0
    %2100 = vmatprep.subr.mxu0 0.0
    %v2101 = vand.u32 %v1637, 4294901760
    %v2102 = vsub.f32 %v1637, %v2101
    %2103 = vmatpush1.msra.mxu0 %v2102
    %2104 = vmatprep.subr.mxu0 0.0
    %v2105 = vand.u32 %v1638, 4294901760
    %v2106 = vsub.f32 %v1638, %v2105
    %2107 = vmatpush1.msra.mxu0 %v2106
    %2108 = vmatprep.subr.mxu0 0.0
    %v2109 = vand.u32 %v1639, 4294901760
    %v2110 = vsub.f32 %v1639, %v2109
    %2111 = vmatpush1.msra.mxu0 %v2110
    %2112 = vmatprep.subr.mxu0 0.0
    %v2113 = vand.u32 %v1640, 4294901760
    %v2114 = vsub.f32 %v1640, %v2113
    %2115 = vmatpush1.msra.mxu0 %v2114
    %2116 = vmatprep.subr.mxu0 0.0
    %2117 = vmatpush1.msra.mxu0 0.0
    %2118 = vmatprep.subr.mxu0 0.0
    %2119 = vmatpush1.msra.mxu0 0.0
    %2120 = vmatprep.subr.mxu0 0.0
    %2121 = vmatpush1.msra.mxu0 0.0
    %2122 = vmatprep.subr.mxu0 0.0
    %2123 = vmatpush1.msra.mxu0 0.0
    %2124 = vmatprep.subr.mxu0 0.0
    %2125 = vmatpush1.msra.mxu0 0.0
    %2126 = vmatprep.subr.mxu0 0.0
    %2127 = vmatpush1.msra.mxu0 0.0
    %2128 = vmatprep.subr.mxu0 0.0
    %2129 = vmatpush1.msra.mxu0 0.0
    %2130 = vmatprep.subr.mxu0 0.0
    %2131 = vmatpush1.msra.mxu0 0.0
    %2132 = vmatprep.subr.mxu0 0.0
    %2133 = vmatpush1.msra.mxu0 0.0
    %2134 = vmatprep.subr.mxu0 0.0
    %2135 = vmatpush1.msra.mxu0 0.0
    %2136 = vmatprep.subr.mxu0 0.0
    %2137 = vmatpush1.msra.mxu0 0.0
    %2138 = vmatprep.subr.mxu0 0.0
    %2139 = vmatpush1.msra.mxu0 0.0
    %2140 = vmatprep.subr.mxu0 0.0
    %2141 = vmatpush1.msra.mxu0 0.0
    %2142 = vmatprep.subr.mxu0 0.0
    %2143 = vmatpush1.msra.mxu0 0.0
    %2144 = vmatprep.subr.mxu0 0.0
    %2145 = vmatpush1.msra.mxu0 0.0
    %2146 = vmatprep.subr.mxu0 0.0
    %2147 = vmatpush1.msra.mxu0 0.0
    %2148 = vmatprep.subr.mxu0 0.0
    %2149 = vmatpush1.msra.mxu0 0.0
    %2150 = vmatprep.subr.mxu0 0.0
    %2151 = vmatpush1.msra.mxu0 0.0
    %2152 = vmatprep.subr.mxu0 0.0
    %2153 = vmatpush1.msra.mxu0 0.0
    %2154 = vmatprep.subr.mxu0 0.0
    %2155 = vmatpush1.msra.mxu0 0.0
    %2156 = vmatprep.subr.mxu0 0.0
    %2157 = vmatpush1.msra.mxu0 0.0
    %2158 = vmatprep.subr.mxu0 0.0
    %2159 = vmatpush1.msra.mxu0 0.0
    %2160 = vmatprep.subr.mxu0 0.0
    %2161 = vmatpush1.msra.mxu0 0.0
    %2162 = vmatprep.subr.mxu0 0.0
    %2163 = vmatpush1.msra.mxu0 0.0
    %2164 = vmatprep.subr.mxu0 0.0
    %2165 = vmatpush1.msra.mxu0 0.0
    %2166 = vmatprep.subr.mxu0 0.0
    %2167 = vmatpush1.msra.mxu0 0.0
    %2168 = vmatprep.subr.mxu0 0.0
    %2169 = vmatpush1.msra.mxu0 0.0
    %2170 = vmatprep.subr.mxu0 0.0
    %2171 = vmatpush1.msra.mxu0 0.0
    %2172 = vmatprep.mubr.f32.mxu0 0.0
    %v2173 = vand.u32 %v1643, 4294901760
    %v2174 = vsub.f32 %v1643, %v2173
    %2175 = vmatmul.mubr.f32.gmra.mrb[0].mxu0 %v2174
    %v2176 = vpop.f32.mrb[0].mxu0
    %v2177 = vadd.f32 %v2007, %v2176
    %v2178 = vpop.f32.mrb[0].mxu0
    %2179 = vmatprep.mubr.f32.mxu0 0.0
    %v2180 = vand.u32 %v1646, 4294901760
    %v2181 = vsub.f32 %v1646, %v2180
    %2182 = vmatmul.mubr.f32.gmra.mrb[0].mxu0 %v2181
    %v2183 = vpop.f32.mrb[0].mxu0
    %v2184 = vadd.f32 %v2013, %v2183
    %v2185 = vpop.f32.mrb[0].mxu0
    %2186 = vmatprep.mubr.f32.mxu0 0.0
    %v2187 = vand.u32 %v1649, 4294901760
    %v2188 = vsub.f32 %v1649, %v2187
    %2189 = vmatmul.mubr.f32.gmra.mrb[0].mxu0 %v2188
    %v2190 = vpop.f32.mrb[0].mxu0
    %v2191 = vadd.f32 %v2019, %v2190
    %v2192 = vpop.f32.mrb[0].mxu0
    %2193 = vmatprep.mubr.f32.mxu0 0.0
    %v2194 = vand.u32 %v1652, 4294901760
    %v2195 = vsub.f32 %v1652, %v2194
    %2196 = vmatmul.mubr.f32.gmra.mrb[0].mxu0 %v2195
    %v2197 = vpop.f32.mrb[0].mxu0
    %v2198 = vadd.f32 %v2025, %v2197
    %v2199 = vpop.f32.mrb[0].mxu0
    %2200 = vmatprep.mubr.f32.mxu0 0.0
    %v2201 = vand.u32 %v1655, 4294901760
    %v2202 = vsub.f32 %v1655, %v2201
    %2203 = vmatmul.mubr.f32.gmra.mrb[0].mxu0 %v2202
    %v2204 = vpop.f32.mrb[0].mxu0
    %v2205 = vadd.f32 %v2031, %v2204
    %v2206 = vpop.f32.mrb[0].mxu0
    %2207 = vmatprep.mubr.f32.mxu0 0.0
    %v2208 = vand.u32 %v1658, 4294901760
    %v2209 = vsub.f32 %v1658, %v2208
    %2210 = vmatmul.mubr.f32.gmra.mrb[0].mxu0 %v2209
    %v2211 = vpop.f32.mrb[0].mxu0
    %v2212 = vadd.f32 %v2037, %v2211
    %v2213 = vpop.f32.mrb[0].mxu0
    %2214 = vmatprep.mubr.f32.mxu0 0.0
    %v2215 = vand.u32 %v1661, 4294901760
    %v2216 = vsub.f32 %v1661, %v2215
    %2217 = vmatmul.mubr.f32.gmra.mrb[0].mxu0 %v2216
    %v2218 = vpop.f32.mrb[0].mxu0
    %v2219 = vadd.f32 %v2043, %v2218
    %v2220 = vpop.f32.mrb[0].mxu0
    %2221 = vmatprep.mubr.f32.mxu0 0.0
    %v2222 = vand.u32 %v1664, 4294901760
    %v2223 = vsub.f32 %v1664, %v2222
    %2224 = vmatmul.mubr.f32.gmra.mrb[0].mxu0 %v2223
    %v2225 = vpop.f32.mrb[0].mxu0
    %v2226 = vadd.f32 %v2049, %v2225
    %v2227 = vpop.f32.mrb[0].mxu0
    %2228 = vmatprep.mubr.f32.mxu0 0.0
    %v2229 = vand.u32 %v1667, 4294901760
    %v2230 = vsub.f32 %v1667, %v2229
    %2231 = vmatmul.mubr.f32.gmra.mrb[0].mxu0 %v2230
    %v2232 = vpop.f32.mrb[0].mxu0
    %v2233 = vadd.f32 %v2055, %v2232
    %v2234 = vpop.f32.mrb[0].mxu0
    %2235 = vmatprep.mubr.f32.mxu0 0.0
    %v2236 = vand.u32 %v1670, 4294901760
    %v2237 = vsub.f32 %v1670, %v2236
    %2238 = vmatmul.mubr.f32.gmra.mrb[0].mxu0 %v2237
    %v2239 = vpop.f32.mrb[0].mxu0
    %v2240 = vadd.f32 %v2061, %v2239
    %v2241 = vpop.f32.mrb[0].mxu0
    %2242 = vmatprep.mubr.f32.mxu0 0.0
    %v2243 = vand.u32 %v1673, 4294901760
    %v2244 = vsub.f32 %v1673, %v2243
    %2245 = vmatmul.mubr.f32.gmra.mrb[0].mxu0 %v2244
    %v2246 = vpop.f32.mrb[0].mxu0
    %v2247 = vadd.f32 %v2067, %v2246
    %v2248 = vpop.f32.mrb[0].mxu0
    %2249 = vmatprep.mubr.f32.mxu0 0.0
    %v2250 = vand.u32 %v1676, 4294901760
    %v2251 = vsub.f32 %v1676, %v2250
    %2252 = vmatmul.mubr.f32.gmra.mrb[0].mxu0 %v2251
    %v2253 = vpop.f32.mrb[0].mxu0
    %v2254 = vadd.f32 %v2073, %v2253
    %v2255 = vpop.f32.mrb[0].mxu0
    %2256 = vmatprep.mubr.f32.mxu0 0.0
    %v2257 = vand.u32 %v1679, 4294901760
    %v2258 = vsub.f32 %v1679, %v2257
    %2259 = vmatmul.mubr.f32.gmra.mrb[0].mxu0 %v2258
    %v2260 = vpop.f32.mrb[0].mxu0
    %v2261 = vadd.f32 %v2079, %v2260
    %v2262 = vpop.f32.mrb[0].mxu0
    %2263 = vmatprep.mubr.f32.mxu0 0.0
    %v2264 = vand.u32 %v1682, 4294901760
    %v2265 = vsub.f32 %v1682, %v2264
    %2266 = vmatmul.mubr.f32.gmra.mrb[0].mxu0 %v2265
    %v2267 = vpop.f32.mrb[0].mxu0
    %v2268 = vadd.f32 %v2085, %v2267
    %v2269 = vpop.f32.mrb[0].mxu0
    %2270 = vmatprep.mubr.f32.mxu0 0.0
    %v2271 = vand.u32 %v1685, 4294901760
    %v2272 = vsub.f32 %v1685, %v2271
    %2273 = vmatmul.mubr.f32.gmra.mrb[0].mxu0 %v2272
    %v2274 = vpop.f32.mrb[0].mxu0
    %v2275 = vadd.f32 %v2091, %v2274
    %v2276 = vpop.f32.mrb[0].mxu0
    %2277 = vmatprep.mubr.f32.mxu0 0.0
    %v2278 = vand.u32 %v1688, 4294901760
    %v2279 = vsub.f32 %v1688, %v2278
    %2280 = vmatmul.mubr.f32.gmra.mrb[0].mxu0 %v2279
    %v2281 = vpop.f32.mrb[0].mxu0
    %v2282 = vadd.f32 %v2097, %v2281
    %v2283 = vpop.f32.mrb[0].mxu0
    %2284 = vdwg.mxu0
    %2285 = vmatprep.subr.mxu0 0.0
    %v2286 = vand.u32 %v1637, 4294901760
    %2287 = vmatpush1.msra.mxu0 %v2286
    %2288 = vmatprep.subr.mxu0 0.0
    %v2289 = vand.u32 %v1638, 4294901760
    %2290 = vmatpush1.msra.mxu0 %v2289
    %2291 = vmatprep.subr.mxu0 0.0
    %v2292 = vand.u32 %v1639, 4294901760
    %2293 = vmatpush1.msra.mxu0 %v2292
    %2294 = vmatprep.subr.mxu0 0.0
    %v2295 = vand.u32 %v1640, 4294901760
    %2296 = vmatpush1.msra.mxu0 %v2295
    %2297 = vmatprep.subr.mxu0 0.0
    %2298 = vmatpush1.msra.mxu0 0.0
    %2299 = vmatprep.subr.mxu0 0.0
    %2300 = vmatpush1.msra.mxu0 0.0
    %2301 = vmatprep.subr.mxu0 0.0
    %2302 = vmatpush1.msra.mxu0 0.0
    %2303 = vmatprep.subr.mxu0 0.0
    %2304 = vmatpush1.msra.mxu0 0.0
    %2305 = vmatprep.subr.mxu0 0.0
    %2306 = vmatpush1.msra.mxu0 0.0
    %2307 = vmatprep.subr.mxu0 0.0
    %2308 = vmatpush1.msra.mxu0 0.0
    %2309 = vmatprep.subr.mxu0 0.0
    %2310 = vmatpush1.msra.mxu0 0.0
    %2311 = vmatprep.subr.mxu0 0.0
    %2312 = vmatpush1.msra.mxu0 0.0
    %2313 = vmatprep.subr.mxu0 0.0
    %2314 = vmatpush1.msra.mxu0 0.0
    %2315 = vmatprep.subr.mxu0 0.0
    %2316 = vmatpush1.msra.mxu0 0.0
    %2317 = vmatprep.subr.mxu0 0.0
    %2318 = vmatpush1.msra.mxu0 0.0
    %2319 = vmatprep.subr.mxu0 0.0
    %2320 = vmatpush1.msra.mxu0 0.0
    %2321 = vmatprep.subr.mxu0 0.0
    %2322 = vmatpush1.msra.mxu0 0.0
    %2323 = vmatprep.subr.mxu0 0.0
    %2324 = vmatpush1.msra.mxu0 0.0
    %2325 = vmatprep.subr.mxu0 0.0
    %2326 = vmatpush1.msra.mxu0 0.0
    %2327 = vmatprep.subr.mxu0 0.0
    %2328 = vmatpush1.msra.mxu0 0.0
    %2329 = vmatprep.subr.mxu0 0.0
    %2330 = vmatpush1.msra.mxu0 0.0
    %2331 = vmatprep.subr.mxu0 0.0
    %2332 = vmatpush1.msra.mxu0 0.0
    %2333 = vmatprep.subr.mxu0 0.0
    %2334 = vmatpush1.msra.mxu0 0.0
    %2335 = vmatprep.subr.mxu0 0.0
    %2336 = vmatpush1.msra.mxu0 0.0
    %2337 = vmatprep.subr.mxu0 0.0
    %2338 = vmatpush1.msra.mxu0 0.0
    %2339 = vmatprep.subr.mxu0 0.0
    %2340 = vmatpush1.msra.mxu0 0.0
    %2341 = vmatprep.subr.mxu0 0.0
    %2342 = vmatpush1.msra.mxu0 0.0
    %2343 = vmatprep.subr.mxu0 0.0
    %2344 = vmatpush1.msra.mxu0 0.0
    %2345 = vmatprep.subr.mxu0 0.0
    %2346 = vmatpush1.msra.mxu0 0.0
    %2347 = vmatprep.subr.mxu0 0.0
    %2348 = vmatpush1.msra.mxu0 0.0
    %2349 = vmatprep.subr.mxu0 0.0
    %2350 = vmatpush1.msra.mxu0 0.0
    %2351 = vmatprep.subr.mxu0 0.0
    %2352 = vmatpush1.msra.mxu0 0.0
    %2353 = vmatprep.mubr.f32.mxu0 0.0
    %v2354 = vand.u32 %v1643, 4294901760
    %v2355 = vsub.f32 %v1643, %v2354
    %v2356 = vand.u32 %v2355, 4294901760
    %2357 = vmatmul.mubr.f32.gmra.mrb[0].mxu0 %v2356
    %v2358 = vpop.f32.mrb[0].mxu0
    %v2359 = vadd.f32 %v2177, %v2358
    %v2360 = vpop.f32.mrb[0].mxu0
    %2361 = vmatprep.mubr.f32.mxu0 0.0
    %v2362 = vand.u32 %v1646, 4294901760
    %v2363 = vsub.f32 %v1646, %v2362
    %v2364 = vand.u32 %v2363, 4294901760
    %2365 = vmatmul.mubr.f32.gmra.mrb[0].mxu0 %v2364
    %v2366 = vpop.f32.mrb[0].mxu0
    %v2367 = vadd.f32 %v2184, %v2366
    %v2368 = vpop.f32.mrb[0].mxu0
    %2369 = vmatprep.mubr.f32.mxu0 0.0
    %v2370 = vand.u32 %v1649, 4294901760
    %v2371 = vsub.f32 %v1649, %v2370
    %v2372 = vand.u32 %v2371, 4294901760
    %2373 = vmatmul.mubr.f32.gmra.mrb[0].mxu0 %v2372
    %v2374 = vpop.f32.mrb[0].mxu0
    %v2375 = vadd.f32 %v2191, %v2374
    %v2376 = vpop.f32.mrb[0].mxu0
    %2377 = vmatprep.mubr.f32.mxu0 0.0
    %v2378 = vand.u32 %v1652, 4294901760
    %v2379 = vsub.f32 %v1652, %v2378
    %v2380 = vand.u32 %v2379, 4294901760
    %2381 = vmatmul.mubr.f32.gmra.mrb[0].mxu0 %v2380
    %v2382 = vpop.f32.mrb[0].mxu0
    %v2383 = vadd.f32 %v2198, %v2382
    %v2384 = vpop.f32.mrb[0].mxu0
    %2385 = vmatprep.mubr.f32.mxu0 0.0
    %v2386 = vand.u32 %v1655, 4294901760
    %v2387 = vsub.f32 %v1655, %v2386
    %v2388 = vand.u32 %v2387, 4294901760
    %2389 = vmatmul.mubr.f32.gmra.mrb[0].mxu0 %v2388
    %v2390 = vpop.f32.mrb[0].mxu0
    %v2391 = vadd.f32 %v2205, %v2390
    %v2392 = vpop.f32.mrb[0].mxu0
    %2393 = vmatprep.mubr.f32.mxu0 0.0
    %v2394 = vand.u32 %v1658, 4294901760
    %v2395 = vsub.f32 %v1658, %v2394
    %v2396 = vand.u32 %v2395, 4294901760
    %2397 = vmatmul.mubr.f32.gmra.mrb[0].mxu0 %v2396
    %v2398 = vpop.f32.mrb[0].mxu0
    %v2399 = vadd.f32 %v2212, %v2398
    %v2400 = vpop.f32.mrb[0].mxu0
    %2401 = vmatprep.mubr.f32.mxu0 0.0
    %v2402 = vand.u32 %v1661, 4294901760
    %v2403 = vsub.f32 %v1661, %v2402
    %v2404 = vand.u32 %v2403, 4294901760
    %2405 = vmatmul.mubr.f32.gmra.mrb[0].mxu0 %v2404
    %v2406 = vpop.f32.mrb[0].mxu0
    %v2407 = vadd.f32 %v2219, %v2406
    %v2408 = vpop.f32.mrb[0].mxu0
    %2409 = vmatprep.mubr.f32.mxu0 0.0
    %v2410 = vand.u32 %v1664, 4294901760
    %v2411 = vsub.f32 %v1664, %v2410
    %v2412 = vand.u32 %v2411, 4294901760
    %2413 = vmatmul.mubr.f32.gmra.mrb[0].mxu0 %v2412
    %v2414 = vpop.f32.mrb[0].mxu0
    %v2415 = vadd.f32 %v2226, %v2414
    %v2416 = vpop.f32.mrb[0].mxu0
    %2417 = vmatprep.mubr.f32.mxu0 0.0
    %v2418 = vand.u32 %v1667, 4294901760
    %v2419 = vsub.f32 %v1667, %v2418
    %v2420 = vand.u32 %v2419, 4294901760
    %2421 = vmatmul.mubr.f32.gmra.mrb[0].mxu0 %v2420
    %v2422 = vpop.f32.mrb[0].mxu0
    %v2423 = vadd.f32 %v2233, %v2422
    %v2424 = vpop.f32.mrb[0].mxu0
    %2425 = vmatprep.mubr.f32.mxu0 0.0
    %v2426 = vand.u32 %v1670, 4294901760
    %v2427 = vsub.f32 %v1670, %v2426
    %v2428 = vand.u32 %v2427, 4294901760
    %2429 = vmatmul.mubr.f32.gmra.mrb[0].mxu0 %v2428
    %v2430 = vpop.f32.mrb[0].mxu0
    %v2431 = vadd.f32 %v2240, %v2430
    %v2432 = vpop.f32.mrb[0].mxu0
    %2433 = vmatprep.mubr.f32.mxu0 0.0
    %v2434 = vand.u32 %v1673, 4294901760
    %v2435 = vsub.f32 %v1673, %v2434
    %v2436 = vand.u32 %v2435, 4294901760
    %2437 = vmatmul.mubr.f32.gmra.mrb[0].mxu0 %v2436
    %v2438 = vpop.f32.mrb[0].mxu0
    %v2439 = vadd.f32 %v2247, %v2438
    %v2440 = vpop.f32.mrb[0].mxu0
    %2441 = vmatprep.mubr.f32.mxu0 0.0
    %v2442 = vand.u32 %v1676, 4294901760
    %v2443 = vsub.f32 %v1676, %v2442
    %v2444 = vand.u32 %v2443, 4294901760
    %2445 = vmatmul.mubr.f32.gmra.mrb[0].mxu0 %v2444
    %v2446 = vpop.f32.mrb[0].mxu0
    %v2447 = vadd.f32 %v2254, %v2446
    %v2448 = vpop.f32.mrb[0].mxu0
    %2449 = vmatprep.mubr.f32.mxu0 0.0
    %v2450 = vand.u32 %v1679, 4294901760
    %v2451 = vsub.f32 %v1679, %v2450
    %v2452 = vand.u32 %v2451, 4294901760
    %2453 = vmatmul.mubr.f32.gmra.mrb[0].mxu0 %v2452
    %v2454 = vpop.f32.mrb[0].mxu0
    %v2455 = vadd.f32 %v2261, %v2454
    %v2456 = vpop.f32.mrb[0].mxu0
    %2457 = vmatprep.mubr.f32.mxu0 0.0
    %v2458 = vand.u32 %v1682, 4294901760
    %v2459 = vsub.f32 %v1682, %v2458
    %v2460 = vand.u32 %v2459, 4294901760
    %2461 = vmatmul.mubr.f32.gmra.mrb[0].mxu0 %v2460
    %v2462 = vpop.f32.mrb[0].mxu0
    %v2463 = vadd.f32 %v2268, %v2462
    %v2464 = vpop.f32.mrb[0].mxu0
    %2465 = vmatprep.mubr.f32.mxu0 0.0
    %v2466 = vand.u32 %v1685, 4294901760
    %v2467 = vsub.f32 %v1685, %v2466
    %v2468 = vand.u32 %v2467, 4294901760
    %2469 = vmatmul.mubr.f32.gmra.mrb[0].mxu0 %v2468
    %v2470 = vpop.f32.mrb[0].mxu0
    %v2471 = vadd.f32 %v2275, %v2470
    %v2472 = vpop.f32.mrb[0].mxu0
    %2473 = vmatprep.mubr.f32.mxu0 0.0
    %v2474 = vand.u32 %v1688, 4294901760
    %v2475 = vsub.f32 %v1688, %v2474
    %v2476 = vand.u32 %v2475, 4294901760
    %2477 = vmatmul.mubr.f32.gmra.mrb[0].mxu0 %v2476
    %v2478 = vpop.f32.mrb[0].mxu0
    %v2479 = vadd.f32 %v2282, %v2478
    %v2480 = vpop.f32.mrb[0].mxu0
    %2481 = vdwg.mxu0
    %2482 = vmatprep.subr.mxu0 0.0
    %v2483 = vand.u32 %v1637, 4294901760
    %v2484 = vsub.f32 %v1637, %v2483
    %v2485 = vand.u32 %v2484, 4294901760
    %2486 = vmatpush1.msra.mxu0 %v2485
    %2487 = vmatprep.subr.mxu0 0.0
    %v2488 = vand.u32 %v1638, 4294901760
    %v2489 = vsub.f32 %v1638, %v2488
    %v2490 = vand.u32 %v2489, 4294901760
    %2491 = vmatpush1.msra.mxu0 %v2490
    %2492 = vmatprep.subr.mxu0 0.0
    %v2493 = vand.u32 %v1639, 4294901760
    %v2494 = vsub.f32 %v1639, %v2493
    %v2495 = vand.u32 %v2494, 4294901760
    %2496 = vmatpush1.msra.mxu0 %v2495
    %2497 = vmatprep.subr.mxu0 0.0
    %v2498 = vand.u32 %v1640, 4294901760
    %v2499 = vsub.f32 %v1640, %v2498
    %v2500 = vand.u32 %v2499, 4294901760
    %2501 = vmatpush1.msra.mxu0 %v2500
    %2502 = vmatprep.subr.mxu0 0.0
    %2503 = vmatpush1.msra.mxu0 0.0
    %2504 = vmatprep.subr.mxu0 0.0
    %2505 = vmatpush1.msra.mxu0 0.0
    %2506 = vmatprep.subr.mxu0 0.0
    %2507 = vmatpush1.msra.mxu0 0.0
    %2508 = vmatprep.subr.mxu0 0.0
    %2509 = vmatpush1.msra.mxu0 0.0
    %2510 = vmatprep.subr.mxu0 0.0
    %2511 = vmatpush1.msra.mxu0 0.0
    %2512 = vmatprep.subr.mxu0 0.0
    %2513 = vmatpush1.msra.mxu0 0.0
    %2514 = vmatprep.subr.mxu0 0.0
    %2515 = vmatpush1.msra.mxu0 0.0
    %2516 = vmatprep.subr.mxu0 0.0
    %2517 = vmatpush1.msra.mxu0 0.0
    %2518 = vmatprep.subr.mxu0 0.0
    %2519 = vmatpush1.msra.mxu0 0.0
    %2520 = vmatprep.subr.mxu0 0.0
    %2521 = vmatpush1.msra.mxu0 0.0
    %2522 = vmatprep.subr.mxu0 0.0
    %2523 = vmatpush1.msra.mxu0 0.0
    %2524 = vmatprep.subr.mxu0 0.0
    %2525 = vmatpush1.msra.mxu0 0.0
    %2526 = vmatprep.subr.mxu0 0.0
    %2527 = vmatpush1.msra.mxu0 0.0
    %2528 = vmatprep.subr.mxu0 0.0
    %2529 = vmatpush1.msra.mxu0 0.0
    %2530 = vmatprep.subr.mxu0 0.0
    %2531 = vmatpush1.msra.mxu0 0.0
    %2532 = vmatprep.subr.mxu0 0.0
    %2533 = vmatpush1.msra.mxu0 0.0
    %2534 = vmatprep.subr.mxu0 0.0
    %2535 = vmatpush1.msra.mxu0 0.0
    %2536 = vmatprep.subr.mxu0 0.0
    %2537 = vmatpush1.msra.mxu0 0.0
    %2538 = vmatprep.subr.mxu0 0.0
    %2539 = vmatpush1.msra.mxu0 0.0
    %2540 = vmatprep.subr.mxu0 0.0
    %2541 = vmatpush1.msra.mxu0 0.0
    %2542 = vmatprep.subr.mxu0 0.0
    %2543 = vmatpush1.msra.mxu0 0.0
    %2544 = vmatprep.subr.mxu0 0.0
    %2545 = vmatpush1.msra.mxu0 0.0
    %2546 = vmatprep.subr.mxu0 0.0
    %2547 = vmatpush1.msra.mxu0 0.0
    %2548 = vmatprep.subr.mxu0 0.0
    %2549 = vmatpush1.msra.mxu0 0.0
    %2550 = vmatprep.subr.mxu0 0.0
    %2551 = vmatpush1.msra.mxu0 0.0
    %2552 = vmatprep.subr.mxu0 0.0
    %2553 = vmatpush1.msra.mxu0 0.0
    %2554 = vmatprep.subr.mxu0 0.0
    %2555 = vmatpush1.msra.mxu0 0.0
    %2556 = vmatprep.subr.mxu0 0.0
    %2557 = vmatpush1.msra.mxu0 0.0
    %2558 = vmatprep.mubr.f32.mxu0 0.0
    %v2559 = vand.u32 %v1643, 4294901760
    %2560 = vmatmul.mubr.f32.gmra.mrb[0].mxu0 %v2559
    %v2561 = vpop.f32.mrb[0].mxu0
    %v2562 = vadd.f32 %v2359, %v2561
    %v2563 = vpop.f32.mrb[0].mxu0
    %2564 = vmatprep.mubr.f32.mxu0 0.0
    %v2565 = vand.u32 %v1646, 4294901760
    %2566 = vmatmul.mubr.f32.gmra.mrb[0].mxu0 %v2565
    %v2567 = vpop.f32.mrb[0].mxu0
    %v2568 = vadd.f32 %v2367, %v2567
    %v2569 = vpop.f32.mrb[0].mxu0
    %2570 = vmatprep.mubr.f32.mxu0 0.0
    %v2571 = vand.u32 %v1649, 4294901760
    %2572 = vmatmul.mubr.f32.gmra.mrb[0].mxu0 %v2571
    %v2573 = vpop.f32.mrb[0].mxu0
    %v2574 = vadd.f32 %v2375, %v2573
    %v2575 = vpop.f32.mrb[0].mxu0
    %2576 = vmatprep.mubr.f32.mxu0 0.0
    %v2577 = vand.u32 %v1652, 4294901760
    %2578 = vmatmul.mubr.f32.gmra.mrb[0].mxu0 %v2577
    %v2579 = vpop.f32.mrb[0].mxu0
    %v2580 = vadd.f32 %v2383, %v2579
    %v2581 = vpop.f32.mrb[0].mxu0
    %2582 = vmatprep.mubr.f32.mxu0 0.0
    %v2583 = vand.u32 %v1655, 4294901760
    %2584 = vmatmul.mubr.f32.gmra.mrb[0].mxu0 %v2583
    %v2585 = vpop.f32.mrb[0].mxu0
    %v2586 = vadd.f32 %v2391, %v2585
    %v2587 = vpop.f32.mrb[0].mxu0
    %2588 = vmatprep.mubr.f32.mxu0 0.0
    %v2589 = vand.u32 %v1658, 4294901760
    %2590 = vmatmul.mubr.f32.gmra.mrb[0].mxu0 %v2589
    %v2591 = vpop.f32.mrb[0].mxu0
    %v2592 = vadd.f32 %v2399, %v2591
    %v2593 = vpop.f32.mrb[0].mxu0
    %2594 = vmatprep.mubr.f32.mxu0 0.0
    %v2595 = vand.u32 %v1661, 4294901760
    %2596 = vmatmul.mubr.f32.gmra.mrb[0].mxu0 %v2595
    %v2597 = vpop.f32.mrb[0].mxu0
    %v2598 = vadd.f32 %v2407, %v2597
    %v2599 = vpop.f32.mrb[0].mxu0
    %2600 = vmatprep.mubr.f32.mxu0 0.0
    %v2601 = vand.u32 %v1664, 4294901760
    %2602 = vmatmul.mubr.f32.gmra.mrb[0].mxu0 %v2601
    %v2603 = vpop.f32.mrb[0].mxu0
    %v2604 = vadd.f32 %v2415, %v2603
    %v2605 = vpop.f32.mrb[0].mxu0
    %2606 = vmatprep.mubr.f32.mxu0 0.0
    %v2607 = vand.u32 %v1667, 4294901760
    %2608 = vmatmul.mubr.f32.gmra.mrb[0].mxu0 %v2607
    %v2609 = vpop.f32.mrb[0].mxu0
    %v2610 = vadd.f32 %v2423, %v2609
    %v2611 = vpop.f32.mrb[0].mxu0
    %2612 = vmatprep.mubr.f32.mxu0 0.0
    %v2613 = vand.u32 %v1670, 4294901760
    %2614 = vmatmul.mubr.f32.gmra.mrb[0].mxu0 %v2613
    %v2615 = vpop.f32.mrb[0].mxu0
    %v2616 = vadd.f32 %v2431, %v2615
    %v2617 = vpop.f32.mrb[0].mxu0
    %2618 = vmatprep.mubr.f32.mxu0 0.0
    %v2619 = vand.u32 %v1673, 4294901760
    %2620 = vmatmul.mubr.f32.gmra.mrb[0].mxu0 %v2619
    %v2621 = vpop.f32.mrb[0].mxu0
    %v2622 = vadd.f32 %v2439, %v2621
    %v2623 = vpop.f32.mrb[0].mxu0
    %2624 = vmatprep.mubr.f32.mxu0 0.0
    %v2625 = vand.u32 %v1676, 4294901760
    %2626 = vmatmul.mubr.f32.gmra.mrb[0].mxu0 %v2625
    %v2627 = vpop.f32.mrb[0].mxu0
    %v2628 = vadd.f32 %v2447, %v2627
    %v2629 = vpop.f32.mrb[0].mxu0
    %2630 = vmatprep.mubr.f32.mxu0 0.0
    %v2631 = vand.u32 %v1679, 4294901760
    %2632 = vmatmul.mubr.f32.gmra.mrb[0].mxu0 %v2631
    %v2633 = vpop.f32.mrb[0].mxu0
    %v2634 = vadd.f32 %v2455, %v2633
    %v2635 = vpop.f32.mrb[0].mxu0
    %2636 = vmatprep.mubr.f32.mxu0 0.0
    %v2637 = vand.u32 %v1682, 4294901760
    %2638 = vmatmul.mubr.f32.gmra.mrb[0].mxu0 %v2637
    %v2639 = vpop.f32.mrb[0].mxu0
    %v2640 = vadd.f32 %v2463, %v2639
    %v2641 = vpop.f32.mrb[0].mxu0
    %2642 = vmatprep.mubr.f32.mxu0 0.0
    %v2643 = vand.u32 %v1685, 4294901760
    %2644 = vmatmul.mubr.f32.gmra.mrb[0].mxu0 %v2643
    %v2645 = vpop.f32.mrb[0].mxu0
    %v2646 = vadd.f32 %v2471, %v2645
    %v2647 = vpop.f32.mrb[0].mxu0
    %2648 = vmatprep.mubr.f32.mxu0 0.0
    %v2649 = vand.u32 %v1688, 4294901760
    %2650 = vmatmul.mubr.f32.gmra.mrb[0].mxu0 %v2649
    %v2651 = vpop.f32.mrb[0].mxu0
    %v2652 = vadd.f32 %v2479, %v2651
    %v2653 = vpop.f32.mrb[0].mxu0
    %2654 = vdwg.mxu0
    %2655 = vmatprep.subr.mxu0 0.0
    %v2656 = vand.u32 %v1637, 4294901760
    %2657 = vmatpush1.msra.mxu0 %v2656
    %2658 = vmatprep.subr.mxu0 0.0
    %v2659 = vand.u32 %v1638, 4294901760
    %2660 = vmatpush1.msra.mxu0 %v2659
    %2661 = vmatprep.subr.mxu0 0.0
    %v2662 = vand.u32 %v1639, 4294901760
    %2663 = vmatpush1.msra.mxu0 %v2662
    %2664 = vmatprep.subr.mxu0 0.0
    %v2665 = vand.u32 %v1640, 4294901760
    %2666 = vmatpush1.msra.mxu0 %v2665
    %2667 = vmatprep.subr.mxu0 0.0
    %2668 = vmatpush1.msra.mxu0 0.0
    %2669 = vmatprep.subr.mxu0 0.0
    %2670 = vmatpush1.msra.mxu0 0.0
    %2671 = vmatprep.subr.mxu0 0.0
    %2672 = vmatpush1.msra.mxu0 0.0
    %2673 = vmatprep.subr.mxu0 0.0
    %2674 = vmatpush1.msra.mxu0 0.0
    %2675 = vmatprep.subr.mxu0 0.0
    %2676 = vmatpush1.msra.mxu0 0.0
    %2677 = vmatprep.subr.mxu0 0.0
    %2678 = vmatpush1.msra.mxu0 0.0
    %2679 = vmatprep.subr.mxu0 0.0
    %2680 = vmatpush1.msra.mxu0 0.0
    %2681 = vmatprep.subr.mxu0 0.0
    %2682 = vmatpush1.msra.mxu0 0.0
    %2683 = vmatprep.subr.mxu0 0.0
    %2684 = vmatpush1.msra.mxu0 0.0
    %2685 = vmatprep.subr.mxu0 0.0
    %2686 = vmatpush1.msra.mxu0 0.0
    %2687 = vmatprep.subr.mxu0 0.0
    %2688 = vmatpush1.msra.mxu0 0.0
    %2689 = vmatprep.subr.mxu0 0.0
    %2690 = vmatpush1.msra.mxu0 0.0
    %2691 = vmatprep.subr.mxu0 0.0
    %2692 = vmatpush1.msra.mxu0 0.0
    %2693 = vmatprep.subr.mxu0 0.0
    %2694 = vmatpush1.msra.mxu0 0.0
    %2695 = vmatprep.subr.mxu0 0.0
    %2696 = vmatpush1.msra.mxu0 0.0
    %2697 = vmatprep.subr.mxu0 0.0
    %2698 = vmatpush1.msra.mxu0 0.0
    %2699 = vmatprep.subr.mxu0 0.0
    %2700 = vmatpush1.msra.mxu0 0.0
    %2701 = vmatprep.subr.mxu0 0.0
    %2702 = vmatpush1.msra.mxu0 0.0
    %2703 = vmatprep.subr.mxu0 0.0
    %2704 = vmatpush1.msra.mxu0 0.0
    %2705 = vmatprep.subr.mxu0 0.0
    %2706 = vmatpush1.msra.mxu0 0.0
    %2707 = vmatprep.subr.mxu0 0.0
    %2708 = vmatpush1.msra.mxu0 0.0
    %2709 = vmatprep.subr.mxu0 0.0
    %2710 = vmatpush1.msra.mxu0 0.0
    %2711 = vmatprep.subr.mxu0 0.0
    %2712 = vmatpush1.msra.mxu0 0.0
    %2713 = vmatprep.subr.mxu0 0.0
    %2714 = vmatpush1.msra.mxu0 0.0
    %2715 = vmatprep.subr.mxu0 0.0
    %2716 = vmatpush1.msra.mxu0 0.0
    %2717 = vmatprep.subr.mxu0 0.0
    %2718 = vmatpush1.msra.mxu0 0.0
    %2719 = vmatprep.subr.mxu0 0.0
    %2720 = vmatpush1.msra.mxu0 0.0
    %2721 = vmatprep.subr.mxu0 0.0
    %2722 = vmatpush1.msra.mxu0 0.0
    %2723 = vmatprep.mubr.f32.mxu0 0.0
    %v2724 = vand.u32 %v1643, 4294901760
    %2725 = vmatmul.mubr.f32.gmra.mrb[0].mxu0 %v2724
    %v2726 = vpop.f32.mrb[0].mxu0
    %v2727 = vadd.f32 %v2562, %v2726
    %v2728 = vpop.f32.mrb[0].mxu0
    %2729 = vmatprep.mubr.f32.mxu0 0.0
    %v2730 = vand.u32 %v1646, 4294901760
    %2731 = vmatmul.mubr.f32.gmra.mrb[0].mxu0 %v2730
    %v2732 = vpop.f32.mrb[0].mxu0
    %v2733 = vadd.f32 %v2568, %v2732
    %v2734 = vpop.f32.mrb[0].mxu0
    %2735 = vmatprep.mubr.f32.mxu0 0.0
    %v2736 = vand.u32 %v1649, 4294901760
    %2737 = vmatmul.mubr.f32.gmra.mrb[0].mxu0 %v2736
    %v2738 = vpop.f32.mrb[0].mxu0
    %v2739 = vadd.f32 %v2574, %v2738
    %v2740 = vpop.f32.mrb[0].mxu0
    %2741 = vmatprep.mubr.f32.mxu0 0.0
    %v2742 = vand.u32 %v1652, 4294901760
    %2743 = vmatmul.mubr.f32.gmra.mrb[0].mxu0 %v2742
    %v2744 = vpop.f32.mrb[0].mxu0
    %v2745 = vadd.f32 %v2580, %v2744
    %v2746 = vpop.f32.mrb[0].mxu0
    %2747 = vmatprep.mubr.f32.mxu0 0.0
    %v2748 = vand.u32 %v1655, 4294901760
    %2749 = vmatmul.mubr.f32.gmra.mrb[0].mxu0 %v2748
    %v2750 = vpop.f32.mrb[0].mxu0
    %v2751 = vadd.f32 %v2586, %v2750
    %v2752 = vpop.f32.mrb[0].mxu0
    %2753 = vmatprep.mubr.f32.mxu0 0.0
    %v2754 = vand.u32 %v1658, 4294901760
    %2755 = vmatmul.mubr.f32.gmra.mrb[0].mxu0 %v2754
    %v2756 = vpop.f32.mrb[0].mxu0
    %v2757 = vadd.f32 %v2592, %v2756
    %v2758 = vpop.f32.mrb[0].mxu0
    %2759 = vmatprep.mubr.f32.mxu0 0.0
    %v2760 = vand.u32 %v1661, 4294901760
    %2761 = vmatmul.mubr.f32.gmra.mrb[0].mxu0 %v2760
    %v2762 = vpop.f32.mrb[0].mxu0
    %v2763 = vadd.f32 %v2598, %v2762
    %v2764 = vpop.f32.mrb[0].mxu0
    %2765 = vmatprep.mubr.f32.mxu0 0.0
    %v2766 = vand.u32 %v1664, 4294901760
    %2767 = vmatmul.mubr.f32.gmra.mrb[0].mxu0 %v2766
    %v2768 = vpop.f32.mrb[0].mxu0
    %v2769 = vadd.f32 %v2604, %v2768
    %v2770 = vpop.f32.mrb[0].mxu0
    %2771 = vmatprep.mubr.f32.mxu0 0.0
    %v2772 = vand.u32 %v1667, 4294901760
    %2773 = vmatmul.mubr.f32.gmra.mrb[0].mxu0 %v2772
    %v2774 = vpop.f32.mrb[0].mxu0
    %v2775 = vadd.f32 %v2610, %v2774
    %v2776 = vpop.f32.mrb[0].mxu0
    %2777 = vmatprep.mubr.f32.mxu0 0.0
    %v2778 = vand.u32 %v1670, 4294901760
    %2779 = vmatmul.mubr.f32.gmra.mrb[0].mxu0 %v2778
    %v2780 = vpop.f32.mrb[0].mxu0
    %v2781 = vadd.f32 %v2616, %v2780
    %v2782 = vpop.f32.mrb[0].mxu0
    %2783 = vmatprep.mubr.f32.mxu0 0.0
    %v2784 = vand.u32 %v1673, 4294901760
    %2785 = vmatmul.mubr.f32.gmra.mrb[0].mxu0 %v2784
    %v2786 = vpop.f32.mrb[0].mxu0
    %v2787 = vadd.f32 %v2622, %v2786
    %v2788 = vpop.f32.mrb[0].mxu0
    %2789 = vmatprep.mubr.f32.mxu0 0.0
    %v2790 = vand.u32 %v1676, 4294901760
    %2791 = vmatmul.mubr.f32.gmra.mrb[0].mxu0 %v2790
    %v2792 = vpop.f32.mrb[0].mxu0
    %v2793 = vadd.f32 %v2628, %v2792
    %v2794 = vpop.f32.mrb[0].mxu0
    %2795 = vmatprep.mubr.f32.mxu0 0.0
    %v2796 = vand.u32 %v1679, 4294901760
    %2797 = vmatmul.mubr.f32.gmra.mrb[0].mxu0 %v2796
    %v2798 = vpop.f32.mrb[0].mxu0
    %v2799 = vadd.f32 %v2634, %v2798
    %v2800 = vpop.f32.mrb[0].mxu0
    %2801 = vmatprep.mubr.f32.mxu0 0.0
    %v2802 = vand.u32 %v1682, 4294901760
    %2803 = vmatmul.mubr.f32.gmra.mrb[0].mxu0 %v2802
    %v2804 = vpop.f32.mrb[0].mxu0
    %v2805 = vadd.f32 %v2640, %v2804
    %v2806 = vpop.f32.mrb[0].mxu0
    %2807 = vmatprep.mubr.f32.mxu0 0.0
    %v2808 = vand.u32 %v1685, 4294901760
    %2809 = vmatmul.mubr.f32.gmra.mrb[0].mxu0 %v2808
    %v2810 = vpop.f32.mrb[0].mxu0
    %v2811 = vadd.f32 %v2646, %v2810
    %v2812 = vpop.f32.mrb[0].mxu0
    %2813 = vmatprep.mubr.f32.mxu0 0.0
    %v2814 = vand.u32 %v1688, 4294901760
    %2815 = vmatmul.mubr.f32.gmra.mrb[0].mxu0 %v2814
    %v2816 = vpop.f32.mrb[0].mxu0
    %v2817 = vadd.f32 %v2652, %v2816
    %v2818 = vpop.f32.mrb[0].mxu0
    %2819 = vdwg.mxu0
    %v2821 = vsel %vm1641, %v1617, 0
    %v2824 = vsel %vm1641, %v1618, 0
    %v2827 = vsel %vm1641, %v1619, 0
    %v2830 = vsel %vm1641, %v1620, 0
    %v2833 = vsel %vm1641, %v1621, 0
    %v2836 = vsel %vm1641, %v1622, 0
    %v2839 = vsel %vm1641, %v1623, 0
    %v2842 = vsel %vm1641, %v1624, 0
    %v2845 = vsel %vm1641, %v1625, 0
    %v2848 = vsel %vm1641, %v1626, 0
    %v2851 = vsel %vm1641, %v1627, 0
    %v2854 = vsel %vm1641, %v1628, 0
    %v2857 = vsel %vm1641, %v1629, 0
    %v2860 = vsel %vm1641, %v1630, 0
    %v2863 = vsel %vm1641, %v1631, 0
    %v2866 = vsel %vm1641, %v1632, 0
    %2868 = vmatprep.subr.mxu0 0.0
    %v2869 = vand.u32 %v1633, 4294901760
    %2870 = vmatpush1.msra.mxu0 %v2869
    %2871 = vmatprep.subr.mxu0 0.0
    %v2872 = vand.u32 %v1634, 4294901760
    %2873 = vmatpush1.msra.mxu0 %v2872
    %2874 = vmatprep.subr.mxu0 0.0
    %v2875 = vand.u32 %v1635, 4294901760
    %2876 = vmatpush1.msra.mxu0 %v2875
    %2877 = vmatprep.subr.mxu0 0.0
    %v2878 = vand.u32 %v1636, 4294901760
    %2879 = vmatpush1.msra.mxu0 %v2878
    %2880 = vmatprep.subr.mxu0 0.0
    %2881 = vmatpush1.msra.mxu0 0.0
    %2882 = vmatprep.subr.mxu0 0.0
    %2883 = vmatpush1.msra.mxu0 0.0
    %2884 = vmatprep.subr.mxu0 0.0
    %2885 = vmatpush1.msra.mxu0 0.0
    %2886 = vmatprep.subr.mxu0 0.0
    %2887 = vmatpush1.msra.mxu0 0.0
    %2888 = vmatprep.subr.mxu0 0.0
    %2889 = vmatpush1.msra.mxu0 0.0
    %2890 = vmatprep.subr.mxu0 0.0
    %2891 = vmatpush1.msra.mxu0 0.0
    %2892 = vmatprep.subr.mxu0 0.0
    %2893 = vmatpush1.msra.mxu0 0.0
    %2894 = vmatprep.subr.mxu0 0.0
    %2895 = vmatpush1.msra.mxu0 0.0
    %2896 = vmatprep.subr.mxu0 0.0
    %2897 = vmatpush1.msra.mxu0 0.0
    %2898 = vmatprep.subr.mxu0 0.0
    %2899 = vmatpush1.msra.mxu0 0.0
    %2900 = vmatprep.subr.mxu0 0.0
    %2901 = vmatpush1.msra.mxu0 0.0
    %2902 = vmatprep.subr.mxu0 0.0
    %2903 = vmatpush1.msra.mxu0 0.0
    %2904 = vmatprep.subr.mxu0 0.0
    %2905 = vmatpush1.msra.mxu0 0.0
    %2906 = vmatprep.subr.mxu0 0.0
    %2907 = vmatpush1.msra.mxu0 0.0
    %2908 = vmatprep.subr.mxu0 0.0
    %2909 = vmatpush1.msra.mxu0 0.0
    %2910 = vmatprep.subr.mxu0 0.0
    %2911 = vmatpush1.msra.mxu0 0.0
    %2912 = vmatprep.subr.mxu0 0.0
    %2913 = vmatpush1.msra.mxu0 0.0
    %2914 = vmatprep.subr.mxu0 0.0
    %2915 = vmatpush1.msra.mxu0 0.0
    %2916 = vmatprep.subr.mxu0 0.0
    %2917 = vmatpush1.msra.mxu0 0.0
    %2918 = vmatprep.subr.mxu0 0.0
    %2919 = vmatpush1.msra.mxu0 0.0
    %2920 = vmatprep.subr.mxu0 0.0
    %2921 = vmatpush1.msra.mxu0 0.0
    %2922 = vmatprep.subr.mxu0 0.0
    %2923 = vmatpush1.msra.mxu0 0.0
    %2924 = vmatprep.subr.mxu0 0.0
    %2925 = vmatpush1.msra.mxu0 0.0
    %2926 = vmatprep.subr.mxu0 0.0
    %2927 = vmatpush1.msra.mxu0 0.0
    %2928 = vmatprep.subr.mxu0 0.0
    %2929 = vmatpush1.msra.mxu0 0.0
    %2930 = vmatprep.subr.mxu0 0.0
    %2931 = vmatpush1.msra.mxu0 0.0
    %2932 = vmatprep.subr.mxu0 0.0
    %2933 = vmatpush1.msra.mxu0 0.0
    %2934 = vmatprep.subr.mxu0 0.0
    %2935 = vmatpush1.msra.mxu0 0.0
    %2936 = vmatprep.mubr.f32.mxu0 0.0
    %v2937 = vand.u32 %v2821, 4294901760
    %v2938 = vsub.f32 %v2821, %v2937
    %v2939 = vand.u32 %v2938, 4294901760
    %v2940 = vsub.f32 %v2938, %v2939
    %v2941 = vand.u32 %v2940, 4294901760
    %2942 = vmatmul.mubr.f32.gmra.mrb[0].mxu0 %v2941
    %v2943 = vpop.f32.mrb[0].mxu0
    %v2944 = vadd.f32 %v2727, %v2943
    %v2945 = vpop.f32.mrb[0].mxu0
    %2946 = vmatprep.mubr.f32.mxu0 0.0
    %v2947 = vand.u32 %v2824, 4294901760
    %v2948 = vsub.f32 %v2824, %v2947
    %v2949 = vand.u32 %v2948, 4294901760
    %v2950 = vsub.f32 %v2948, %v2949
    %v2951 = vand.u32 %v2950, 4294901760
    %2952 = vmatmul.mubr.f32.gmra.mrb[0].mxu0 %v2951
    %v2953 = vpop.f32.mrb[0].mxu0
    %v2954 = vadd.f32 %v2733, %v2953
    %v2955 = vpop.f32.mrb[0].mxu0
    %2956 = vmatprep.mubr.f32.mxu0 0.0
    %v2957 = vand.u32 %v2827, 4294901760
    %v2958 = vsub.f32 %v2827, %v2957
    %v2959 = vand.u32 %v2958, 4294901760
    %v2960 = vsub.f32 %v2958, %v2959
    %v2961 = vand.u32 %v2960, 4294901760
    %2962 = vmatmul.mubr.f32.gmra.mrb[0].mxu0 %v2961
    %v2963 = vpop.f32.mrb[0].mxu0
    %v2964 = vadd.f32 %v2739, %v2963
    %v2965 = vpop.f32.mrb[0].mxu0
    %2966 = vmatprep.mubr.f32.mxu0 0.0
    %v2967 = vand.u32 %v2830, 4294901760
    %v2968 = vsub.f32 %v2830, %v2967
    %v2969 = vand.u32 %v2968, 4294901760
    %v2970 = vsub.f32 %v2968, %v2969
    %v2971 = vand.u32 %v2970, 4294901760
    %2972 = vmatmul.mubr.f32.gmra.mrb[0].mxu0 %v2971
    %v2973 = vpop.f32.mrb[0].mxu0
    %v2974 = vadd.f32 %v2745, %v2973
    %v2975 = vpop.f32.mrb[0].mxu0
    %2976 = vmatprep.mubr.f32.mxu0 0.0
    %v2977 = vand.u32 %v2833, 4294901760
    %v2978 = vsub.f32 %v2833, %v2977
    %v2979 = vand.u32 %v2978, 4294901760
    %v2980 = vsub.f32 %v2978, %v2979
    %v2981 = vand.u32 %v2980, 4294901760
    %2982 = vmatmul.mubr.f32.gmra.mrb[0].mxu0 %v2981
    %v2983 = vpop.f32.mrb[0].mxu0
    %v2984 = vadd.f32 %v2751, %v2983
    %v2985 = vpop.f32.mrb[0].mxu0
    %2986 = vmatprep.mubr.f32.mxu0 0.0
    %v2987 = vand.u32 %v2836, 4294901760
    %v2988 = vsub.f32 %v2836, %v2987
    %v2989 = vand.u32 %v2988, 4294901760
    %v2990 = vsub.f32 %v2988, %v2989
    %v2991 = vand.u32 %v2990, 4294901760
    %2992 = vmatmul.mubr.f32.gmra.mrb[0].mxu0 %v2991
    %v2993 = vpop.f32.mrb[0].mxu0
    %v2994 = vadd.f32 %v2757, %v2993
    %v2995 = vpop.f32.mrb[0].mxu0
    %2996 = vmatprep.mubr.f32.mxu0 0.0
    %v2997 = vand.u32 %v2839, 4294901760
    %v2998 = vsub.f32 %v2839, %v2997
    %v2999 = vand.u32 %v2998, 4294901760
    %v3000 = vsub.f32 %v2998, %v2999
    %v3001 = vand.u32 %v3000, 4294901760
    %3002 = vmatmul.mubr.f32.gmra.mrb[0].mxu0 %v3001
    %v3003 = vpop.f32.mrb[0].mxu0
    %v3004 = vadd.f32 %v2763, %v3003
    %v3005 = vpop.f32.mrb[0].mxu0
    %3006 = vmatprep.mubr.f32.mxu0 0.0
    %v3007 = vand.u32 %v2842, 4294901760
    %v3008 = vsub.f32 %v2842, %v3007
    %v3009 = vand.u32 %v3008, 4294901760
    %v3010 = vsub.f32 %v3008, %v3009
    %v3011 = vand.u32 %v3010, 4294901760
    %3012 = vmatmul.mubr.f32.gmra.mrb[0].mxu0 %v3011
    %v3013 = vpop.f32.mrb[0].mxu0
    %v3014 = vadd.f32 %v2769, %v3013
    %v3015 = vpop.f32.mrb[0].mxu0
    %3016 = vmatprep.mubr.f32.mxu0 0.0
    %v3017 = vand.u32 %v2845, 4294901760
    %v3018 = vsub.f32 %v2845, %v3017
    %v3019 = vand.u32 %v3018, 4294901760
    %v3020 = vsub.f32 %v3018, %v3019
    %v3021 = vand.u32 %v3020, 4294901760
    %3022 = vmatmul.mubr.f32.gmra.mrb[0].mxu0 %v3021
    %v3023 = vpop.f32.mrb[0].mxu0
    %v3024 = vadd.f32 %v2775, %v3023
    %v3025 = vpop.f32.mrb[0].mxu0
    %3026 = vmatprep.mubr.f32.mxu0 0.0
    %v3027 = vand.u32 %v2848, 4294901760
    %v3028 = vsub.f32 %v2848, %v3027
    %v3029 = vand.u32 %v3028, 4294901760
    %v3030 = vsub.f32 %v3028, %v3029
    %v3031 = vand.u32 %v3030, 4294901760
    %3032 = vmatmul.mubr.f32.gmra.mrb[0].mxu0 %v3031
    %v3033 = vpop.f32.mrb[0].mxu0
    %v3034 = vadd.f32 %v2781, %v3033
    %v3035 = vpop.f32.mrb[0].mxu0
    %3036 = vmatprep.mubr.f32.mxu0 0.0
    %v3037 = vand.u32 %v2851, 4294901760
    %v3038 = vsub.f32 %v2851, %v3037
    %v3039 = vand.u32 %v3038, 4294901760
    %v3040 = vsub.f32 %v3038, %v3039
    %v3041 = vand.u32 %v3040, 4294901760
    %3042 = vmatmul.mubr.f32.gmra.mrb[0].mxu0 %v3041
    %v3043 = vpop.f32.mrb[0].mxu0
    %v3044 = vadd.f32 %v2787, %v3043
    %v3045 = vpop.f32.mrb[0].mxu0
    %3046 = vmatprep.mubr.f32.mxu0 0.0
    %v3047 = vand.u32 %v2854, 4294901760
    %v3048 = vsub.f32 %v2854, %v3047
    %v3049 = vand.u32 %v3048, 4294901760
    %v3050 = vsub.f32 %v3048, %v3049
    %v3051 = vand.u32 %v3050, 4294901760
    %3052 = vmatmul.mubr.f32.gmra.mrb[0].mxu0 %v3051
    %v3053 = vpop.f32.mrb[0].mxu0
    %v3054 = vadd.f32 %v2793, %v3053
    %v3055 = vpop.f32.mrb[0].mxu0
    %3056 = vmatprep.mubr.f32.mxu0 0.0
    %v3057 = vand.u32 %v2857, 4294901760
    %v3058 = vsub.f32 %v2857, %v3057
    %v3059 = vand.u32 %v3058, 4294901760
    %v3060 = vsub.f32 %v3058, %v3059
    %v3061 = vand.u32 %v3060, 4294901760
    %3062 = vmatmul.mubr.f32.gmra.mrb[0].mxu0 %v3061
    %v3063 = vpop.f32.mrb[0].mxu0
    %v3064 = vadd.f32 %v2799, %v3063
    %v3065 = vpop.f32.mrb[0].mxu0
    %3066 = vmatprep.mubr.f32.mxu0 0.0
    %v3067 = vand.u32 %v2860, 4294901760
    %v3068 = vsub.f32 %v2860, %v3067
    %v3069 = vand.u32 %v3068, 4294901760
    %v3070 = vsub.f32 %v3068, %v3069
    %v3071 = vand.u32 %v3070, 4294901760
    %3072 = vmatmul.mubr.f32.gmra.mrb[0].mxu0 %v3071
    %v3073 = vpop.f32.mrb[0].mxu0
    %v3074 = vadd.f32 %v2805, %v3073
    %v3075 = vpop.f32.mrb[0].mxu0
    %3076 = vmatprep.mubr.f32.mxu0 0.0
    %v3077 = vand.u32 %v2863, 4294901760
    %v3078 = vsub.f32 %v2863, %v3077
    %v3079 = vand.u32 %v3078, 4294901760
    %v3080 = vsub.f32 %v3078, %v3079
    %v3081 = vand.u32 %v3080, 4294901760
    %3082 = vmatmul.mubr.f32.gmra.mrb[0].mxu0 %v3081
    %v3083 = vpop.f32.mrb[0].mxu0
    %v3084 = vadd.f32 %v2811, %v3083
    %v3085 = vpop.f32.mrb[0].mxu0
    %3086 = vmatprep.mubr.f32.mxu0 0.0
    %v3087 = vand.u32 %v2866, 4294901760
    %v3088 = vsub.f32 %v2866, %v3087
    %v3089 = vand.u32 %v3088, 4294901760
    %v3090 = vsub.f32 %v3088, %v3089
    %v3091 = vand.u32 %v3090, 4294901760
    %3092 = vmatmul.mubr.f32.gmra.mrb[0].mxu0 %v3091
    %v3093 = vpop.f32.mrb[0].mxu0
    %v3094 = vadd.f32 %v2817, %v3093
    %v3095 = vpop.f32.mrb[0].mxu0
    %3096 = vdwg.mxu0
    %3097 = vmatprep.subr.mxu0 0.0
    %v3098 = vand.u32 %v1633, 4294901760
    %v3099 = vsub.f32 %v1633, %v3098
    %v3100 = vand.u32 %v3099, 4294901760
    %v3101 = vsub.f32 %v3099, %v3100
    %v3102 = vand.u32 %v3101, 4294901760
    %3103 = vmatpush1.msra.mxu0 %v3102
    %3104 = vmatprep.subr.mxu0 0.0
    %v3105 = vand.u32 %v1634, 4294901760
    %v3106 = vsub.f32 %v1634, %v3105
    %v3107 = vand.u32 %v3106, 4294901760
    %v3108 = vsub.f32 %v3106, %v3107
    %v3109 = vand.u32 %v3108, 4294901760
    %3110 = vmatpush1.msra.mxu0 %v3109
    %3111 = vmatprep.subr.mxu0 0.0
    %v3112 = vand.u32 %v1635, 4294901760
    %v3113 = vsub.f32 %v1635, %v3112
    %v3114 = vand.u32 %v3113, 4294901760
    %v3115 = vsub.f32 %v3113, %v3114
    %v3116 = vand.u32 %v3115, 4294901760
    %3117 = vmatpush1.msra.mxu0 %v3116
    %3118 = vmatprep.subr.mxu0 0.0
    %v3119 = vand.u32 %v1636, 4294901760
    %v3120 = vsub.f32 %v1636, %v3119
    %v3121 = vand.u32 %v3120, 4294901760
    %v3122 = vsub.f32 %v3120, %v3121
    %v3123 = vand.u32 %v3122, 4294901760
    %3124 = vmatpush1.msra.mxu0 %v3123
    %3125 = vmatprep.subr.mxu0 0.0
    %3126 = vmatpush1.msra.mxu0 0.0
    %3127 = vmatprep.subr.mxu0 0.0
    %3128 = vmatpush1.msra.mxu0 0.0
    %3129 = vmatprep.subr.mxu0 0.0
    %3130 = vmatpush1.msra.mxu0 0.0
    %3131 = vmatprep.subr.mxu0 0.0
    %3132 = vmatpush1.msra.mxu0 0.0
    %3133 = vmatprep.subr.mxu0 0.0
    %3134 = vmatpush1.msra.mxu0 0.0
    %3135 = vmatprep.subr.mxu0 0.0
    %3136 = vmatpush1.msra.mxu0 0.0
    %3137 = vmatprep.subr.mxu0 0.0
    %3138 = vmatpush1.msra.mxu0 0.0
    %3139 = vmatprep.subr.mxu0 0.0
    %3140 = vmatpush1.msra.mxu0 0.0
    %3141 = vmatprep.subr.mxu0 0.0
    %3142 = vmatpush1.msra.mxu0 0.0
    %3143 = vmatprep.subr.mxu0 0.0
    %3144 = vmatpush1.msra.mxu0 0.0
    %3145 = vmatprep.subr.mxu0 0.0
    %3146 = vmatpush1.msra.mxu0 0.0
    %3147 = vmatprep.subr.mxu0 0.0
    %3148 = vmatpush1.msra.mxu0 0.0
    %3149 = vmatprep.subr.mxu0 0.0
    %3150 = vmatpush1.msra.mxu0 0.0
    %3151 = vmatprep.subr.mxu0 0.0
    %3152 = vmatpush1.msra.mxu0 0.0
    %3153 = vmatprep.subr.mxu0 0.0
    %3154 = vmatpush1.msra.mxu0 0.0
    %3155 = vmatprep.subr.mxu0 0.0
    %3156 = vmatpush1.msra.mxu0 0.0
    %3157 = vmatprep.subr.mxu0 0.0
    %3158 = vmatpush1.msra.mxu0 0.0
    %3159 = vmatprep.subr.mxu0 0.0
    %3160 = vmatpush1.msra.mxu0 0.0
    %3161 = vmatprep.subr.mxu0 0.0
    %3162 = vmatpush1.msra.mxu0 0.0
    %3163 = vmatprep.subr.mxu0 0.0
    %3164 = vmatpush1.msra.mxu0 0.0
    %3165 = vmatprep.subr.mxu0 0.0
    %3166 = vmatpush1.msra.mxu0 0.0
    %3167 = vmatprep.subr.mxu0 0.0
    %3168 = vmatpush1.msra.mxu0 0.0
    %3169 = vmatprep.subr.mxu0 0.0
    %3170 = vmatpush1.msra.mxu0 0.0
    %3171 = vmatprep.subr.mxu0 0.0
    %3172 = vmatpush1.msra.mxu0 0.0
    %3173 = vmatprep.subr.mxu0 0.0
    %3174 = vmatpush1.msra.mxu0 0.0
    %3175 = vmatprep.subr.mxu0 0.0
    %3176 = vmatpush1.msra.mxu0 0.0
    %3177 = vmatprep.subr.mxu0 0.0
    %3178 = vmatpush1.msra.mxu0 0.0
    %3179 = vmatprep.subr.mxu0 0.0
    %3180 = vmatpush1.msra.mxu0 0.0
    %3181 = vmatprep.mubr.f32.mxu0 0.0
    %v3182 = vand.u32 %v2821, 4294901760
    %3183 = vmatmul.mubr.f32.gmra.mrb[0].mxu0 %v3182
    %v3184 = vpop.f32.mrb[0].mxu0
    %v3185 = vadd.f32 %v2944, %v3184
    %v3186 = vpop.f32.mrb[0].mxu0
    %3187 = vmatprep.mubr.f32.mxu0 0.0
    %v3188 = vand.u32 %v2824, 4294901760
    %3189 = vmatmul.mubr.f32.gmra.mrb[0].mxu0 %v3188
    %v3190 = vpop.f32.mrb[0].mxu0
    %v3191 = vadd.f32 %v2954, %v3190
    %v3192 = vpop.f32.mrb[0].mxu0
    %3193 = vmatprep.mubr.f32.mxu0 0.0
    %v3194 = vand.u32 %v2827, 4294901760
    %3195 = vmatmul.mubr.f32.gmra.mrb[0].mxu0 %v3194
    %v3196 = vpop.f32.mrb[0].mxu0
    %v3197 = vadd.f32 %v2964, %v3196
    %v3198 = vpop.f32.mrb[0].mxu0
    %3199 = vmatprep.mubr.f32.mxu0 0.0
    %v3200 = vand.u32 %v2830, 4294901760
    %3201 = vmatmul.mubr.f32.gmra.mrb[0].mxu0 %v3200
    %v3202 = vpop.f32.mrb[0].mxu0
    %v3203 = vadd.f32 %v2974, %v3202
    %v3204 = vpop.f32.mrb[0].mxu0
    %3205 = vmatprep.mubr.f32.mxu0 0.0
    %v3206 = vand.u32 %v2833, 4294901760
    %3207 = vmatmul.mubr.f32.gmra.mrb[0].mxu0 %v3206
    %v3208 = vpop.f32.mrb[0].mxu0
    %v3209 = vadd.f32 %v2984, %v3208
    %v3210 = vpop.f32.mrb[0].mxu0
    %3211 = vmatprep.mubr.f32.mxu0 0.0
    %v3212 = vand.u32 %v2836, 4294901760
    %3213 = vmatmul.mubr.f32.gmra.mrb[0].mxu0 %v3212
    %v3214 = vpop.f32.mrb[0].mxu0
    %v3215 = vadd.f32 %v2994, %v3214
    %v3216 = vpop.f32.mrb[0].mxu0
    %3217 = vmatprep.mubr.f32.mxu0 0.0
    %v3218 = vand.u32 %v2839, 4294901760
    %3219 = vmatmul.mubr.f32.gmra.mrb[0].mxu0 %v3218
    %v3220 = vpop.f32.mrb[0].mxu0
    %v3221 = vadd.f32 %v3004, %v3220
    %v3222 = vpop.f32.mrb[0].mxu0
    %3223 = vmatprep.mubr.f32.mxu0 0.0
    %v3224 = vand.u32 %v2842, 4294901760
    %3225 = vmatmul.mubr.f32.gmra.mrb[0].mxu0 %v3224
    %v3226 = vpop.f32.mrb[0].mxu0
    %v3227 = vadd.f32 %v3014, %v3226
    %v3228 = vpop.f32.mrb[0].mxu0
    %3229 = vmatprep.mubr.f32.mxu0 0.0
    %v3230 = vand.u32 %v2845, 4294901760
    %3231 = vmatmul.mubr.f32.gmra.mrb[0].mxu0 %v3230
    %v3232 = vpop.f32.mrb[0].mxu0
    %v3233 = vadd.f32 %v3024, %v3232
    %v3234 = vpop.f32.mrb[0].mxu0
    %3235 = vmatprep.mubr.f32.mxu0 0.0
    %v3236 = vand.u32 %v2848, 4294901760
    %3237 = vmatmul.mubr.f32.gmra.mrb[0].mxu0 %v3236
    %v3238 = vpop.f32.mrb[0].mxu0
    %v3239 = vadd.f32 %v3034, %v3238
    %v3240 = vpop.f32.mrb[0].mxu0
    %3241 = vmatprep.mubr.f32.mxu0 0.0
    %v3242 = vand.u32 %v2851, 4294901760
    %3243 = vmatmul.mubr.f32.gmra.mrb[0].mxu0 %v3242
    %v3244 = vpop.f32.mrb[0].mxu0
    %v3245 = vadd.f32 %v3044, %v3244
    %v3246 = vpop.f32.mrb[0].mxu0
    %3247 = vmatprep.mubr.f32.mxu0 0.0
    %v3248 = vand.u32 %v2854, 4294901760
    %3249 = vmatmul.mubr.f32.gmra.mrb[0].mxu0 %v3248
    %v3250 = vpop.f32.mrb[0].mxu0
    %v3251 = vadd.f32 %v3054, %v3250
    %v3252 = vpop.f32.mrb[0].mxu0
    %3253 = vmatprep.mubr.f32.mxu0 0.0
    %v3254 = vand.u32 %v2857, 4294901760
    %3255 = vmatmul.mubr.f32.gmra.mrb[0].mxu0 %v3254
    %v3256 = vpop.f32.mrb[0].mxu0
    %v3257 = vadd.f32 %v3064, %v3256
    %v3258 = vpop.f32.mrb[0].mxu0
    %3259 = vmatprep.mubr.f32.mxu0 0.0
    %v3260 = vand.u32 %v2860, 4294901760
    %3261 = vmatmul.mubr.f32.gmra.mrb[0].mxu0 %v3260
    %v3262 = vpop.f32.mrb[0].mxu0
    %v3263 = vadd.f32 %v3074, %v3262
    %v3264 = vpop.f32.mrb[0].mxu0
    %3265 = vmatprep.mubr.f32.mxu0 0.0
    %v3266 = vand.u32 %v2863, 4294901760
    %3267 = vmatmul.mubr.f32.gmra.mrb[0].mxu0 %v3266
    %v3268 = vpop.f32.mrb[0].mxu0
    %v3269 = vadd.f32 %v3084, %v3268
    %v3270 = vpop.f32.mrb[0].mxu0
    %3271 = vmatprep.mubr.f32.mxu0 0.0
    %v3272 = vand.u32 %v2866, 4294901760
    %3273 = vmatmul.mubr.f32.gmra.mrb[0].mxu0 %v3272
    %v3274 = vpop.f32.mrb[0].mxu0
    %v3275 = vadd.f32 %v3094, %v3274
    %v3276 = vpop.f32.mrb[0].mxu0
    %3277 = vdwg.mxu0
    %3278 = vmatprep.subr.mxu0 0.0
    %v3279 = vand.u32 %v1633, 4294901760
    %v3280 = vsub.f32 %v1633, %v3279
    %3281 = vmatpush1.msra.mxu0 %v3280
    %3282 = vmatprep.subr.mxu0 0.0
    %v3283 = vand.u32 %v1634, 4294901760
    %v3284 = vsub.f32 %v1634, %v3283
    %3285 = vmatpush1.msra.mxu0 %v3284
    %3286 = vmatprep.subr.mxu0 0.0
    %v3287 = vand.u32 %v1635, 4294901760
    %v3288 = vsub.f32 %v1635, %v3287
    %3289 = vmatpush1.msra.mxu0 %v3288
    %3290 = vmatprep.subr.mxu0 0.0
    %v3291 = vand.u32 %v1636, 4294901760
    %v3292 = vsub.f32 %v1636, %v3291
    %3293 = vmatpush1.msra.mxu0 %v3292
    %3294 = vmatprep.subr.mxu0 0.0
    %3295 = vmatpush1.msra.mxu0 0.0
    %3296 = vmatprep.subr.mxu0 0.0
    %3297 = vmatpush1.msra.mxu0 0.0
    %3298 = vmatprep.subr.mxu0 0.0
    %3299 = vmatpush1.msra.mxu0 0.0
    %3300 = vmatprep.subr.mxu0 0.0
    %3301 = vmatpush1.msra.mxu0 0.0
    %3302 = vmatprep.subr.mxu0 0.0
    %3303 = vmatpush1.msra.mxu0 0.0
    %3304 = vmatprep.subr.mxu0 0.0
    %3305 = vmatpush1.msra.mxu0 0.0
    %3306 = vmatprep.subr.mxu0 0.0
    %3307 = vmatpush1.msra.mxu0 0.0
    %3308 = vmatprep.subr.mxu0 0.0
    %3309 = vmatpush1.msra.mxu0 0.0
    %3310 = vmatprep.subr.mxu0 0.0
    %3311 = vmatpush1.msra.mxu0 0.0
    %3312 = vmatprep.subr.mxu0 0.0
    %3313 = vmatpush1.msra.mxu0 0.0
    %3314 = vmatprep.subr.mxu0 0.0
    %3315 = vmatpush1.msra.mxu0 0.0
    %3316 = vmatprep.subr.mxu0 0.0
    %3317 = vmatpush1.msra.mxu0 0.0
    %3318 = vmatprep.subr.mxu0 0.0
    %3319 = vmatpush1.msra.mxu0 0.0
    %3320 = vmatprep.subr.mxu0 0.0
    %3321 = vmatpush1.msra.mxu0 0.0
    %3322 = vmatprep.subr.mxu0 0.0
    %3323 = vmatpush1.msra.mxu0 0.0
    %3324 = vmatprep.subr.mxu0 0.0
    %3325 = vmatpush1.msra.mxu0 0.0
    %3326 = vmatprep.subr.mxu0 0.0
    %3327 = vmatpush1.msra.mxu0 0.0
    %3328 = vmatprep.subr.mxu0 0.0
    %3329 = vmatpush1.msra.mxu0 0.0
    %3330 = vmatprep.subr.mxu0 0.0
    %3331 = vmatpush1.msra.mxu0 0.0
    %3332 = vmatprep.subr.mxu0 0.0
    %3333 = vmatpush1.msra.mxu0 0.0
    %3334 = vmatprep.subr.mxu0 0.0
    %3335 = vmatpush1.msra.mxu0 0.0
    %3336 = vmatprep.subr.mxu0 0.0
    %3337 = vmatpush1.msra.mxu0 0.0
    %3338 = vmatprep.subr.mxu0 0.0
    %3339 = vmatpush1.msra.mxu0 0.0
    %3340 = vmatprep.subr.mxu0 0.0
    %3341 = vmatpush1.msra.mxu0 0.0
    %3342 = vmatprep.subr.mxu0 0.0
    %3343 = vmatpush1.msra.mxu0 0.0
    %3344 = vmatprep.subr.mxu0 0.0
    %3345 = vmatpush1.msra.mxu0 0.0
    %3346 = vmatprep.subr.mxu0 0.0
    %3347 = vmatpush1.msra.mxu0 0.0
    %3348 = vmatprep.subr.mxu0 0.0
    %3349 = vmatpush1.msra.mxu0 0.0
    %3350 = vmatprep.mubr.f32.mxu0 0.0
    %v3351 = vand.u32 %v2821, 4294901760
    %v3352 = vsub.f32 %v2821, %v3351
    %3353 = vmatmul.mubr.f32.gmra.mrb[0].mxu0 %v3352
    %v3354 = vpop.f32.mrb[0].mxu0
    %v3355 = vadd.f32 %v3185, %v3354
    %v3356 = vpop.f32.mrb[0].mxu0
    %3357 = vmatprep.mubr.f32.mxu0 0.0
    %v3358 = vand.u32 %v2824, 4294901760
    %v3359 = vsub.f32 %v2824, %v3358
    %3360 = vmatmul.mubr.f32.gmra.mrb[0].mxu0 %v3359
    %v3361 = vpop.f32.mrb[0].mxu0
    %v3362 = vadd.f32 %v3191, %v3361
    %v3363 = vpop.f32.mrb[0].mxu0
    %3364 = vmatprep.mubr.f32.mxu0 0.0
    %v3365 = vand.u32 %v2827, 4294901760
    %v3366 = vsub.f32 %v2827, %v3365
    %3367 = vmatmul.mubr.f32.gmra.mrb[0].mxu0 %v3366
    %v3368 = vpop.f32.mrb[0].mxu0
    %v3369 = vadd.f32 %v3197, %v3368
    %v3370 = vpop.f32.mrb[0].mxu0
    %3371 = vmatprep.mubr.f32.mxu0 0.0
    %v3372 = vand.u32 %v2830, 4294901760
    %v3373 = vsub.f32 %v2830, %v3372
    %3374 = vmatmul.mubr.f32.gmra.mrb[0].mxu0 %v3373
    %v3375 = vpop.f32.mrb[0].mxu0
    %v3376 = vadd.f32 %v3203, %v3375
    %v3377 = vpop.f32.mrb[0].mxu0
    %3378 = vmatprep.mubr.f32.mxu0 0.0
    %v3379 = vand.u32 %v2833, 4294901760
    %v3380 = vsub.f32 %v2833, %v3379
    %3381 = vmatmul.mubr.f32.gmra.mrb[0].mxu0 %v3380
    %v3382 = vpop.f32.mrb[0].mxu0
    %v3383 = vadd.f32 %v3209, %v3382
    %v3384 = vpop.f32.mrb[0].mxu0
    %3385 = vmatprep.mubr.f32.mxu0 0.0
    %v3386 = vand.u32 %v2836, 4294901760
    %v3387 = vsub.f32 %v2836, %v3386
    %3388 = vmatmul.mubr.f32.gmra.mrb[0].mxu0 %v3387
    %v3389 = vpop.f32.mrb[0].mxu0
    %v3390 = vadd.f32 %v3215, %v3389
    %v3391 = vpop.f32.mrb[0].mxu0
    %3392 = vmatprep.mubr.f32.mxu0 0.0
    %v3393 = vand.u32 %v2839, 4294901760
    %v3394 = vsub.f32 %v2839, %v3393
    %3395 = vmatmul.mubr.f32.gmra.mrb[0].mxu0 %v3394
    %v3396 = vpop.f32.mrb[0].mxu0
    %v3397 = vadd.f32 %v3221, %v3396
    %v3398 = vpop.f32.mrb[0].mxu0
    %3399 = vmatprep.mubr.f32.mxu0 0.0
    %v3400 = vand.u32 %v2842, 4294901760
    %v3401 = vsub.f32 %v2842, %v3400
    %3402 = vmatmul.mubr.f32.gmra.mrb[0].mxu0 %v3401
    %v3403 = vpop.f32.mrb[0].mxu0
    %v3404 = vadd.f32 %v3227, %v3403
    %v3405 = vpop.f32.mrb[0].mxu0
    %3406 = vmatprep.mubr.f32.mxu0 0.0
    %v3407 = vand.u32 %v2845, 4294901760
    %v3408 = vsub.f32 %v2845, %v3407
    %3409 = vmatmul.mubr.f32.gmra.mrb[0].mxu0 %v3408
    %v3410 = vpop.f32.mrb[0].mxu0
    %v3411 = vadd.f32 %v3233, %v3410
    %v3412 = vpop.f32.mrb[0].mxu0
    %3413 = vmatprep.mubr.f32.mxu0 0.0
    %v3414 = vand.u32 %v2848, 4294901760
    %v3415 = vsub.f32 %v2848, %v3414
    %3416 = vmatmul.mubr.f32.gmra.mrb[0].mxu0 %v3415
    %v3417 = vpop.f32.mrb[0].mxu0
    %v3418 = vadd.f32 %v3239, %v3417
    %v3419 = vpop.f32.mrb[0].mxu0
    %3420 = vmatprep.mubr.f32.mxu0 0.0
    %v3421 = vand.u32 %v2851, 4294901760
    %v3422 = vsub.f32 %v2851, %v3421
    %3423 = vmatmul.mubr.f32.gmra.mrb[0].mxu0 %v3422
    %v3424 = vpop.f32.mrb[0].mxu0
    %v3425 = vadd.f32 %v3245, %v3424
    %v3426 = vpop.f32.mrb[0].mxu0
    %3427 = vmatprep.mubr.f32.mxu0 0.0
    %v3428 = vand.u32 %v2854, 4294901760
    %v3429 = vsub.f32 %v2854, %v3428
    %3430 = vmatmul.mubr.f32.gmra.mrb[0].mxu0 %v3429
    %v3431 = vpop.f32.mrb[0].mxu0
    %v3432 = vadd.f32 %v3251, %v3431
    %v3433 = vpop.f32.mrb[0].mxu0
    %3434 = vmatprep.mubr.f32.mxu0 0.0
    %v3435 = vand.u32 %v2857, 4294901760
    %v3436 = vsub.f32 %v2857, %v3435
    %3437 = vmatmul.mubr.f32.gmra.mrb[0].mxu0 %v3436
    %v3438 = vpop.f32.mrb[0].mxu0
    %v3439 = vadd.f32 %v3257, %v3438
    %v3440 = vpop.f32.mrb[0].mxu0
    %3441 = vmatprep.mubr.f32.mxu0 0.0
    %v3442 = vand.u32 %v2860, 4294901760
    %v3443 = vsub.f32 %v2860, %v3442
    %3444 = vmatmul.mubr.f32.gmra.mrb[0].mxu0 %v3443
    %v3445 = vpop.f32.mrb[0].mxu0
    %v3446 = vadd.f32 %v3263, %v3445
    %v3447 = vpop.f32.mrb[0].mxu0
    %3448 = vmatprep.mubr.f32.mxu0 0.0
    %v3449 = vand.u32 %v2863, 4294901760
    %v3450 = vsub.f32 %v2863, %v3449
    %3451 = vmatmul.mubr.f32.gmra.mrb[0].mxu0 %v3450
    %v3452 = vpop.f32.mrb[0].mxu0
    %v3453 = vadd.f32 %v3269, %v3452
    %v3454 = vpop.f32.mrb[0].mxu0
    %3455 = vmatprep.mubr.f32.mxu0 0.0
    %v3456 = vand.u32 %v2866, 4294901760
    %v3457 = vsub.f32 %v2866, %v3456
    %3458 = vmatmul.mubr.f32.gmra.mrb[0].mxu0 %v3457
    %v3459 = vpop.f32.mrb[0].mxu0
    %v3460 = vadd.f32 %v3275, %v3459
    %v3461 = vpop.f32.mrb[0].mxu0
    %3462 = vdwg.mxu0
    %3463 = vmatprep.subr.mxu0 0.0
    %v3464 = vand.u32 %v1633, 4294901760
    %3465 = vmatpush1.msra.mxu0 %v3464
    %3466 = vmatprep.subr.mxu0 0.0
    %v3467 = vand.u32 %v1634, 4294901760
    %3468 = vmatpush1.msra.mxu0 %v3467
    %3469 = vmatprep.subr.mxu0 0.0
    %v3470 = vand.u32 %v1635, 4294901760
    %3471 = vmatpush1.msra.mxu0 %v3470
    %3472 = vmatprep.subr.mxu0 0.0
    %v3473 = vand.u32 %v1636, 4294901760
    %3474 = vmatpush1.msra.mxu0 %v3473
    %3475 = vmatprep.subr.mxu0 0.0
    %3476 = vmatpush1.msra.mxu0 0.0
    %3477 = vmatprep.subr.mxu0 0.0
    %3478 = vmatpush1.msra.mxu0 0.0
    %3479 = vmatprep.subr.mxu0 0.0
    %3480 = vmatpush1.msra.mxu0 0.0
    %3481 = vmatprep.subr.mxu0 0.0
    %3482 = vmatpush1.msra.mxu0 0.0
    %3483 = vmatprep.subr.mxu0 0.0
    %3484 = vmatpush1.msra.mxu0 0.0
    %3485 = vmatprep.subr.mxu0 0.0
    %3486 = vmatpush1.msra.mxu0 0.0
    %3487 = vmatprep.subr.mxu0 0.0
    %3488 = vmatpush1.msra.mxu0 0.0
    %3489 = vmatprep.subr.mxu0 0.0
    %3490 = vmatpush1.msra.mxu0 0.0
    %3491 = vmatprep.subr.mxu0 0.0
    %3492 = vmatpush1.msra.mxu0 0.0
    %3493 = vmatprep.subr.mxu0 0.0
    %3494 = vmatpush1.msra.mxu0 0.0
    %3495 = vmatprep.subr.mxu0 0.0
    %3496 = vmatpush1.msra.mxu0 0.0
    %3497 = vmatprep.subr.mxu0 0.0
    %3498 = vmatpush1.msra.mxu0 0.0
    %3499 = vmatprep.subr.mxu0 0.0
    %3500 = vmatpush1.msra.mxu0 0.0
    %3501 = vmatprep.subr.mxu0 0.0
    %3502 = vmatpush1.msra.mxu0 0.0
    %3503 = vmatprep.subr.mxu0 0.0
    %3504 = vmatpush1.msra.mxu0 0.0
    %3505 = vmatprep.subr.mxu0 0.0
    %3506 = vmatpush1.msra.mxu0 0.0
    %3507 = vmatprep.subr.mxu0 0.0
    %3508 = vmatpush1.msra.mxu0 0.0
    %3509 = vmatprep.subr.mxu0 0.0
    %3510 = vmatpush1.msra.mxu0 0.0
    %3511 = vmatprep.subr.mxu0 0.0
    %3512 = vmatpush1.msra.mxu0 0.0
    %3513 = vmatprep.subr.mxu0 0.0
    %3514 = vmatpush1.msra.mxu0 0.0
    %3515 = vmatprep.subr.mxu0 0.0
    %3516 = vmatpush1.msra.mxu0 0.0
    %3517 = vmatprep.subr.mxu0 0.0
    %3518 = vmatpush1.msra.mxu0 0.0
    %3519 = vmatprep.subr.mxu0 0.0
    %3520 = vmatpush1.msra.mxu0 0.0
    %3521 = vmatprep.subr.mxu0 0.0
    %3522 = vmatpush1.msra.mxu0 0.0
    %3523 = vmatprep.subr.mxu0 0.0
    %3524 = vmatpush1.msra.mxu0 0.0
    %3525 = vmatprep.subr.mxu0 0.0
    %3526 = vmatpush1.msra.mxu0 0.0
    %3527 = vmatprep.subr.mxu0 0.0
    %3528 = vmatpush1.msra.mxu0 0.0
    %3529 = vmatprep.subr.mxu0 0.0
    %3530 = vmatpush1.msra.mxu0 0.0
    %3531 = vmatprep.mubr.f32.mxu0 0.0
    %v3532 = vand.u32 %v2821, 4294901760
    %v3533 = vsub.f32 %v2821, %v3532
    %v3534 = vand.u32 %v3533, 4294901760
    %3535 = vmatmul.mubr.f32.gmra.mrb[0].mxu0 %v3534
    %v3536 = vpop.f32.mrb[0].mxu0
    %v3537 = vadd.f32 %v3355, %v3536
    %v3538 = vpop.f32.mrb[0].mxu0
    %3539 = vmatprep.mubr.f32.mxu0 0.0
    %v3540 = vand.u32 %v2824, 4294901760
    %v3541 = vsub.f32 %v2824, %v3540
    %v3542 = vand.u32 %v3541, 4294901760
    %3543 = vmatmul.mubr.f32.gmra.mrb[0].mxu0 %v3542
    %v3544 = vpop.f32.mrb[0].mxu0
    %v3545 = vadd.f32 %v3362, %v3544
    %v3546 = vpop.f32.mrb[0].mxu0
    %3547 = vmatprep.mubr.f32.mxu0 0.0
    %v3548 = vand.u32 %v2827, 4294901760
    %v3549 = vsub.f32 %v2827, %v3548
    %v3550 = vand.u32 %v3549, 4294901760
    %3551 = vmatmul.mubr.f32.gmra.mrb[0].mxu0 %v3550
    %v3552 = vpop.f32.mrb[0].mxu0
    %v3553 = vadd.f32 %v3369, %v3552
    %v3554 = vpop.f32.mrb[0].mxu0
    %3555 = vmatprep.mubr.f32.mxu0 0.0
    %v3556 = vand.u32 %v2830, 4294901760
    %v3557 = vsub.f32 %v2830, %v3556
    %v3558 = vand.u32 %v3557, 4294901760
    %3559 = vmatmul.mubr.f32.gmra.mrb[0].mxu0 %v3558
    %v3560 = vpop.f32.mrb[0].mxu0
    %v3561 = vadd.f32 %v3376, %v3560
    %v3562 = vpop.f32.mrb[0].mxu0
    %3563 = vmatprep.mubr.f32.mxu0 0.0
    %v3564 = vand.u32 %v2833, 4294901760
    %v3565 = vsub.f32 %v2833, %v3564
    %v3566 = vand.u32 %v3565, 4294901760
    %3567 = vmatmul.mubr.f32.gmra.mrb[0].mxu0 %v3566
    %v3568 = vpop.f32.mrb[0].mxu0
    %v3569 = vadd.f32 %v3383, %v3568
    %v3570 = vpop.f32.mrb[0].mxu0
    %3571 = vmatprep.mubr.f32.mxu0 0.0
    %v3572 = vand.u32 %v2836, 4294901760
    %v3573 = vsub.f32 %v2836, %v3572
    %v3574 = vand.u32 %v3573, 4294901760
    %3575 = vmatmul.mubr.f32.gmra.mrb[0].mxu0 %v3574
    %v3576 = vpop.f32.mrb[0].mxu0
    %v3577 = vadd.f32 %v3390, %v3576
    %v3578 = vpop.f32.mrb[0].mxu0
    %3579 = vmatprep.mubr.f32.mxu0 0.0
    %v3580 = vand.u32 %v2839, 4294901760
    %v3581 = vsub.f32 %v2839, %v3580
    %v3582 = vand.u32 %v3581, 4294901760
    %3583 = vmatmul.mubr.f32.gmra.mrb[0].mxu0 %v3582
    %v3584 = vpop.f32.mrb[0].mxu0
    %v3585 = vadd.f32 %v3397, %v3584
    %v3586 = vpop.f32.mrb[0].mxu0
    %3587 = vmatprep.mubr.f32.mxu0 0.0
    %v3588 = vand.u32 %v2842, 4294901760
    %v3589 = vsub.f32 %v2842, %v3588
    %v3590 = vand.u32 %v3589, 4294901760
    %3591 = vmatmul.mubr.f32.gmra.mrb[0].mxu0 %v3590
    %v3592 = vpop.f32.mrb[0].mxu0
    %v3593 = vadd.f32 %v3404, %v3592
    %v3594 = vpop.f32.mrb[0].mxu0
    %3595 = vmatprep.mubr.f32.mxu0 0.0
    %v3596 = vand.u32 %v2845, 4294901760
    %v3597 = vsub.f32 %v2845, %v3596
    %v3598 = vand.u32 %v3597, 4294901760
    %3599 = vmatmul.mubr.f32.gmra.mrb[0].mxu0 %v3598
    %v3600 = vpop.f32.mrb[0].mxu0
    %v3601 = vadd.f32 %v3411, %v3600
    %v3602 = vpop.f32.mrb[0].mxu0
    %3603 = vmatprep.mubr.f32.mxu0 0.0
    %v3604 = vand.u32 %v2848, 4294901760
    %v3605 = vsub.f32 %v2848, %v3604
    %v3606 = vand.u32 %v3605, 4294901760
    %3607 = vmatmul.mubr.f32.gmra.mrb[0].mxu0 %v3606
    %v3608 = vpop.f32.mrb[0].mxu0
    %v3609 = vadd.f32 %v3418, %v3608
    %v3610 = vpop.f32.mrb[0].mxu0
    %3611 = vmatprep.mubr.f32.mxu0 0.0
    %v3612 = vand.u32 %v2851, 4294901760
    %v3613 = vsub.f32 %v2851, %v3612
    %v3614 = vand.u32 %v3613, 4294901760
    %3615 = vmatmul.mubr.f32.gmra.mrb[0].mxu0 %v3614
    %v3616 = vpop.f32.mrb[0].mxu0
    %v3617 = vadd.f32 %v3425, %v3616
    %v3618 = vpop.f32.mrb[0].mxu0
    %3619 = vmatprep.mubr.f32.mxu0 0.0
    %v3620 = vand.u32 %v2854, 4294901760
    %v3621 = vsub.f32 %v2854, %v3620
    %v3622 = vand.u32 %v3621, 4294901760
    %3623 = vmatmul.mubr.f32.gmra.mrb[0].mxu0 %v3622
    %v3624 = vpop.f32.mrb[0].mxu0
    %v3625 = vadd.f32 %v3432, %v3624
    %v3626 = vpop.f32.mrb[0].mxu0
    %3627 = vmatprep.mubr.f32.mxu0 0.0
    %v3628 = vand.u32 %v2857, 4294901760
    %v3629 = vsub.f32 %v2857, %v3628
    %v3630 = vand.u32 %v3629, 4294901760
    %3631 = vmatmul.mubr.f32.gmra.mrb[0].mxu0 %v3630
    %v3632 = vpop.f32.mrb[0].mxu0
    %v3633 = vadd.f32 %v3439, %v3632
    %v3634 = vpop.f32.mrb[0].mxu0
    %3635 = vmatprep.mubr.f32.mxu0 0.0
    %v3636 = vand.u32 %v2860, 4294901760
    %v3637 = vsub.f32 %v2860, %v3636
    %v3638 = vand.u32 %v3637, 4294901760
    %3639 = vmatmul.mubr.f32.gmra.mrb[0].mxu0 %v3638
    %v3640 = vpop.f32.mrb[0].mxu0
    %v3641 = vadd.f32 %v3446, %v3640
    %v3642 = vpop.f32.mrb[0].mxu0
    %3643 = vmatprep.mubr.f32.mxu0 0.0
    %v3644 = vand.u32 %v2863, 4294901760
    %v3645 = vsub.f32 %v2863, %v3644
    %v3646 = vand.u32 %v3645, 4294901760
    %3647 = vmatmul.mubr.f32.gmra.mrb[0].mxu0 %v3646
    %v3648 = vpop.f32.mrb[0].mxu0
    %v3649 = vadd.f32 %v3453, %v3648
    %v3650 = vpop.f32.mrb[0].mxu0
    %3651 = vmatprep.mubr.f32.mxu0 0.0
    %v3652 = vand.u32 %v2866, 4294901760
    %v3653 = vsub.f32 %v2866, %v3652
    %v3654 = vand.u32 %v3653, 4294901760
    %3655 = vmatmul.mubr.f32.gmra.mrb[0].mxu0 %v3654
    %v3656 = vpop.f32.mrb[0].mxu0
    %v3657 = vadd.f32 %v3460, %v3656
    %v3658 = vpop.f32.mrb[0].mxu0
    %3659 = vdwg.mxu0
    %3660 = vmatprep.subr.mxu0 0.0
    %v3661 = vand.u32 %v1633, 4294901760
    %v3662 = vsub.f32 %v1633, %v3661
    %v3663 = vand.u32 %v3662, 4294901760
    %3664 = vmatpush1.msra.mxu0 %v3663
    %3665 = vmatprep.subr.mxu0 0.0
    %v3666 = vand.u32 %v1634, 4294901760
    %v3667 = vsub.f32 %v1634, %v3666
    %v3668 = vand.u32 %v3667, 4294901760
    %3669 = vmatpush1.msra.mxu0 %v3668
    %3670 = vmatprep.subr.mxu0 0.0
    %v3671 = vand.u32 %v1635, 4294901760
    %v3672 = vsub.f32 %v1635, %v3671
    %v3673 = vand.u32 %v3672, 4294901760
    %3674 = vmatpush1.msra.mxu0 %v3673
    %3675 = vmatprep.subr.mxu0 0.0
    %v3676 = vand.u32 %v1636, 4294901760
    %v3677 = vsub.f32 %v1636, %v3676
    %v3678 = vand.u32 %v3677, 4294901760
    %3679 = vmatpush1.msra.mxu0 %v3678
    %3680 = vmatprep.subr.mxu0 0.0
    %3681 = vmatpush1.msra.mxu0 0.0
    %3682 = vmatprep.subr.mxu0 0.0
    %3683 = vmatpush1.msra.mxu0 0.0
    %3684 = vmatprep.subr.mxu0 0.0
    %3685 = vmatpush1.msra.mxu0 0.0
    %3686 = vmatprep.subr.mxu0 0.0
    %3687 = vmatpush1.msra.mxu0 0.0
    %3688 = vmatprep.subr.mxu0 0.0
    %3689 = vmatpush1.msra.mxu0 0.0
    %3690 = vmatprep.subr.mxu0 0.0
    %3691 = vmatpush1.msra.mxu0 0.0
    %3692 = vmatprep.subr.mxu0 0.0
    %3693 = vmatpush1.msra.mxu0 0.0
    %3694 = vmatprep.subr.mxu0 0.0
    %3695 = vmatpush1.msra.mxu0 0.0
    %3696 = vmatprep.subr.mxu0 0.0
    %3697 = vmatpush1.msra.mxu0 0.0
    %3698 = vmatprep.subr.mxu0 0.0
    %3699 = vmatpush1.msra.mxu0 0.0
    %3700 = vmatprep.subr.mxu0 0.0
    %3701 = vmatpush1.msra.mxu0 0.0
    %3702 = vmatprep.subr.mxu0 0.0
    %3703 = vmatpush1.msra.mxu0 0.0
    %3704 = vmatprep.subr.mxu0 0.0
    %3705 = vmatpush1.msra.mxu0 0.0
    %3706 = vmatprep.subr.mxu0 0.0
    %3707 = vmatpush1.msra.mxu0 0.0
    %3708 = vmatprep.subr.mxu0 0.0
    %3709 = vmatpush1.msra.mxu0 0.0
    %3710 = vmatprep.subr.mxu0 0.0
    %3711 = vmatpush1.msra.mxu0 0.0
    %3712 = vmatprep.subr.mxu0 0.0
    %3713 = vmatpush1.msra.mxu0 0.0
    %3714 = vmatprep.subr.mxu0 0.0
    %3715 = vmatpush1.msra.mxu0 0.0
    %3716 = vmatprep.subr.mxu0 0.0
    %3717 = vmatpush1.msra.mxu0 0.0
    %3718 = vmatprep.subr.mxu0 0.0
    %3719 = vmatpush1.msra.mxu0 0.0
    %3720 = vmatprep.subr.mxu0 0.0
    %3721 = vmatpush1.msra.mxu0 0.0
    %3722 = vmatprep.subr.mxu0 0.0
    %3723 = vmatpush1.msra.mxu0 0.0
    %3724 = vmatprep.subr.mxu0 0.0
    %3725 = vmatpush1.msra.mxu0 0.0
    %3726 = vmatprep.subr.mxu0 0.0
    %3727 = vmatpush1.msra.mxu0 0.0
    %3728 = vmatprep.subr.mxu0 0.0
    %3729 = vmatpush1.msra.mxu0 0.0
    %3730 = vmatprep.subr.mxu0 0.0
    %3731 = vmatpush1.msra.mxu0 0.0
    %3732 = vmatprep.subr.mxu0 0.0
    %3733 = vmatpush1.msra.mxu0 0.0
    %3734 = vmatprep.subr.mxu0 0.0
    %3735 = vmatpush1.msra.mxu0 0.0
    %3736 = vmatprep.mubr.f32.mxu0 0.0
    %v3737 = vand.u32 %v2821, 4294901760
    %3738 = vmatmul.mubr.f32.gmra.mrb[0].mxu0 %v3737
    %v3739 = vpop.f32.mrb[0].mxu0
    %v3740 = vadd.f32 %v3537, %v3739
    %v3741 = vpop.f32.mrb[0].mxu0
    %3742 = vmatprep.mubr.f32.mxu0 0.0
    %v3743 = vand.u32 %v2824, 4294901760
    %3744 = vmatmul.mubr.f32.gmra.mrb[0].mxu0 %v3743
    %v3745 = vpop.f32.mrb[0].mxu0
    %v3746 = vadd.f32 %v3545, %v3745
    %v3747 = vpop.f32.mrb[0].mxu0
    %3748 = vmatprep.mubr.f32.mxu0 0.0
    %v3749 = vand.u32 %v2827, 4294901760
    %3750 = vmatmul.mubr.f32.gmra.mrb[0].mxu0 %v3749
    %v3751 = vpop.f32.mrb[0].mxu0
    %v3752 = vadd.f32 %v3553, %v3751
    %v3753 = vpop.f32.mrb[0].mxu0
    %3754 = vmatprep.mubr.f32.mxu0 0.0
    %v3755 = vand.u32 %v2830, 4294901760
    %3756 = vmatmul.mubr.f32.gmra.mrb[0].mxu0 %v3755
    %v3757 = vpop.f32.mrb[0].mxu0
    %v3758 = vadd.f32 %v3561, %v3757
    %v3759 = vpop.f32.mrb[0].mxu0
    %3760 = vmatprep.mubr.f32.mxu0 0.0
    %v3761 = vand.u32 %v2833, 4294901760
    %3762 = vmatmul.mubr.f32.gmra.mrb[0].mxu0 %v3761
    %v3763 = vpop.f32.mrb[0].mxu0
    %v3764 = vadd.f32 %v3569, %v3763
    %v3765 = vpop.f32.mrb[0].mxu0
    %3766 = vmatprep.mubr.f32.mxu0 0.0
    %v3767 = vand.u32 %v2836, 4294901760
    %3768 = vmatmul.mubr.f32.gmra.mrb[0].mxu0 %v3767
    %v3769 = vpop.f32.mrb[0].mxu0
    %v3770 = vadd.f32 %v3577, %v3769
    %v3771 = vpop.f32.mrb[0].mxu0
    %3772 = vmatprep.mubr.f32.mxu0 0.0
    %v3773 = vand.u32 %v2839, 4294901760
    %3774 = vmatmul.mubr.f32.gmra.mrb[0].mxu0 %v3773
    %v3775 = vpop.f32.mrb[0].mxu0
    %v3776 = vadd.f32 %v3585, %v3775
    %v3777 = vpop.f32.mrb[0].mxu0
    %3778 = vmatprep.mubr.f32.mxu0 0.0
    %v3779 = vand.u32 %v2842, 4294901760
    %3780 = vmatmul.mubr.f32.gmra.mrb[0].mxu0 %v3779
    %v3781 = vpop.f32.mrb[0].mxu0
    %v3782 = vadd.f32 %v3593, %v3781
    %v3783 = vpop.f32.mrb[0].mxu0
    %3784 = vmatprep.mubr.f32.mxu0 0.0
    %v3785 = vand.u32 %v2845, 4294901760
    %3786 = vmatmul.mubr.f32.gmra.mrb[0].mxu0 %v3785
    %v3787 = vpop.f32.mrb[0].mxu0
    %v3788 = vadd.f32 %v3601, %v3787
    %v3789 = vpop.f32.mrb[0].mxu0
    %3790 = vmatprep.mubr.f32.mxu0 0.0
    %v3791 = vand.u32 %v2848, 4294901760
    %3792 = vmatmul.mubr.f32.gmra.mrb[0].mxu0 %v3791
    %v3793 = vpop.f32.mrb[0].mxu0
    %v3794 = vadd.f32 %v3609, %v3793
    %v3795 = vpop.f32.mrb[0].mxu0
    %3796 = vmatprep.mubr.f32.mxu0 0.0
    %v3797 = vand.u32 %v2851, 4294901760
    %3798 = vmatmul.mubr.f32.gmra.mrb[0].mxu0 %v3797
    %v3799 = vpop.f32.mrb[0].mxu0
    %v3800 = vadd.f32 %v3617, %v3799
    %v3801 = vpop.f32.mrb[0].mxu0
    %3802 = vmatprep.mubr.f32.mxu0 0.0
    %v3803 = vand.u32 %v2854, 4294901760
    %3804 = vmatmul.mubr.f32.gmra.mrb[0].mxu0 %v3803
    %v3805 = vpop.f32.mrb[0].mxu0
    %v3806 = vadd.f32 %v3625, %v3805
    %v3807 = vpop.f32.mrb[0].mxu0
    %3808 = vmatprep.mubr.f32.mxu0 0.0
    %v3809 = vand.u32 %v2857, 4294901760
    %3810 = vmatmul.mubr.f32.gmra.mrb[0].mxu0 %v3809
    %v3811 = vpop.f32.mrb[0].mxu0
    %v3812 = vadd.f32 %v3633, %v3811
    %v3813 = vpop.f32.mrb[0].mxu0
    %3814 = vmatprep.mubr.f32.mxu0 0.0
    %v3815 = vand.u32 %v2860, 4294901760
    %3816 = vmatmul.mubr.f32.gmra.mrb[0].mxu0 %v3815
    %v3817 = vpop.f32.mrb[0].mxu0
    %v3818 = vadd.f32 %v3641, %v3817
    %v3819 = vpop.f32.mrb[0].mxu0
    %3820 = vmatprep.mubr.f32.mxu0 0.0
    %v3821 = vand.u32 %v2863, 4294901760
    %3822 = vmatmul.mubr.f32.gmra.mrb[0].mxu0 %v3821
    %v3823 = vpop.f32.mrb[0].mxu0
    %v3824 = vadd.f32 %v3649, %v3823
    %v3825 = vpop.f32.mrb[0].mxu0
    %3826 = vmatprep.mubr.f32.mxu0 0.0
    %v3827 = vand.u32 %v2866, 4294901760
    %3828 = vmatmul.mubr.f32.gmra.mrb[0].mxu0 %v3827
    %v3829 = vpop.f32.mrb[0].mxu0
    %v3830 = vadd.f32 %v3657, %v3829
    %v3831 = vpop.f32.mrb[0].mxu0
    %3832 = vdwg.mxu0
    %3833 = vmatprep.subr.mxu0 0.0
    %v3834 = vand.u32 %v1633, 4294901760
    %3835 = vmatpush1.msra.mxu0 %v3834
    %3836 = vmatprep.subr.mxu0 0.0
    %v3837 = vand.u32 %v1634, 4294901760
    %3838 = vmatpush1.msra.mxu0 %v3837
    %3839 = vmatprep.subr.mxu0 0.0
    %v3840 = vand.u32 %v1635, 4294901760
    %3841 = vmatpush1.msra.mxu0 %v3840
    %3842 = vmatprep.subr.mxu0 0.0
    %v3843 = vand.u32 %v1636, 4294901760
    %3844 = vmatpush1.msra.mxu0 %v3843
    %3845 = vmatprep.subr.mxu0 0.0
    %3846 = vmatpush1.msra.mxu0 0.0
    %3847 = vmatprep.subr.mxu0 0.0
    %3848 = vmatpush1.msra.mxu0 0.0
    %3849 = vmatprep.subr.mxu0 0.0
    %3850 = vmatpush1.msra.mxu0 0.0
    %3851 = vmatprep.subr.mxu0 0.0
    %3852 = vmatpush1.msra.mxu0 0.0
    %3853 = vmatprep.subr.mxu0 0.0
    %3854 = vmatpush1.msra.mxu0 0.0
    %3855 = vmatprep.subr.mxu0 0.0
    %3856 = vmatpush1.msra.mxu0 0.0
    %3857 = vmatprep.subr.mxu0 0.0
    %3858 = vmatpush1.msra.mxu0 0.0
    %3859 = vmatprep.subr.mxu0 0.0
    %3860 = vmatpush1.msra.mxu0 0.0
    %3861 = vmatprep.subr.mxu0 0.0
    %3862 = vmatpush1.msra.mxu0 0.0
    %3863 = vmatprep.subr.mxu0 0.0
    %3864 = vmatpush1.msra.mxu0 0.0
    %3865 = vmatprep.subr.mxu0 0.0
    %3866 = vmatpush1.msra.mxu0 0.0
    %3867 = vmatprep.subr.mxu0 0.0
    %3868 = vmatpush1.msra.mxu0 0.0
    %3869 = vmatprep.subr.mxu0 0.0
    %3870 = vmatpush1.msra.mxu0 0.0
    %3871 = vmatprep.subr.mxu0 0.0
    %3872 = vmatpush1.msra.mxu0 0.0
    %3873 = vmatprep.subr.mxu0 0.0
    %3874 = vmatpush1.msra.mxu0 0.0
    %3875 = vmatprep.subr.mxu0 0.0
    %3876 = vmatpush1.msra.mxu0 0.0
    %3877 = vmatprep.subr.mxu0 0.0
    %3878 = vmatpush1.msra.mxu0 0.0
    %3879 = vmatprep.subr.mxu0 0.0
    %3880 = vmatpush1.msra.mxu0 0.0
    %3881 = vmatprep.subr.mxu0 0.0
    %3882 = vmatpush1.msra.mxu0 0.0
    %3883 = vmatprep.subr.mxu0 0.0
    %3884 = vmatpush1.msra.mxu0 0.0
    %3885 = vmatprep.subr.mxu0 0.0
    %3886 = vmatpush1.msra.mxu0 0.0
    %3887 = vmatprep.subr.mxu0 0.0
    %3888 = vmatpush1.msra.mxu0 0.0
    %3889 = vmatprep.subr.mxu0 0.0
    %3890 = vmatpush1.msra.mxu0 0.0
    %3891 = vmatprep.subr.mxu0 0.0
    %3892 = vmatpush1.msra.mxu0 0.0
    %3893 = vmatprep.subr.mxu0 0.0
    %3894 = vmatpush1.msra.mxu0 0.0
    %3895 = vmatprep.subr.mxu0 0.0
    %3896 = vmatpush1.msra.mxu0 0.0
    %3897 = vmatprep.subr.mxu0 0.0
    %3898 = vmatpush1.msra.mxu0 0.0
    %3899 = vmatprep.subr.mxu0 0.0
    %3900 = vmatpush1.msra.mxu0 0.0
    %3901 = vmatprep.mubr.f32.mxu0 0.0
    %v3902 = vand.u32 %v2821, 4294901760
    %3903 = vmatmul.mubr.f32.gmra.mrb[0].mxu0 %v3902
    %v3904 = vpop.f32.mrb[0].mxu0
    %v3905 = vadd.f32 %v3740, %v3904
    %v3906 = vpop.f32.mrb[0].mxu0
    %3907 = vmatprep.mubr.f32.mxu0 0.0
    %v3908 = vand.u32 %v2824, 4294901760
    %3909 = vmatmul.mubr.f32.gmra.mrb[0].mxu0 %v3908
    %v3910 = vpop.f32.mrb[0].mxu0
    %v3911 = vadd.f32 %v3746, %v3910
    %v3912 = vpop.f32.mrb[0].mxu0
    %3913 = vmatprep.mubr.f32.mxu0 0.0
    %v3914 = vand.u32 %v2827, 4294901760
    %3915 = vmatmul.mubr.f32.gmra.mrb[0].mxu0 %v3914
    %v3916 = vpop.f32.mrb[0].mxu0
    %v3917 = vadd.f32 %v3752, %v3916
    %v3918 = vpop.f32.mrb[0].mxu0
    %3919 = vmatprep.mubr.f32.mxu0 0.0
    %v3920 = vand.u32 %v2830, 4294901760
    %3921 = vmatmul.mubr.f32.gmra.mrb[0].mxu0 %v3920
    %v3922 = vpop.f32.mrb[0].mxu0
    %v3923 = vadd.f32 %v3758, %v3922
    %v3924 = vpop.f32.mrb[0].mxu0
    %3925 = vmatprep.mubr.f32.mxu0 0.0
    %v3926 = vand.u32 %v2833, 4294901760
    %3927 = vmatmul.mubr.f32.gmra.mrb[0].mxu0 %v3926
    %v3928 = vpop.f32.mrb[0].mxu0
    %v3929 = vadd.f32 %v3764, %v3928
    %v3930 = vpop.f32.mrb[0].mxu0
    %3931 = vmatprep.mubr.f32.mxu0 0.0
    %v3932 = vand.u32 %v2836, 4294901760
    %3933 = vmatmul.mubr.f32.gmra.mrb[0].mxu0 %v3932
    %v3934 = vpop.f32.mrb[0].mxu0
    %v3935 = vadd.f32 %v3770, %v3934
    %v3936 = vpop.f32.mrb[0].mxu0
    %3937 = vmatprep.mubr.f32.mxu0 0.0
    %v3938 = vand.u32 %v2839, 4294901760
    %3939 = vmatmul.mubr.f32.gmra.mrb[0].mxu0 %v3938
    %v3940 = vpop.f32.mrb[0].mxu0
    %v3941 = vadd.f32 %v3776, %v3940
    %v3942 = vpop.f32.mrb[0].mxu0
    %3943 = vmatprep.mubr.f32.mxu0 0.0
    %v3944 = vand.u32 %v2842, 4294901760
    %3945 = vmatmul.mubr.f32.gmra.mrb[0].mxu0 %v3944
    %v3946 = vpop.f32.mrb[0].mxu0
    %v3947 = vadd.f32 %v3782, %v3946
    %v3948 = vpop.f32.mrb[0].mxu0
    %3949 = vmatprep.mubr.f32.mxu0 0.0
    %v3950 = vand.u32 %v2845, 4294901760
    %3951 = vmatmul.mubr.f32.gmra.mrb[0].mxu0 %v3950
    %v3952 = vpop.f32.mrb[0].mxu0
    %v3953 = vadd.f32 %v3788, %v3952
    %v3954 = vpop.f32.mrb[0].mxu0
    %3955 = vmatprep.mubr.f32.mxu0 0.0
    %v3956 = vand.u32 %v2848, 4294901760
    %3957 = vmatmul.mubr.f32.gmra.mrb[0].mxu0 %v3956
    %v3958 = vpop.f32.mrb[0].mxu0
    %v3959 = vadd.f32 %v3794, %v3958
    %v3960 = vpop.f32.mrb[0].mxu0
    %3961 = vmatprep.mubr.f32.mxu0 0.0
    %v3962 = vand.u32 %v2851, 4294901760
    %3963 = vmatmul.mubr.f32.gmra.mrb[0].mxu0 %v3962
    %v3964 = vpop.f32.mrb[0].mxu0
    %v3965 = vadd.f32 %v3800, %v3964
    %v3966 = vpop.f32.mrb[0].mxu0
    %3967 = vmatprep.mubr.f32.mxu0 0.0
    %v3968 = vand.u32 %v2854, 4294901760
    %3969 = vmatmul.mubr.f32.gmra.mrb[0].mxu0 %v3968
    %v3970 = vpop.f32.mrb[0].mxu0
    %v3971 = vadd.f32 %v3806, %v3970
    %v3972 = vpop.f32.mrb[0].mxu0
    %3973 = vmatprep.mubr.f32.mxu0 0.0
    %v3974 = vand.u32 %v2857, 4294901760
    %3975 = vmatmul.mubr.f32.gmra.mrb[0].mxu0 %v3974
    %v3976 = vpop.f32.mrb[0].mxu0
    %v3977 = vadd.f32 %v3812, %v3976
    %v3978 = vpop.f32.mrb[0].mxu0
    %3979 = vmatprep.mubr.f32.mxu0 0.0
    %v3980 = vand.u32 %v2860, 4294901760
    %3981 = vmatmul.mubr.f32.gmra.mrb[0].mxu0 %v3980
    %v3982 = vpop.f32.mrb[0].mxu0
    %v3983 = vadd.f32 %v3818, %v3982
    %v3984 = vpop.f32.mrb[0].mxu0
    %3985 = vmatprep.mubr.f32.mxu0 0.0
    %v3986 = vand.u32 %v2863, 4294901760
    %3987 = vmatmul.mubr.f32.gmra.mrb[0].mxu0 %v3986
    %v3988 = vpop.f32.mrb[0].mxu0
    %v3989 = vadd.f32 %v3824, %v3988
    %v3990 = vpop.f32.mrb[0].mxu0
    %3991 = vmatprep.mubr.f32.mxu0 0.0
    %v3992 = vand.u32 %v2866, 4294901760
    %3993 = vmatmul.mubr.f32.gmra.mrb[0].mxu0 %v3992
    %v3994 = vpop.f32.mrb[0].mxu0
    %v3995 = vadd.f32 %v3830, %v3994
    %v3996 = vpop.f32.mrb[0].mxu0
    %3997 = vdwg.mxu0
    %v3998 = vld [vmem:[#allocation16] sm:$0x1]
    %v4000 = vlaneseq
    %v4001 = vshrl.u32 %v4000, 7
    %v4002 = vsub.s32 0, %v4001
    %v4003 = vrot.slane %v3998, %v4002
    %v4005 = vadd.f32 %v3905, %v4003
    %v4006 = vadd.f32 %v3911, %v4003
    %v4007 = vadd.f32 %v3917, %v4003
    %v4008 = vadd.f32 %v3923, %v4003
    %v4009 = vadd.f32 %v3929, %v4003
    %v4010 = vadd.f32 %v3935, %v4003
    %v4011 = vadd.f32 %v3941, %v4003
    %v4012 = vadd.f32 %v3947, %v4003
    %v4013 = vadd.f32 %v3953, %v4003
    %v4014 = vadd.f32 %v3959, %v4003
    %v4015 = vadd.f32 %v3965, %v4003
    %v4016 = vadd.f32 %v3971, %v4003
    %v4017 = vadd.f32 %v3977, %v4003
    %v4018 = vadd.f32 %v3983, %v4003
    %v4019 = vadd.f32 %v3989, %v4003
    %v4020 = vadd.f32 %v3995, %v4003
    %v4021 = vmax.f32 %v4005, 0.0
    %v4022 = vmax.f32 %v4006, 0.0
    %v4023 = vmax.f32 %v4007, 0.0
    %v4024 = vmax.f32 %v4008, 0.0
    %v4025 = vmax.f32 %v4009, 0.0
    %v4026 = vmax.f32 %v4010, 0.0
    %v4027 = vmax.f32 %v4011, 0.0
    %v4028 = vmax.f32 %v4012, 0.0
    %v4029 = vmax.f32 %v4013, 0.0
    %v4030 = vmax.f32 %v4014, 0.0
    %v4031 = vmax.f32 %v4015, 0.0
    %v4032 = vmax.f32 %v4016, 0.0
    %v4033 = vmax.f32 %v4017, 0.0
    %v4034 = vmax.f32 %v4018, 0.0
    %v4035 = vmax.f32 %v4019, 0.0
    %v4036 = vmax.f32 %v4020, 0.0
    %v4037 = vsel %vm1641, %v4021, 0.0
    %4038 = vadd.xlane.f32.xlu0 %v4037
    %v4039 = vpop.xlane.xlu0 %4038
    %v4040 = vsel %vm1641, %v4022, 0.0
    %4041 = vadd.xlane.f32.xlu0 %v4040
    %v4042 = vpop.xlane.xlu0 %4041
    %v4043 = vsel %vm1641, %v4023, 0.0
    %4044 = vadd.xlane.f32.xlu0 %v4043
    %v4045 = vpop.xlane.xlu0 %4044
    %v4046 = vsel %vm1641, %v4024, 0.0
    %4047 = vadd.xlane.f32.xlu0 %v4046
    %v4048 = vpop.xlane.xlu0 %4047
    %v4049 = vsel %vm1641, %v4025, 0.0
    %4050 = vadd.xlane.f32.xlu0 %v4049
    %v4051 = vpop.xlane.xlu0 %4050
    %v4052 = vsel %vm1641, %v4026, 0.0
    %4053 = vadd.xlane.f32.xlu0 %v4052
    %v4054 = vpop.xlane.xlu0 %4053
    %v4055 = vsel %vm1641, %v4027, 0.0
    %4056 = vadd.xlane.f32.xlu0 %v4055
    %v4057 = vpop.xlane.xlu0 %4056
    %v4058 = vsel %vm1641, %v4028, 0.0
    %4059 = vadd.xlane.f32.xlu0 %v4058
    %v4060 = vpop.xlane.xlu0 %4059
    %v4061 = vsel %vm1641, %v4029, 0.0
    %4062 = vadd.xlane.f32.xlu0 %v4061
    %v4063 = vpop.xlane.xlu0 %4062
    %v4064 = vsel %vm1641, %v4030, 0.0
    %4065 = vadd.xlane.f32.xlu0 %v4064
    %v4066 = vpop.xlane.xlu0 %4065
    %v4067 = vsel %vm1641, %v4031, 0.0
    %4068 = vadd.xlane.f32.xlu0 %v4067
    %v4069 = vpop.xlane.xlu0 %4068
    %v4070 = vsel %vm1641, %v4032, 0.0
    %4071 = vadd.xlane.f32.xlu0 %v4070
    %v4072 = vpop.xlane.xlu0 %4071
    %v4073 = vsel %vm1641, %v4033, 0.0
    %4074 = vadd.xlane.f32.xlu0 %v4073
    %v4075 = vpop.xlane.xlu0 %4074
    %v4076 = vsel %vm1641, %v4034, 0.0
    %4077 = vadd.xlane.f32.xlu0 %v4076
    %v4078 = vpop.xlane.xlu0 %4077
    %v4079 = vsel %vm1641, %v4035, 0.0
    %4080 = vadd.xlane.f32.xlu0 %v4079
    %v4081 = vpop.xlane.xlu0 %4080
    %v4082 = vsel %vm1641, %v4036, 0.0
    %4083 = vadd.xlane.f32.xlu0 %v4082
    %v4084 = vpop.xlane.xlu0 %4083
    %v4085 = vrcp.pop 32.0
    %v4086 = vmul.f32 %v4039, %v4085
    %v4087 = vmul.f32 %v4042, %v4085
    %v4088 = vmul.f32 %v4045, %v4085
    %v4089 = vmul.f32 %v4048, %v4085
    %v4090 = vmul.f32 %v4051, %v4085
    %v4091 = vmul.f32 %v4054, %v4085
    %v4092 = vmul.f32 %v4057, %v4085
    %v4093 = vmul.f32 %v4060, %v4085
    %v4094 = vmul.f32 %v4063, %v4085
    %v4095 = vmul.f32 %v4066, %v4085
    %v4096 = vmul.f32 %v4069, %v4085
    %v4097 = vmul.f32 %v4072, %v4085
    %v4098 = vmul.f32 %v4075, %v4085
    %v4099 = vmul.f32 %v4078, %v4085
    %v4100 = vmul.f32 %v4081, %v4085
    %v4101 = vmul.f32 %v4084, %v4085
    %v4102 = vsub.f32 %v4021, %v4086
    %v4103 = vsub.f32 %v4022, %v4087
    %v4104 = vsub.f32 %v4023, %v4088
    %v4105 = vsub.f32 %v4024, %v4089
    %v4106 = vsub.f32 %v4025, %v4090
    %v4107 = vsub.f32 %v4026, %v4091
    %v4108 = vsub.f32 %v4027, %v4092
    %v4109 = vsub.f32 %v4028, %v4093
    %v4110 = vsub.f32 %v4029, %v4094
    %v4111 = vsub.f32 %v4030, %v4095
    %v4112 = vsub.f32 %v4031, %v4096
    %v4113 = vsub.f32 %v4032, %v4097
    %v4114 = vsub.f32 %v4033, %v4098
    %v4115 = vsub.f32 %v4034, %v4099
    %v4116 = vsub.f32 %v4035, %v4100
    %v4117 = vsub.f32 %v4036, %v4101
    %v4118 = vmul.f32 %v4102, %v4102
    %v4119 = vmul.f32 %v4103, %v4103
    %v4120 = vmul.f32 %v4104, %v4104
    %v4121 = vmul.f32 %v4105, %v4105
    %v4122 = vmul.f32 %v4106, %v4106
    %v4123 = vmul.f32 %v4107, %v4107
    %v4124 = vmul.f32 %v4108, %v4108
    %v4125 = vmul.f32 %v4109, %v4109
    %v4126 = vmul.f32 %v4110, %v4110
    %v4127 = vmul.f32 %v4111, %v4111
    %v4128 = vmul.f32 %v4112, %v4112
    %v4129 = vmul.f32 %v4113, %v4113
    %v4130 = vmul.f32 %v4114, %v4114
    %v4131 = vmul.f32 %v4115, %v4115
    %v4132 = vmul.f32 %v4116, %v4116
    %v4133 = vmul.f32 %v4117, %v4117
    %v4134 = vsel %vm1641, %v4118, 0.0
    %4135 = vadd.xlane.f32.xlu0 %v4134
    %v4136 = vpop.xlane.xlu0 %4135
    %v4137 = vsel %vm1641, %v4119, 0.0
    %4138 = vadd.xlane.f32.xlu0 %v4137
    %v4139 = vpop.xlane.xlu0 %4138
    %v4140 = vsel %vm1641, %v4120, 0.0
    %4141 = vadd.xlane.f32.xlu0 %v4140
    %v4142 = vpop.xlane.xlu0 %4141
    %v4143 = vsel %vm1641, %v4121, 0.0
    %4144 = vadd.xlane.f32.xlu0 %v4143
    %v4145 = vpop.xlane.xlu0 %4144
    %v4146 = vsel %vm1641, %v4122, 0.0
    %4147 = vadd.xlane.f32.xlu0 %v4146
    %v4148 = vpop.xlane.xlu0 %4147
    %v4149 = vsel %vm1641, %v4123, 0.0
    %4150 = vadd.xlane.f32.xlu0 %v4149
    %v4151 = vpop.xlane.xlu0 %4150
    %v4152 = vsel %vm1641, %v4124, 0.0
    %4153 = vadd.xlane.f32.xlu0 %v4152
    %v4154 = vpop.xlane.xlu0 %4153
    %v4155 = vsel %vm1641, %v4125, 0.0
    %4156 = vadd.xlane.f32.xlu0 %v4155
    %v4157 = vpop.xlane.xlu0 %4156
    %v4158 = vsel %vm1641, %v4126, 0.0
    %4159 = vadd.xlane.f32.xlu0 %v4158
    %v4160 = vpop.xlane.xlu0 %4159
    %v4161 = vsel %vm1641, %v4127, 0.0
    %4162 = vadd.xlane.f32.xlu0 %v4161
    %v4163 = vpop.xlane.xlu0 %4162
    %v4164 = vsel %vm1641, %v4128, 0.0
    %4165 = vadd.xlane.f32.xlu0 %v4164
    %v4166 = vpop.xlane.xlu0 %4165
    %v4167 = vsel %vm1641, %v4129, 0.0
    %4168 = vadd.xlane.f32.xlu0 %v4167
    %v4169 = vpop.xlane.xlu0 %4168
    %v4170 = vsel %vm1641, %v4130, 0.0
    %4171 = vadd.xlane.f32.xlu0 %v4170
    %v4172 = vpop.xlane.xlu0 %4171
    %v4173 = vsel %vm1641, %v4131, 0.0
    %4174 = vadd.xlane.f32.xlu0 %v4173
    %v4175 = vpop.xlane.xlu0 %4174
    %v4176 = vsel %vm1641, %v4132, 0.0
    %4177 = vadd.xlane.f32.xlu0 %v4176
    %v4178 = vpop.xlane.xlu0 %4177
    %v4179 = vsel %vm1641, %v4133, 0.0
    %4180 = vadd.xlane.f32.xlu0 %v4179
    %v4181 = vpop.xlane.xlu0 %4180
    %v4182 = vmul.f32 %v4136, %v4085
    %v4183 = vmul.f32 %v4139, %v4085
    %v4184 = vmul.f32 %v4142, %v4085
    %v4185 = vmul.f32 %v4145, %v4085
    %v4186 = vmul.f32 %v4148, %v4085
    %v4187 = vmul.f32 %v4151, %v4085
    %v4188 = vmul.f32 %v4154, %v4085
    %v4189 = vmul.f32 %v4157, %v4085
    %v4190 = vmul.f32 %v4160, %v4085
    %v4191 = vmul.f32 %v4163, %v4085
    %v4192 = vmul.f32 %v4166, %v4085
    %v4193 = vmul.f32 %v4169, %v4085
    %v4194 = vmul.f32 %v4172, %v4085
    %v4195 = vmul.f32 %v4175, %v4085
    %v4196 = vmul.f32 %v4178, %v4085
    %v4197 = vmul.f32 %v4181, %v4085
    %v4198 = vadd.f32 %v4182, 1e-09
    %v4199 = vadd.f32 %v4183, 1e-09
    %v4200 = vadd.f32 %v4184, 1e-09
    %v4201 = vadd.f32 %v4185, 1e-09
    %v4202 = vadd.f32 %v4186, 1e-09
    %v4203 = vadd.f32 %v4187, 1e-09
    %v4204 = vadd.f32 %v4188, 1e-09
    %v4205 = vadd.f32 %v4189, 1e-09
    %v4206 = vadd.f32 %v4190, 1e-09
    %v4207 = vadd.f32 %v4191, 1e-09
    %v4208 = vadd.f32 %v4192, 1e-09
    %v4209 = vadd.f32 %v4193, 1e-09
    %v4210 = vadd.f32 %v4194, 1e-09
    %v4211 = vadd.f32 %v4195, 1e-09
    %v4212 = vadd.f32 %v4196, 1e-09
    %v4213 = vadd.f32 %v4197, 1e-09
    %v4214 = vld [vmem:[#allocation18] sm:$0x1]
    %v4216 = vlaneseq
    %v4217 = vshrl.u32 %v4216, 7
    %v4218 = vsub.s32 0, %v4217
    %v4219 = vrot.slane %v4214, %v4218
    %v4221 = vmul.f32 %v4102, %v4219
    %v4222 = vmul.f32 %v4103, %v4219
    %v4223 = vmul.f32 %v4104, %v4219
    %v4224 = vmul.f32 %v4105, %v4219
    %v4225 = vmul.f32 %v4106, %v4219
    %v4226 = vmul.f32 %v4107, %v4219
    %v4227 = vmul.f32 %v4108, %v4219
    %v4228 = vmul.f32 %v4109, %v4219
    %v4229 = vmul.f32 %v4110, %v4219
    %v4230 = vmul.f32 %v4111, %v4219
    %v4231 = vmul.f32 %v4112, %v4219
    %v4232 = vmul.f32 %v4113, %v4219
    %v4233 = vmul.f32 %v4114, %v4219
    %v4234 = vmul.f32 %v4115, %v4219
    %v4235 = vmul.f32 %v4116, %v4219
    %v4236 = vmul.f32 %v4117, %v4219
    %v4237 = vrsqrt.pop %v4198
    %v4238 = vrsqrt.pop %v4199
    %v4239 = vrsqrt.pop %v4200
    %v4240 = vrsqrt.pop %v4201
    %v4241 = vrsqrt.pop %v4202
    %v4242 = vrsqrt.pop %v4203
    %v4243 = vrsqrt.pop %v4204
    %v4244 = vrsqrt.pop %v4205
    %v4245 = vrsqrt.pop %v4206
    %v4246 = vrsqrt.pop %v4207
    %v4247 = vrsqrt.pop %v4208
    %v4248 = vrsqrt.pop %v4209
    %v4249 = vrsqrt.pop %v4210
    %v4250 = vrsqrt.pop %v4211
    %v4251 = vrsqrt.pop %v4212
    %v4252 = vrsqrt.pop %v4213
    %v4253 = vmul.f32 %v4221, %v4237
    %v4254 = vmul.f32 %v4222, %v4238
    %v4255 = vmul.f32 %v4223, %v4239
    %v4256 = vmul.f32 %v4224, %v4240
    %v4257 = vmul.f32 %v4225, %v4241
    %v4258 = vmul.f32 %v4226, %v4242
    %v4259 = vmul.f32 %v4227, %v4243
    %v4260 = vmul.f32 %v4228, %v4244
    %v4261 = vmul.f32 %v4229, %v4245
    %v4262 = vmul.f32 %v4230, %v4246
    %v4263 = vmul.f32 %v4231, %v4247
    %v4264 = vmul.f32 %v4232, %v4248
    %v4265 = vmul.f32 %v4233, %v4249
    %v4266 = vmul.f32 %v4234, %v4250
    %v4267 = vmul.f32 %v4235, %v4251
    %v4268 = vmul.f32 %v4236, %v4252
    %v4269 = vld [vmem:[#allocation19] sm:$0x1]
    %v4271 = vlaneseq
    %v4272 = vshrl.u32 %v4271, 7
    %v4273 = vsub.s32 0, %v4272
    %v4274 = vrot.slane %v4269, %v4273
    %v4276 = vadd.f32 %v4253, %v4274
    %v4277 = vadd.f32 %v4254, %v4274
    %v4278 = vadd.f32 %v4255, %v4274
    %v4279 = vadd.f32 %v4256, %v4274
    %v4280 = vadd.f32 %v4257, %v4274
    %v4281 = vadd.f32 %v4258, %v4274
    %v4282 = vadd.f32 %v4259, %v4274
    %v4283 = vadd.f32 %v4260, %v4274
    %v4284 = vadd.f32 %v4261, %v4274
    %v4285 = vadd.f32 %v4262, %v4274
    %v4286 = vadd.f32 %v4263, %v4274
    %v4287 = vadd.f32 %v4264, %v4274
    %v4288 = vadd.f32 %v4265, %v4274
    %v4289 = vadd.f32 %v4266, %v4274
    %v4290 = vadd.f32 %v4267, %v4274
    %v4291 = vadd.f32 %v4268, %v4274
    %4292 = vst.msk [vmem:[#allocation21] sm:$0xff] %vm1641, %v4276
    %4293 = vst.msk [vmem:[#allocation21 + $0x8] sm:$0xff] %vm1641, %v4277
    %4294 = vst.msk [vmem:[#allocation21 + $0x10] sm:$0xff] %vm1641, %v4278
    %4295 = vst.msk [vmem:[#allocation21 + $0x18] sm:$0xff] %vm1641, %v4279
    %4296 = vst.msk [vmem:[#allocation21 + $0x20] sm:$0xff] %vm1641, %v4280
    %4297 = vst.msk [vmem:[#allocation21 + $0x28] sm:$0xff] %vm1641, %v4281
    %4298 = vst.msk [vmem:[#allocation21 + $0x30] sm:$0xff] %vm1641, %v4282
    %4299 = vst.msk [vmem:[#allocation21 + $0x38] sm:$0xff] %vm1641, %v4283
    %4300 = vst.msk [vmem:[#allocation21 + $0x40] sm:$0xff] %vm1641, %v4284
    %4301 = vst.msk [vmem:[#allocation21 + $0x48] sm:$0xff] %vm1641, %v4285
    %4302 = vst.msk [vmem:[#allocation21 + $0x50] sm:$0xff] %vm1641, %v4286
    %4303 = vst.msk [vmem:[#allocation21 + $0x58] sm:$0xff] %vm1641, %v4287
    %4304 = vst.msk [vmem:[#allocation21 + $0x60] sm:$0xff] %vm1641, %v4288
    %4305 = vst.msk [vmem:[#allocation21 + $0x68] sm:$0xff] %vm1641, %v4289
    %4306 = vst.msk [vmem:[#allocation21 + $0x70] sm:$0xff] %vm1641, %v4290
    %4307 = vst.msk [vmem:[#allocation21 + $0x78] sm:$0xff] %vm1641, %v4291
    // Predicated region
    $region82: #{tpu_custom_call.1} parent=1 // pred_check
      _
    $region83: #{tpu_custom_call.1} parent=1 // pred_check_branch
      %4309 = sbr.rel (0) target = $region85
    $region84: #{tpu_custom_call.1} parent=1 // pred_region
      %s4311 = ssub.s32 2048, 2048
      %4312 = vsyncadd [#allocation6], %s4311
      %s4313 = sshll.u32 [#allocation21], 4
      %s4314 = int_to_ptr.vmem [resolvable:$true] %s4313
      %4319 = dma.vmem_to_hbm [thread:$0]  %s4314, 2048, %s11, [#allocation6], 128, 128, 8
    $region85: #{tpu_custom_call.1} parent=1 // pred_fallthru
      _
    // Predicated region
    $region86: #{tpu_custom_call.1} parent=1 // pred_check
      _
    $region87: #{tpu_custom_call.1} parent=1 // pred_check_branch
      %4321 = sbr.rel (0) target = $region89
    $region88: #{tpu_custom_call.1} parent=1 // pred_region
      %4322 = dma.done [#allocation6], 2048
    $region89: #{tpu_custom_call.1} parent=1 // pred_fallthru
      _
    %4323 = vsyncpa [#allocation5], 1
    %4324 = vsyncpa [#allocation8], 1
    %4325 = vsyncpa [#allocation11], 1
    %4326 = vsyncpa [#allocation14], 1
    %4327 = vsyncpa [#allocation17], 1
    %4328 = vsyncpa [#allocation20], 1
    %4329 = vsyncpa [#allocation6], 1

</llo_original>
